<compile_context>
chip_gen: v6e
topology: v6e:2x2x1
jax: 0.10.0
libtpu: 0.0.40
codegen_flags: <defaults>
</compile_context>

<pallas_src>
import jax
import jax.numpy as jnp
from jax import lax
from jax.experimental import pallas as pl
from jax.experimental.pallas import tpu as pltpu

LANE = 256   # per-image padded spatial positions (225 -> 256)
KP = 32      # padded conv1 contraction dim (3*3*3 = 27 -> 32)


# ---------------------------------------------------------------------------
# Fused kernel: conv1 (MXU) + maxpool + ReLU + folded conv2/Linear tail + sigmoid
# ---------------------------------------------------------------------------
def _fused_kernel(p_ref, w1_ref, b1_ref, weff_ref, beff_ref, seg_ref, o_ref):
    # p_ref: (9, 32, TB*256) -- 9 pool taps of zero-padded im2col columns for TB images.
    w1 = w1_ref[...]                                                       # (16, 32)

    # conv1 on the MXU, one lane-dense push per pool tap, fused with the 3x3/s2 max-pool
    # (elementwise max over the 9 taps).
    pooled = jnp.dot(w1, p_ref[0], preferred_element_type=jnp.float32)     # (16, TB*256)
    for t in range(1, 9):
        yt = jnp.dot(w1, p_ref[t], preferred_element_type=jnp.float32)
        pooled = jnp.maximum(pooled, yt)

    # conv1 bias commutes with the tap-max (same bias on every tap); ReLU after the pool
    # matches the module order.
    a = jnp.maximum(pooled + b1_ref[...], 0.0)                             # (16, TB*256)

    # Folded conv2(k15, full contraction) + Linear(32->1): VPU multiply by the effective
    # weights (zero in padded lanes), then ONE MXU segmented per-image lane reduce.
    prod = a * weff_ref[...]                                               # (16, TB*256)
    seg = jnp.dot(prod, seg_ref[...], preferred_element_type=jnp.float32)  # (16, TB)
    y = jnp.sum(seg, axis=0, keepdims=True) + beff_ref[...]                # (1, TB)
    o_ref[...] = jax.nn.sigmoid(y).reshape(1, 1, -1)                       # (1, 1, TB)


# ---------------------------------------------------------------------------
# Host-side glue: pool-tap-major, lane-dense, zero-padded im2col (pure slicing).
# P[t, k, b*256 + ph*15 + pw] = x[b, c, 4*ph + 2*kh + dh, 4*pw + 2*kw + dw]
#   with t = kh*3 + kw,  k = c*9 + dh*3 + dw   (k padded 27->32, spatial 225->256 w/ zeros)
# ---------------------------------------------------------------------------
def _build_patches(x, b_pad, tb):
    B = x.shape[0]
    if b_pad != B:
        x = jnp.pad(x, ((0, b_pad - B), (0, 0), (0, 0), (0, 0)))
    taps = []
    for kh in range(3):
        for kw in range(3):
            ks = []
            for dh in range(3):
                for dw in range(3):
                    h0, w0 = 2 * kh + dh, 2 * kw + dw
                    ks.append(x[:, :, h0:h0 + 57:4, w0:w0 + 57:4])          # (Bp,3,15,15)
            k = jnp.stack(ks, axis=2).reshape(b_pad, 27, 225)               # k = c*9+dh*3+dw
            k = jnp.pad(k, ((0, 0), (0, KP - 27), (0, LANE - 225)))         # (Bp,32,256)
            taps.append(k.transpose(1, 0, 2).reshape(KP, b_pad * LANE))     # (32, Bp*256)
    return jnp.stack(taps, axis=0)                                          # (9,32,Bp*256)


def mynet_forward(x, params, tb=4):
    W1, b1, W2, b2, W3, b3 = params
    B = x.shape[0]
    tb = min(tb, B)
    G = -(-B // tb)            # cdiv
    b_pad = G * tb

    P = _build_patches(x, b_pad, tb)                                        # (9,32,Bp*256)

    # conv1 weights/bias (k ordering matches the patches), zero-padded contraction dim.
    w1p = jnp.pad(W1.reshape(16, 27), ((0, 0), (0, KP - 27)))               # (16, 32)
    b1c = b1.reshape(16, 1)

    # Offline fold of conv2 (k=15 == full contraction) + Linear(32->1).
    w_eff = (W3 @ W2.reshape(32, 16 * 225)).reshape(16, 225)                # (16, 225)
    w_eff = jnp.pad(w_eff, ((0, 0), (0, LANE - 225)))                       # zero padded lanes
    w_eff_t = jnp.tile(w_eff, (1, tb))                                      # (16, tb*256)
    b_eff = (W3 @ b2 + b3).reshape(1, 1)                                    # (1, 1)

    # Segment-ones matrix: per-image lane reduce done as a single MXU push in-kernel.
    seg = jnp.kron(jnp.eye(tb, dtype=jnp.float32),
                   jnp.ones((LANE, 1), jnp.float32))                        # (tb*256, tb)

    out = pl.pallas_call(
        _fused_kernel,
        out_shape=jax.ShapeDtypeStruct((G, 1, tb), jnp.float32),
        grid=(G,),
        in_specs=[
            pl.BlockSpec((9, KP, tb * LANE), lambda g: (0, 0, g)),          # per-step patches
            pl.BlockSpec((16, KP), lambda g: (0, 0)),                       # resident weights
            pl.BlockSpec((16, 1), lambda g: (0, 0)),
            pl.BlockSpec((16, tb * LANE), lambda g: (0, 0)),
            pl.BlockSpec((1, 1), lambda g: (0, 0)),
            pl.BlockSpec((tb * LANE, tb), lambda g: (0, 0)),
        ],
        out_specs=pl.BlockSpec((1, 1, tb), lambda g: (g, 0, 0)),
        compiler_params=pltpu.CompilerParams(dimension_semantics=("parallel",)),
    )(P, w1p, b1c, w_eff_t, b_eff, seg)
    return out.reshape(b_pad, 1)[:B]


# ---------------------------------------------------------------------------
# Parameters (deterministic synthetic init, PyTorch weight layouts)
# ---------------------------------------------------------------------------
def init_params(key):
    k1, k2, k3, k4, k5, k6 = jax.random.split(key, 6)
    W1 = jax.random.normal(k1, (16, 3, 3, 3), jnp.float32) * 0.1       # (oc, c, kh, kw)
    b1 = jax.random.normal(k2, (16,), jnp.float32) * 0.1
    W2 = jax.random.normal(k3, (32, 16, 15, 15), jnp.float32) * 0.02   # (oc, c, kh, kw)
    b2 = jax.random.normal(k4, (32,), jnp.float32) * 0.1
    W3 = jax.random.normal(k5, (1, 32), jnp.float32) * 0.1             # Linear (out, in)
    b3 = jax.random.normal(k6, (1,), jnp.float32) * 0.1
    return W1, b1, W2, b2, W3, b3


# ---------------------------------------------------------------------------
# Pure-JAX reference (mirrors the PyTorch module exactly) for validation
# ---------------------------------------------------------------------------
def ref_forward(x, params):
    W1, b1, W2, b2, W3, b3 = params
    y = lax.conv_general_dilated(x, W1, (2, 2), "VALID",
                                 dimension_numbers=("NCHW", "OIHW", "NCHW"))
    y = y + b1[None, :, None, None]
    y = lax.reduce_window(y, -jnp.inf, lax.max, (1, 1, 3, 3), (1, 1, 2, 2), "VALID")
    y = jnp.maximum(y, 0.0)
    y = lax.conv_general_dilated(y, W2, (1, 1), "VALID",
                                 dimension_numbers=("NCHW", "OIHW", "NCHW"))
    y = y + b2[None, :, None, None]
    y = y.reshape(x.shape[0], -1)
    return jax.nn.sigmoid(y @ W3.T + b3[None, :])


if __name__ == "__main__":
    key = jax.random.PRNGKey(0)
    kx, kp = jax.random.split(key)
    # Geometry forced by the module: (B, 3, 63, 63) input -> (B, 1) output.
    x = jax.random.normal(kx, (8, 3, 63, 63), jnp.float32)
    params = init_params(kp)

    fwd = jax.jit(mynet_forward)          # tb=4 -> grid of 2 batch tiles
    out = jax.block_until_ready(fwd(x, params))
    ref = jax.block_until_ready(ref_forward(x, params))

    assert out.shape == (8, 1), out.shape
    assert bool(jnp.all(jnp.isfinite(out)))
    assert bool(jnp.allclose(out, ref, atol=1e-4, rtol=1e-4)), (out, ref)
    print("KERNEL_OK")
</pallas_src>

<mosaic_0001>
module attributes {stable_mosaic.version = 11 : i64} {
  func.func @_fused_kernel(%arg0: i32, %arg1: memref<9x32x1024xf32, #tpu.memory_space<vmem>>, %arg2: memref<16x32xf32, #tpu.memory_space<vmem>>, %arg3: memref<16x1xf32, #tpu.memory_space<vmem>>, %arg4: memref<16x1024xf32, #tpu.memory_space<vmem>>, %arg5: memref<1x1xf32, #tpu.memory_space<vmem>>, %arg6: memref<1024x4xf32, #tpu.memory_space<vmem>>, %arg7: memref<1x1x4xf32, #tpu.memory_space<vmem>>) attributes {dimension_semantics = [#tpu.dimension_semantics<parallel>], iteration_bounds = array<i64: 2>, scalar_prefetch = 0 : i64, scratch_operands = 0 : i64, tpu.core_type = #tpu.core_type<tc>, window_params = [{transform_indices = @transform_0, window_bounds = array<i64: 9, 32, 1024>}, {pipeline_mode = #tpu.pipeline_mode<synchronous>, transform_indices = @transform_1, window_bounds = array<i64: 16, 32>}, {pipeline_mode = #tpu.pipeline_mode<synchronous>, transform_indices = @transform_2, window_bounds = array<i64: 16, 1>}, {pipeline_mode = #tpu.pipeline_mode<synchronous>, transform_indices = @transform_3, window_bounds = array<i64: 16, 1024>}, {pipeline_mode = #tpu.pipeline_mode<synchronous>, transform_indices = @transform_4, window_bounds = array<i64: 1, 1>}, {pipeline_mode = #tpu.pipeline_mode<synchronous>, transform_indices = @transform_5, window_bounds = array<i64: 1024, 4>}, {transform_indices = @transform_6, window_bounds = array<i64: 1, 1, 4>}]} {
    %c0 = arith.constant 0 : index
    %c0_0 = arith.constant 0 : index
    %0 = vector.load %arg2[%c0, %c0_0] : memref<16x32xf32, #tpu.memory_space<vmem>>, vector<16x32xf32>
    %c0_1 = arith.constant 0 : index
    %c0_2 = arith.constant 0 : index
    %c0_3 = arith.constant 0 : index
    %1 = vector.load %arg1[%c0_1, %c0_2, %c0_3] : memref<9x32x1024xf32, #tpu.memory_space<vmem>>, vector<1x32x1024xf32>
    %2 = vector.shape_cast %1 : vector<1x32x1024xf32> to vector<32x1024xf32>
    %cst = arith.constant dense<0.000000e+00> : vector<16x1024xf32>
    %3 = tpu.matmul %0, %2, %cst {dimension_numbers = #tpu.dot_dimension_numbers<[1], [0], [0], [1], [0, 0, 1, 1], [], []>} : vector<16x32xf32>, vector<32x1024xf32>, vector<16x1024xf32> -> vector<16x1024xf32>
    %c1 = arith.constant 1 : index
    %c0_4 = arith.constant 0 : index
    %c0_5 = arith.constant 0 : index
    %4 = vector.load %arg1[%c1, %c0_4, %c0_5] : memref<9x32x1024xf32, #tpu.memory_space<vmem>>, vector<1x32x1024xf32>
    %5 = vector.shape_cast %4 : vector<1x32x1024xf32> to vector<32x1024xf32>
    %cst_6 = arith.constant dense<0.000000e+00> : vector<16x1024xf32>
    %6 = tpu.matmul %0, %5, %cst_6 {dimension_numbers = #tpu.dot_dimension_numbers<[1], [0], [0], [1], [0, 0, 1, 1], [], []>} : vector<16x32xf32>, vector<32x1024xf32>, vector<16x1024xf32> -> vector<16x1024xf32>
    %7 = arith.maximumf %3, %6 : vector<16x1024xf32>
    %c2 = arith.constant 2 : index
    %c0_7 = arith.constant 0 : index
    %c0_8 = arith.constant 0 : index
    %8 = vector.load %arg1[%c2, %c0_7, %c0_8] : memref<9x32x1024xf32, #tpu.memory_space<vmem>>, vector<1x32x1024xf32>
    %9 = vector.shape_cast %8 : vector<1x32x1024xf32> to vector<32x1024xf32>
    %cst_9 = arith.constant dense<0.000000e+00> : vector<16x1024xf32>
    %10 = tpu.matmul %0, %9, %cst_9 {dimension_numbers = #tpu.dot_dimension_numbers<[1], [0], [0], [1], [0, 0, 1, 1], [], []>} : vector<16x32xf32>, vector<32x1024xf32>, vector<16x1024xf32> -> vector<16x1024xf32>
    %11 = arith.maximumf %7, %10 : vector<16x1024xf32>
    %c3 = arith.constant 3 : index
    %c0_10 = arith.constant 0 : index
    %c0_11 = arith.constant 0 : index
    %12 = vector.load %arg1[%c3, %c0_10, %c0_11] : memref<9x32x1024xf32, #tpu.memory_space<vmem>>, vector<1x32x1024xf32>
    %13 = vector.shape_cast %12 : vector<1x32x1024xf32> to vector<32x1024xf32>
    %cst_12 = arith.constant dense<0.000000e+00> : vector<16x1024xf32>
    %14 = tpu.matmul %0, %13, %cst_12 {dimension_numbers = #tpu.dot_dimension_numbers<[1], [0], [0], [1], [0, 0, 1, 1], [], []>} : vector<16x32xf32>, vector<32x1024xf32>, vector<16x1024xf32> -> vector<16x1024xf32>
    %15 = arith.maximumf %11, %14 : vector<16x1024xf32>
    %c4 = arith.constant 4 : index
    %c0_13 = arith.constant 0 : index
    %c0_14 = arith.constant 0 : index
    %16 = vector.load %arg1[%c4, %c0_13, %c0_14] : memref<9x32x1024xf32, #tpu.memory_space<vmem>>, vector<1x32x1024xf32>
    %17 = vector.shape_cast %16 : vector<1x32x1024xf32> to vector<32x1024xf32>
    %cst_15 = arith.constant dense<0.000000e+00> : vector<16x1024xf32>
    %18 = tpu.matmul %0, %17, %cst_15 {dimension_numbers = #tpu.dot_dimension_numbers<[1], [0], [0], [1], [0, 0, 1, 1], [], []>} : vector<16x32xf32>, vector<32x1024xf32>, vector<16x1024xf32> -> vector<16x1024xf32>
    %19 = arith.maximumf %15, %18 : vector<16x1024xf32>
    %c5 = arith.constant 5 : index
    %c0_16 = arith.constant 0 : index
    %c0_17 = arith.constant 0 : index
    %20 = vector.load %arg1[%c5, %c0_16, %c0_17] : memref<9x32x1024xf32, #tpu.memory_space<vmem>>, vector<1x32x1024xf32>
    %21 = vector.shape_cast %20 : vector<1x32x1024xf32> to vector<32x1024xf32>
    %cst_18 = arith.constant dense<0.000000e+00> : vector<16x1024xf32>
    %22 = tpu.matmul %0, %21, %cst_18 {dimension_numbers = #tpu.dot_dimension_numbers<[1], [0], [0], [1], [0, 0, 1, 1], [], []>} : vector<16x32xf32>, vector<32x1024xf32>, vector<16x1024xf32> -> vector<16x1024xf32>
    %23 = arith.maximumf %19, %22 : vector<16x1024xf32>
    %c6 = arith.constant 6 : index
    %c0_19 = arith.constant 0 : index
    %c0_20 = arith.constant 0 : index
    %24 = vector.load %arg1[%c6, %c0_19, %c0_20] : memref<9x32x1024xf32, #tpu.memory_space<vmem>>, vector<1x32x1024xf32>
    %25 = vector.shape_cast %24 : vector<1x32x1024xf32> to vector<32x1024xf32>
    %cst_21 = arith.constant dense<0.000000e+00> : vector<16x1024xf32>
    %26 = tpu.matmul %0, %25, %cst_21 {dimension_numbers = #tpu.dot_dimension_numbers<[1], [0], [0], [1], [0, 0, 1, 1], [], []>} : vector<16x32xf32>, vector<32x1024xf32>, vector<16x1024xf32> -> vector<16x1024xf32>
    %27 = arith.maximumf %23, %26 : vector<16x1024xf32>
    %c7 = arith.constant 7 : index
    %c0_22 = arith.constant 0 : index
    %c0_23 = arith.constant 0 : index
    %28 = vector.load %arg1[%c7, %c0_22, %c0_23] : memref<9x32x1024xf32, #tpu.memory_space<vmem>>, vector<1x32x1024xf32>
    %29 = vector.shape_cast %28 : vector<1x32x1024xf32> to vector<32x1024xf32>
    %cst_24 = arith.constant dense<0.000000e+00> : vector<16x1024xf32>
    %30 = tpu.matmul %0, %29, %cst_24 {dimension_numbers = #tpu.dot_dimension_numbers<[1], [0], [0], [1], [0, 0, 1, 1], [], []>} : vector<16x32xf32>, vector<32x1024xf32>, vector<16x1024xf32> -> vector<16x1024xf32>
    %31 = arith.maximumf %27, %30 : vector<16x1024xf32>
    %c8 = arith.constant 8 : index
    %c0_25 = arith.constant 0 : index
    %c0_26 = arith.constant 0 : index
    %32 = vector.load %arg1[%c8, %c0_25, %c0_26] : memref<9x32x1024xf32, #tpu.memory_space<vmem>>, vector<1x32x1024xf32>
    %33 = vector.shape_cast %32 : vector<1x32x1024xf32> to vector<32x1024xf32>
    %cst_27 = arith.constant dense<0.000000e+00> : vector<16x1024xf32>
    %34 = tpu.matmul %0, %33, %cst_27 {dimension_numbers = #tpu.dot_dimension_numbers<[1], [0], [0], [1], [0, 0, 1, 1], [], []>} : vector<16x32xf32>, vector<32x1024xf32>, vector<16x1024xf32> -> vector<16x1024xf32>
    %35 = arith.maximumf %31, %34 : vector<16x1024xf32>
    %c0_28 = arith.constant 0 : index
    %c0_29 = arith.constant 0 : index
    %36 = vector.load %arg3[%c0_28, %c0_29] : memref<16x1xf32, #tpu.memory_space<vmem>>, vector<16x1xf32>
    %37 = vector.broadcast %36 : vector<16x1xf32> to vector<16x1024xf32>
    %38 = arith.addf %35, %37 : vector<16x1024xf32>
    %cst_30 = arith.constant 0.000000e+00 : f32
    %39 = vector.broadcast %cst_30 : f32 to vector<16x1024xf32>
    %40 = arith.maximumf %38, %39 : vector<16x1024xf32>
    %c0_31 = arith.constant 0 : index
    %c0_32 = arith.constant 0 : index
    %41 = vector.load %arg4[%c0_31, %c0_32] : memref<16x1024xf32, #tpu.memory_space<vmem>>, vector<16x1024xf32>
    %42 = arith.mulf %40, %41 : vector<16x1024xf32>
    %c0_33 = arith.constant 0 : index
    %c0_34 = arith.constant 0 : index
    %43 = vector.load %arg6[%c0_33, %c0_34] : memref<1024x4xf32, #tpu.memory_space<vmem>>, vector<1024x4xf32>
    %cst_35 = arith.constant dense<0.000000e+00> : vector<16x4xf32>
    %44 = tpu.matmul %42, %43, %cst_35 {dimension_numbers = #tpu.dot_dimension_numbers<[1], [0], [0], [1], [0, 0, 1, 1], [], []>} : vector<16x1024xf32>, vector<1024x4xf32>, vector<16x4xf32> -> vector<16x4xf32>
    %cst_36 = arith.constant dense<0.000000e+00> : vector<4xf32>
    %45 = vector.multi_reduction <add>, %44, %cst_36 [0] : vector<16x4xf32> to vector<4xf32>
    %46 = vector.shape_cast %45 : vector<4xf32> to vector<1x4xf32>
    %c0_37 = arith.constant 0 : index
    %c0_38 = arith.constant 0 : index
    %47 = vector.load %arg5[%c0_37, %c0_38] : memref<1x1xf32, #tpu.memory_space<vmem>>, vector<1x1xf32>
    %48 = vector.broadcast %47 : vector<1x1xf32> to vector<1x4xf32>
    %49 = arith.addf %46, %48 : vector<1x4xf32>
    %50 = arith.negf %49 : vector<1x4xf32>
    %51 = math.exp %50 : vector<1x4xf32>
    %cst_39 = arith.constant 1.000000e+00 : f32
    %52 = vector.broadcast %cst_39 : f32 to vector<1x4xf32>
    %53 = arith.addf %52, %51 : vector<1x4xf32>
    %54 = arith.divf %52, %53 : vector<1x4xf32>
    %55 = vector.shape_cast %54 : vector<1x4xf32> to vector<1x1x4xf32>
    %c0_40 = arith.constant 0 : index
    %c0_41 = arith.constant 0 : index
    %c0_42 = arith.constant 0 : index
    %56 = vector.load %arg7[%c0_40, %c0_41, %c0_42] : memref<1x1x4xf32, #tpu.memory_space<vmem>>, vector<1x1x4xf32>
    tpu.vector_store %arg7[%c0_40, %c0_41, %c0_42], %55 {strides = array<i32>} : memref<1x1x4xf32, #tpu.memory_space<vmem>>, vector<1x1x4xf32>,
    return
  }
  func.func @transform_0(%arg0: i32) -> (i32, i32, i32) {
    %c0_i32 = arith.constant 0 : i32
    %c0_i32_0 = arith.constant 0 : i32
    %c0_i32_1 = arith.constant 0 : i32
    return %c0_i32, %c0_i32_0, %arg0 : i32, i32, i32
  }
  func.func @transform_1(%arg0: i32) -> (i32, i32) {
    %c0_i32 = arith.constant 0 : i32
    %c0_i32_0 = arith.constant 0 : i32
    %c0_i32_1 = arith.constant 0 : i32
    return %c0_i32, %c0_i32_0 : i32, i32
  }
  func.func @transform_2(%arg0: i32) -> (i32, i32) {
    %c0_i32 = arith.constant 0 : i32
    %c0_i32_0 = arith.constant 0 : i32
    %c0_i32_1 = arith.constant 0 : i32
    return %c0_i32, %c0_i32_0 : i32, i32
  }
  func.func @transform_3(%arg0: i32) -> (i32, i32) {
    %c0_i32 = arith.constant 0 : i32
    %c0_i32_0 = arith.constant 0 : i32
    %c0_i32_1 = arith.constant 0 : i32
    return %c0_i32, %c0_i32_0 : i32, i32
  }
  func.func @transform_4(%arg0: i32) -> (i32, i32) {
    %c0_i32 = arith.constant 0 : i32
    %c0_i32_0 = arith.constant 0 : i32
    %c0_i32_1 = arith.constant 0 : i32
    return %c0_i32, %c0_i32_0 : i32, i32
  }
  func.func @transform_5(%arg0: i32) -> (i32, i32) {
    %c0_i32 = arith.constant 0 : i32
    %c0_i32_0 = arith.constant 0 : i32
    %c0_i32_1 = arith.constant 0 : i32
    return %c0_i32, %c0_i32_0 : i32, i32
  }
  func.func @transform_6(%arg0: i32) -> (i32, i32, i32) {
    %c0_i32 = arith.constant 0 : i32
    %c0_i32_0 = arith.constant 0 : i32
    %c0_i32_1 = arith.constant 0 : i32
    return %arg0, %c0_i32, %c0_i32_0 : i32, i32, i32
  }
}

</mosaic_0001>

<llo_original>
// kernel: mynet_forward.1
$region0: #{mynet_forward.1}
  #allocation0 [shape = 'u32[]', space=smem, size = 0x4, offset = 0x4, fixed_abs, tag = 'smem constant byte address 0x4 - core index']
  #allocation1 [shape = 'u32[144,128]{1,0:T(1,128)}', space=vmem, size = 0x12000, scoped, tag = 'internal scratch']
  #allocation2 [shape = 'f32[1,1]{1,0:T(1,128)S(1)}', space=vmem, size = 0x200, scoped, tag = 'scoped memory for mynet_forward.1']
  %s0 = inlined_call_operand.vmem [shape: f32[9,32,2048], index: 0, kind: input, shape index: {}]
  %s1 = inlined_call_operand.vmem [shape: f32[16,32], index: 1, kind: input, shape index: {}]
  %s2 = inlined_call_operand.vmem [shape: f32[16,1], index: 2, kind: input, shape index: {}]
  %s3 = inlined_call_operand.vmem [shape: f32[16,1024], index: 3, kind: input, shape index: {}]
  %s4 = inlined_call_operand.<no memory space> [shape: f32[1,1], index: 4, kind: input, shape index: {}]
  %s5 = inlined_call_operand.vmem [shape: f32[1024,4], index: 5, kind: input, shape index: {}]
  %s6 = inlined_call_operand.vmem [shape: f32[2,1,4], index: 6, kind: output, shape index: {}]
  %s7 = sld [smem:[#allocation0]]
  $region80: #{mynet_forward.1} parent=0
    _
  %s9 = ssub.s32 1, %s7
  %s10 = scalar_select 0, %s9, %s7
  %v11 = vstv %s4
  %12 = vst [vmem:[#allocation2] sm:$0x1] %v11
  $region1: #{mynet_forward.1} parent=0
    #allocation3 [shape = 'u8[2359296]{0}', space=vmem, size = 0x240000, scoped, tag = 'input window, operand 0']
    loop: start=0, step=1, limit=4
    $region2: #{mynet_forward.1} parent=1 // loop_pre_header
      _
    $region3: #{mynet_forward.1} parent=1 // loop_header
      %s14 = sphi 0, %s18
      %p15 = scmp.ge.s32.totalorder %s14, 4
      %s24 = sphi 0, %s26
      %s27 = sphi 0, %s24
      %s28 = sphi 0, %s27
      %s44 = sphi 0, %s28
      %s48 = sphi 0, %s48
      %s50 = sphi 0, %s48
      %s51 = sphi 0, %s50
      %s65 = sphi 0, %s51
      %s69 = sphi 0, %s69
      %s71 = sphi 0, %s69
      %s72 = sphi 0, %s71
      %s86 = sphi 0, %s72
      %s90 = sphi 0, %s90
      %s92 = sphi 0, %s90
      %s93 = sphi 0, %s92
      %s107 = sphi 0, %s93
      %s111 = sphi 0, %s111
      %s113 = sphi 0, %s111
      %s114 = sphi 0, %s113
      %s128 = sphi 0, %s114
      %s132 = sphi 0, %s132
      %s134 = sphi 0, %s132
      %s135 = sphi 0, %s134
      %s149 = sphi 0, %s135
      %s155 = sphi 0, %s157
      %s158 = sphi 0, %s155
      %s159 = sphi 0, %s158
      %s175 = sphi 0, %s159
    $region4: #{mynet_forward.1} parent=1 // loop_header_branch
      %17 = sbr.rel (%p15) target = $region8
    $region5: #{mynet_forward.1} parent=1 // loop_body
      %s19 = ssub.s32 %s14, 1
      %s20 = ssub.s32 %s14, 2
      %s21 = sadd.s32 %s14, 1
      %s22 = ssub.s32 %s14, %s21
      %p23 = scmp.eq.s32.totalorder %s22, 0
      %s25 = sadd.s32 %s24, 1
      %s26 = scalar_select %p23, %s24, %s25
      %p29 = pneg %p23
      %p30 = scmp.eq.s32.totalorder %s14, 1
      %p31 = por %p29, %p30
      %p32 = scmp.ne.s32.totalorder %s24, %s27
      %p33 = scmp.eq.s32.totalorder %s14, 0
      %p34 = por %p32, %p33
      %p35 = scmp.ne.s32.totalorder %s24, %s27
      %p36 = scmp.eq.s32.totalorder %s19, 1
      %p37 = por %p35, %p36
      %p38 = scmp.ne.s32.totalorder %s27, %s28
      %p39 = scmp.eq.s32.totalorder %s19, 0
      %p40 = por %p38, %p39
      %p41 = scmp.ne.s32.totalorder %s27, %s28
      %p42 = scmp.eq.s32.totalorder %s20, 1
      %p43 = por %p41, %p42
      %p45 = scmp.ne.s32.totalorder %s28, %s44
      %p46 = scmp.eq.s32.totalorder %s20, 0
      %p47 = por %p45, %p46
      %s49 = sadd.s32 %s48, 1
      %p52 = scmp.eq.s32.totalorder %s14, 1
      %p53 = scmp.ne.s32.totalorder %s48, %s50
      %p54 = scmp.eq.s32.totalorder %s14, 0
      %p55 = por %p53, %p54
      %p56 = scmp.ne.s32.totalorder %s48, %s50
      %p57 = scmp.eq.s32.totalorder %s19, 1
      %p58 = por %p56, %p57
      %p59 = scmp.ne.s32.totalorder %s50, %s51
      %p60 = scmp.eq.s32.totalorder %s19, 0
      %p61 = por %p59, %p60
      %p62 = scmp.ne.s32.totalorder %s50, %s51
      %p63 = scmp.eq.s32.totalorder %s20, 1
      %p64 = por %p62, %p63
      %p66 = scmp.ne.s32.totalorder %s51, %s65
      %p67 = scmp.eq.s32.totalorder %s20, 0
      %p68 = por %p66, %p67
      %s70 = sadd.s32 %s69, 1
      %p73 = scmp.eq.s32.totalorder %s14, 1
      %p74 = scmp.ne.s32.totalorder %s69, %s71
      %p75 = scmp.eq.s32.totalorder %s14, 0
      %p76 = por %p74, %p75
      %p77 = scmp.ne.s32.totalorder %s69, %s71
      %p78 = scmp.eq.s32.totalorder %s19, 1
      %p79 = por %p77, %p78
      %p80 = scmp.ne.s32.totalorder %s71, %s72
      %p81 = scmp.eq.s32.totalorder %s19, 0
      %p82 = por %p80, %p81
      %p83 = scmp.ne.s32.totalorder %s71, %s72
      %p84 = scmp.eq.s32.totalorder %s20, 1
      %p85 = por %p83, %p84
      %p87 = scmp.ne.s32.totalorder %s72, %s86
      %p88 = scmp.eq.s32.totalorder %s20, 0
      %p89 = por %p87, %p88
      %s91 = sadd.s32 %s90, 1
      %p94 = scmp.eq.s32.totalorder %s14, 1
      %p95 = scmp.ne.s32.totalorder %s90, %s92
      %p96 = scmp.eq.s32.totalorder %s14, 0
      %p97 = por %p95, %p96
      %p98 = scmp.ne.s32.totalorder %s90, %s92
      %p99 = scmp.eq.s32.totalorder %s19, 1
      %p100 = por %p98, %p99
      %p101 = scmp.ne.s32.totalorder %s92, %s93
      %p102 = scmp.eq.s32.totalorder %s19, 0
      %p103 = por %p101, %p102
      %p104 = scmp.ne.s32.totalorder %s92, %s93
      %p105 = scmp.eq.s32.totalorder %s20, 1
      %p106 = por %p104, %p105
      %p108 = scmp.ne.s32.totalorder %s93, %s107
      %p109 = scmp.eq.s32.totalorder %s20, 0
      %p110 = por %p108, %p109
      %s112 = sadd.s32 %s111, 1
      %p115 = scmp.eq.s32.totalorder %s14, 1
      %p116 = scmp.ne.s32.totalorder %s111, %s113
      %p117 = scmp.eq.s32.totalorder %s14, 0
      %p118 = por %p116, %p117
      %p119 = scmp.ne.s32.totalorder %s111, %s113
      %p120 = scmp.eq.s32.totalorder %s19, 1
      %p121 = por %p119, %p120
      %p122 = scmp.ne.s32.totalorder %s113, %s114
      %p123 = scmp.eq.s32.totalorder %s19, 0
      %p124 = por %p122, %p123
      %p125 = scmp.ne.s32.totalorder %s113, %s114
      %p126 = scmp.eq.s32.totalorder %s20, 1
      %p127 = por %p125, %p126
      %p129 = scmp.ne.s32.totalorder %s114, %s128
      %p130 = scmp.eq.s32.totalorder %s20, 0
      %p131 = por %p129, %p130
      %s133 = sadd.s32 %s132, 1
      %p136 = scmp.eq.s32.totalorder %s14, 1
      %p137 = scmp.ne.s32.totalorder %s132, %s134
      %p138 = scmp.eq.s32.totalorder %s14, 0
      %p139 = por %p137, %p138
      %p140 = scmp.ne.s32.totalorder %s132, %s134
      %p141 = scmp.eq.s32.totalorder %s19, 1
      %p142 = por %p140, %p141
      %p143 = scmp.ne.s32.totalorder %s134, %s135
      %p144 = scmp.eq.s32.totalorder %s19, 0
      %p145 = por %p143, %p144
      %p146 = scmp.ne.s32.totalorder %s134, %s135
      %p147 = scmp.eq.s32.totalorder %s20, 1
      %p148 = por %p146, %p147
      %p150 = scmp.ne.s32.totalorder %s135, %s149
      %p151 = scmp.eq.s32.totalorder %s20, 0
      %p152 = por %p150, %p151
      %s153 = ssub.s32 %s14, %s21
      %p154 = scmp.eq.s32.totalorder %s153, 0
      %s156 = sadd.s32 %s155, 1
      %s157 = scalar_select %p154, %s155, %s156
      %p160 = pneg %p154
      %p161 = scmp.eq.s32.totalorder %s14, 1
      %p162 = por %p160, %p161
      %p163 = scmp.ne.s32.totalorder %s155, %s158
      %p164 = scmp.eq.s32.totalorder %s14, 0
      %p165 = por %p163, %p164
      %p166 = scmp.ne.s32.totalorder %s155, %s158
      %p167 = scmp.eq.s32.totalorder %s19, 1
      %p168 = por %p166, %p167
      %p169 = scmp.ne.s32.totalorder %s158, %s159
      %p170 = scmp.eq.s32.totalorder %s19, 0
      %p171 = por %p169, %p170
      %p172 = scmp.ne.s32.totalorder %s158, %s159
      %p173 = scmp.eq.s32.totalorder %s20, 1
      %p174 = por %p172, %p173
      %p176 = scmp.ne.s32.totalorder %s159, %s175
      %p177 = scmp.eq.s32.totalorder %s20, 0
      %p178 = por %p176, %p177
      %p179 = scmp.le.s32.totalorder 1, %s14
      %p180 = scmp.lt.s32.totalorder %s14, 3
      %p181 = pnand %p179, %p180
      %p182 = pneg %p181
      // Predicated region
      $region9: #{mynet_forward.1} parent=5 // pred_check
        _
      $region10: #{mynet_forward.1} parent=5 // pred_check_branch
        %184 = sbr.rel (%p181) target = $region12
      $region11: #{mynet_forward.1} parent=5 // pred_region
        %s185 = ssub.s32 %s14, 1
        // Predicated region
        $region13: #{mynet_forward.1} parent=11 // pred_check
          %p186 = pneg %p61
        $region14: #{mynet_forward.1} parent=11 // pred_check_branch
          %188 = sbr.rel (%p186) target = $region16
        $region15: #{mynet_forward.1} parent=11 // pred_region
          _
        $region16: #{mynet_forward.1} parent=11 // pred_fallthru
          _
        // Predicated region
        $region17: #{mynet_forward.1} parent=11 // pred_check
          %p189 = pneg %p82
        $region18: #{mynet_forward.1} parent=11 // pred_check_branch
          %191 = sbr.rel (%p189) target = $region20
        $region19: #{mynet_forward.1} parent=11 // pred_region
          _
        $region20: #{mynet_forward.1} parent=11 // pred_fallthru
          _
        // Predicated region
        $region21: #{mynet_forward.1} parent=11 // pred_check
          %p192 = pneg %p103
        $region22: #{mynet_forward.1} parent=11 // pred_check_branch
          %194 = sbr.rel (%p192) target = $region24
        $region23: #{mynet_forward.1} parent=11 // pred_region
          _
        $region24: #{mynet_forward.1} parent=11 // pred_fallthru
          _
        // Predicated region
        $region25: #{mynet_forward.1} parent=11 // pred_check
          %p195 = pneg %p124
        $region26: #{mynet_forward.1} parent=11 // pred_check_branch
          %197 = sbr.rel (%p195) target = $region28
        $region27: #{mynet_forward.1} parent=11 // pred_region
          _
        $region28: #{mynet_forward.1} parent=11 // pred_fallthru
          _
        // Predicated region
        $region29: #{mynet_forward.1} parent=11 // pred_check
          %p198 = pneg %p145
        $region30: #{mynet_forward.1} parent=11 // pred_check_branch
          %200 = sbr.rel (%p198) target = $region32
        $region31: #{mynet_forward.1} parent=11 // pred_region
          _
        $region32: #{mynet_forward.1} parent=11 // pred_fallthru
          _
      $region12: #{mynet_forward.1} parent=5 // pred_fallthru
        _
      %p201 = scmp.lt.s32.totalorder %s14, 2
      // Predicated region
      $region33: #{mynet_forward.1} parent=5 // pred_check
        %p202 = pneg %p201
      $region34: #{mynet_forward.1} parent=5 // pred_check_branch
        %204 = sbr.rel (%p202) target = $region36
      $region35: #{mynet_forward.1} parent=5 // pred_region
        // Predicated region
        $region37: #{mynet_forward.1} parent=35 // pred_check
          %p205 = pneg %p34
        $region38: #{mynet_forward.1} parent=35 // pred_check_branch
          %207 = sbr.rel (%p205) target = $region40
        $region39: #{mynet_forward.1} parent=35 // pred_region
          %s208 = sand.u32 %s24, 1
          %s209 = sand.u32 %s24, 1
          %s210 = smul.addr %s209, 2304
          %s211 = scalar_lea.vmem [#allocation3], %s210
          %s212 = smul.u32 8, %s14
          %s213 = smul.addr %s212, 8
          %s214 = scalar_lea.vmem %s0, %s213
          // Predicated region
          $region41: #{mynet_forward.1} parent=39 // pred_check
            _
          $region42: #{mynet_forward.1} parent=39 // pred_check_branch
            %216 = sbr.rel (0) target = $region44
          $region43: #{mynet_forward.1} parent=39 // pred_region
            // Predicated region
            $region45: #{mynet_forward.1} parent=43 // pred_check
              _
            $region46: #{mynet_forward.1} parent=43 // pred_check_branch
              %218 = sbr.rel (0) target = $region48
            $region47: #{mynet_forward.1} parent=43 // pred_region
              loop: start=0, step=1, limit=1
              $region49: #{mynet_forward.1} parent=47 // loop_pre_header
                _
              $region50: #{mynet_forward.1} parent=47 // loop_header
                %s220 = sphi 0, %s224
                %p221 = scmp.ge.s32.totalorder %s220, 1
                %s225 = sphi %s214, %s214
                %s226 = sphi %s211, %s211
              $region51: #{mynet_forward.1} parent=47 // loop_header_branch
                %223 = sbr.rel (%p221) target = $region55
              $region52: #{mynet_forward.1} parent=47 // loop_body
                %v227 = vld [vmem:[%s225] sm:$0xff]
                %228 = vst [vmem:[%s226] sm:$0xff] %v227
                %v229 = vld [vmem:[%s225 + $0x8] sm:$0xff]
                %230 = vst [vmem:[%s226 + $0x8] sm:$0xff] %v229
                %v231 = vld [vmem:[%s225 + $0x10] sm:$0xff]
                %232 = vst [vmem:[%s226 + $0x10] sm:$0xff] %v231
                %v233 = vld [vmem:[%s225 + $0x18] sm:$0xff]
                %234 = vst [vmem:[%s226 + $0x18] sm:$0xff] %v233
                %v235 = vld [vmem:[%s225 + $0x20] sm:$0xff]
                %236 = vst [vmem:[%s226 + $0x20] sm:$0xff] %v235
                %v237 = vld [vmem:[%s225 + $0x28] sm:$0xff]
                %238 = vst [vmem:[%s226 + $0x28] sm:$0xff] %v237
                %v239 = vld [vmem:[%s225 + $0x30] sm:$0xff]
                %240 = vst [vmem:[%s226 + $0x30] sm:$0xff] %v239
                %v241 = vld [vmem:[%s225 + $0x38] sm:$0xff]
                %242 = vst [vmem:[%s226 + $0x38] sm:$0xff] %v241
                %v243 = vld [vmem:[%s225 + $0x80] sm:$0xff]
                %244 = vst [vmem:[%s226 + $0x40] sm:$0xff] %v243
                %v245 = vld [vmem:[%s225 + $0x88] sm:$0xff]
                %246 = vst [vmem:[%s226 + $0x48] sm:$0xff] %v245
                %v247 = vld [vmem:[%s225 + $0x90] sm:$0xff]
                %248 = vst [vmem:[%s226 + $0x50] sm:$0xff] %v247
                %v249 = vld [vmem:[%s225 + $0x98] sm:$0xff]
                %250 = vst [vmem:[%s226 + $0x58] sm:$0xff] %v249
                %v251 = vld [vmem:[%s225 + $0xa0] sm:$0xff]
                %252 = vst [vmem:[%s226 + $0x60] sm:$0xff] %v251
                %v253 = vld [vmem:[%s225 + $0xa8] sm:$0xff]
                %254 = vst [vmem:[%s226 + $0x68] sm:$0xff] %v253
                %v255 = vld [vmem:[%s225 + $0xb0] sm:$0xff]
                %256 = vst [vmem:[%s226 + $0x70] sm:$0xff] %v255
                %v257 = vld [vmem:[%s225 + $0xb8] sm:$0xff]
                %258 = vst [vmem:[%s226 + $0x78] sm:$0xff] %v257
                %v259 = vld [vmem:[%s225 + $0x100] sm:$0xff]
                %260 = vst [vmem:[%s226 + $0x80] sm:$0xff] %v259
                %v261 = vld [vmem:[%s225 + $0x108] sm:$0xff]
                %262 = vst [vmem:[%s226 + $0x88] sm:$0xff] %v261
                %v263 = vld [vmem:[%s225 + $0x110] sm:$0xff]
                %264 = vst [vmem:[%s226 + $0x90] sm:$0xff] %v263
                %v265 = vld [vmem:[%s225 + $0x118] sm:$0xff]
                %266 = vst [vmem:[%s226 + $0x98] sm:$0xff] %v265
                %v267 = vld [vmem:[%s225 + $0x120] sm:$0xff]
                %268 = vst [vmem:[%s226 + $0xa0] sm:$0xff] %v267
                %v269 = vld [vmem:[%s225 + $0x128] sm:$0xff]
                %270 = vst [vmem:[%s226 + $0xa8] sm:$0xff] %v269
                %v271 = vld [vmem:[%s225 + $0x130] sm:$0xff]
                %272 = vst [vmem:[%s226 + $0xb0] sm:$0xff] %v271
                %v273 = vld [vmem:[%s225 + $0x138] sm:$0xff]
                %274 = vst [vmem:[%s226 + $0xb8] sm:$0xff] %v273
                %v275 = vld [vmem:[%s225 + $0x180] sm:$0xff]
                %276 = vst [vmem:[%s226 + $0xc0] sm:$0xff] %v275
                %v277 = vld [vmem:[%s225 + $0x188] sm:$0xff]
                %278 = vst [vmem:[%s226 + $0xc8] sm:$0xff] %v277
                %v279 = vld [vmem:[%s225 + $0x190] sm:$0xff]
                %280 = vst [vmem:[%s226 + $0xd0] sm:$0xff] %v279
                %v281 = vld [vmem:[%s225 + $0x198] sm:$0xff]
                %282 = vst [vmem:[%s226 + $0xd8] sm:$0xff] %v281
                %v283 = vld [vmem:[%s225 + $0x1a0] sm:$0xff]
                %284 = vst [vmem:[%s226 + $0xe0] sm:$0xff] %v283
                %v285 = vld [vmem:[%s225 + $0x1a8] sm:$0xff]
                %286 = vst [vmem:[%s226 + $0xe8] sm:$0xff] %v285
                %v287 = vld [vmem:[%s225 + $0x1b0] sm:$0xff]
                %288 = vst [vmem:[%s226 + $0xf0] sm:$0xff] %v287
                %v289 = vld [vmem:[%s225 + $0x1b8] sm:$0xff]
                %290 = vst [vmem:[%s226 + $0xf8] sm:$0xff] %v289
                %v291 = vld [vmem:[%s225 + $0x200] sm:$0xff]
                %292 = vst [vmem:[%s226 + $0x100] sm:$0xff] %v291
                %v293 = vld [vmem:[%s225 + $0x208] sm:$0xff]
                %294 = vst [vmem:[%s226 + $0x108] sm:$0xff] %v293
                %v295 = vld [vmem:[%s225 + $0x210] sm:$0xff]
                %296 = vst [vmem:[%s226 + $0x110] sm:$0xff] %v295
                %v297 = vld [vmem:[%s225 + $0x218] sm:$0xff]
                %298 = vst [vmem:[%s226 + $0x118] sm:$0xff] %v297
                %v299 = vld [vmem:[%s225 + $0x220] sm:$0xff]
                %300 = vst [vmem:[%s226 + $0x120] sm:$0xff] %v299
                %v301 = vld [vmem:[%s225 + $0x228] sm:$0xff]
                %302 = vst [vmem:[%s226 + $0x128] sm:$0xff] %v301
                %v303 = vld [vmem:[%s225 + $0x230] sm:$0xff]
                %304 = vst [vmem:[%s226 + $0x130] sm:$0xff] %v303
                %v305 = vld [vmem:[%s225 + $0x238] sm:$0xff]
                %306 = vst [vmem:[%s226 + $0x138] sm:$0xff] %v305
                %v307 = vld [vmem:[%s225 + $0x280] sm:$0xff]
                %308 = vst [vmem:[%s226 + $0x140] sm:$0xff] %v307
                %v309 = vld [vmem:[%s225 + $0x288] sm:$0xff]
                %310 = vst [vmem:[%s226 + $0x148] sm:$0xff] %v309
                %v311 = vld [vmem:[%s225 + $0x290] sm:$0xff]
                %312 = vst [vmem:[%s226 + $0x150] sm:$0xff] %v311
                %v313 = vld [vmem:[%s225 + $0x298] sm:$0xff]
                %314 = vst [vmem:[%s226 + $0x158] sm:$0xff] %v313
                %v315 = vld [vmem:[%s225 + $0x2a0] sm:$0xff]
                %316 = vst [vmem:[%s226 + $0x160] sm:$0xff] %v315
                %v317 = vld [vmem:[%s225 + $0x2a8] sm:$0xff]
                %318 = vst [vmem:[%s226 + $0x168] sm:$0xff] %v317
                %v319 = vld [vmem:[%s225 + $0x2b0] sm:$0xff]
                %320 = vst [vmem:[%s226 + $0x170] sm:$0xff] %v319
                %v321 = vld [vmem:[%s225 + $0x2b8] sm:$0xff]
                %322 = vst [vmem:[%s226 + $0x178] sm:$0xff] %v321
                %v323 = vld [vmem:[%s225 + $0x300] sm:$0xff]
                %324 = vst [vmem:[%s226 + $0x180] sm:$0xff] %v323
                %v325 = vld [vmem:[%s225 + $0x308] sm:$0xff]
                %326 = vst [vmem:[%s226 + $0x188] sm:$0xff] %v325
                %v327 = vld [vmem:[%s225 + $0x310] sm:$0xff]
                %328 = vst [vmem:[%s226 + $0x190] sm:$0xff] %v327
                %v329 = vld [vmem:[%s225 + $0x318] sm:$0xff]
                %330 = vst [vmem:[%s226 + $0x198] sm:$0xff] %v329
                %v331 = vld [vmem:[%s225 + $0x320] sm:$0xff]
                %332 = vst [vmem:[%s226 + $0x1a0] sm:$0xff] %v331
                %v333 = vld [vmem:[%s225 + $0x328] sm:$0xff]
                %334 = vst [vmem:[%s226 + $0x1a8] sm:$0xff] %v333
                %v335 = vld [vmem:[%s225 + $0x330] sm:$0xff]
                %336 = vst [vmem:[%s226 + $0x1b0] sm:$0xff] %v335
                %v337 = vld [vmem:[%s225 + $0x338] sm:$0xff]
                %338 = vst [vmem:[%s226 + $0x1b8] sm:$0xff] %v337
                %v339 = vld [vmem:[%s225 + $0x380] sm:$0xff]
                %340 = vst [vmem:[%s226 + $0x1c0] sm:$0xff] %v339
                %v341 = vld [vmem:[%s225 + $0x388] sm:$0xff]
                %342 = vst [vmem:[%s226 + $0x1c8] sm:$0xff] %v341
                %v343 = vld [vmem:[%s225 + $0x390] sm:$0xff]
                %344 = vst [vmem:[%s226 + $0x1d0] sm:$0xff] %v343
                %v345 = vld [vmem:[%s225 + $0x398] sm:$0xff]
                %346 = vst [vmem:[%s226 + $0x1d8] sm:$0xff] %v345
                %v347 = vld [vmem:[%s225 + $0x3a0] sm:$0xff]
                %348 = vst [vmem:[%s226 + $0x1e0] sm:$0xff] %v347
                %v349 = vld [vmem:[%s225 + $0x3a8] sm:$0xff]
                %350 = vst [vmem:[%s226 + $0x1e8] sm:$0xff] %v349
                %v351 = vld [vmem:[%s225 + $0x3b0] sm:$0xff]
                %352 = vst [vmem:[%s226 + $0x1f0] sm:$0xff] %v351
                %v353 = vld [vmem:[%s225 + $0x3b8] sm:$0xff]
                %354 = vst [vmem:[%s226 + $0x1f8] sm:$0xff] %v353
                %v355 = vld [vmem:[%s225 + $0x400] sm:$0xff]
                %356 = vst [vmem:[%s226 + $0x200] sm:$0xff] %v355
                %v357 = vld [vmem:[%s225 + $0x408] sm:$0xff]
                %358 = vst [vmem:[%s226 + $0x208] sm:$0xff] %v357
                %v359 = vld [vmem:[%s225 + $0x410] sm:$0xff]
                %360 = vst [vmem:[%s226 + $0x210] sm:$0xff] %v359
                %v361 = vld [vmem:[%s225 + $0x418] sm:$0xff]
                %362 = vst [vmem:[%s226 + $0x218] sm:$0xff] %v361
                %v363 = vld [vmem:[%s225 + $0x420] sm:$0xff]
                %364 = vst [vmem:[%s226 + $0x220] sm:$0xff] %v363
                %v365 = vld [vmem:[%s225 + $0x428] sm:$0xff]
                %366 = vst [vmem:[%s226 + $0x228] sm:$0xff] %v365
                %v367 = vld [vmem:[%s225 + $0x430] sm:$0xff]
                %368 = vst [vmem:[%s226 + $0x230] sm:$0xff] %v367
                %v369 = vld [vmem:[%s225 + $0x438] sm:$0xff]
                %370 = vst [vmem:[%s226 + $0x238] sm:$0xff] %v369
                %v371 = vld [vmem:[%s225 + $0x480] sm:$0xff]
                %372 = vst [vmem:[%s226 + $0x240] sm:$0xff] %v371
                %v373 = vld [vmem:[%s225 + $0x488] sm:$0xff]
                %374 = vst [vmem:[%s226 + $0x248] sm:$0xff] %v373
                %v375 = vld [vmem:[%s225 + $0x490] sm:$0xff]
                %376 = vst [vmem:[%s226 + $0x250] sm:$0xff] %v375
                %v377 = vld [vmem:[%s225 + $0x498] sm:$0xff]
                %378 = vst [vmem:[%s226 + $0x258] sm:$0xff] %v377
                %v379 = vld [vmem:[%s225 + $0x4a0] sm:$0xff]
                %380 = vst [vmem:[%s226 + $0x260] sm:$0xff] %v379
                %v381 = vld [vmem:[%s225 + $0x4a8] sm:$0xff]
                %382 = vst [vmem:[%s226 + $0x268] sm:$0xff] %v381
                %v383 = vld [vmem:[%s225 + $0x4b0] sm:$0xff]
                %384 = vst [vmem:[%s226 + $0x270] sm:$0xff] %v383
                %v385 = vld [vmem:[%s225 + $0x4b8] sm:$0xff]
                %386 = vst [vmem:[%s226 + $0x278] sm:$0xff] %v385
                %v387 = vld [vmem:[%s225 + $0x500] sm:$0xff]
                %388 = vst [vmem:[%s226 + $0x280] sm:$0xff] %v387
                %v389 = vld [vmem:[%s225 + $0x508] sm:$0xff]
                %390 = vst [vmem:[%s226 + $0x288] sm:$0xff] %v389
                %v391 = vld [vmem:[%s225 + $0x510] sm:$0xff]
                %392 = vst [vmem:[%s226 + $0x290] sm:$0xff] %v391
                %v393 = vld [vmem:[%s225 + $0x518] sm:$0xff]
                %394 = vst [vmem:[%s226 + $0x298] sm:$0xff] %v393
                %v395 = vld [vmem:[%s225 + $0x520] sm:$0xff]
                %396 = vst [vmem:[%s226 + $0x2a0] sm:$0xff] %v395
                %v397 = vld [vmem:[%s225 + $0x528] sm:$0xff]
                %398 = vst [vmem:[%s226 + $0x2a8] sm:$0xff] %v397
                %v399 = vld [vmem:[%s225 + $0x530] sm:$0xff]
                %400 = vst [vmem:[%s226 + $0x2b0] sm:$0xff] %v399
                %v401 = vld [vmem:[%s225 + $0x538] sm:$0xff]
                %402 = vst [vmem:[%s226 + $0x2b8] sm:$0xff] %v401
                %v403 = vld [vmem:[%s225 + $0x580] sm:$0xff]
                %404 = vst [vmem:[%s226 + $0x2c0] sm:$0xff] %v403
                %v405 = vld [vmem:[%s225 + $0x588] sm:$0xff]
                %406 = vst [vmem:[%s226 + $0x2c8] sm:$0xff] %v405
                %v407 = vld [vmem:[%s225 + $0x590] sm:$0xff]
                %408 = vst [vmem:[%s226 + $0x2d0] sm:$0xff] %v407
                %v409 = vld [vmem:[%s225 + $0x598] sm:$0xff]
                %410 = vst [vmem:[%s226 + $0x2d8] sm:$0xff] %v409
                %v411 = vld [vmem:[%s225 + $0x5a0] sm:$0xff]
                %412 = vst [vmem:[%s226 + $0x2e0] sm:$0xff] %v411
                %v413 = vld [vmem:[%s225 + $0x5a8] sm:$0xff]
                %414 = vst [vmem:[%s226 + $0x2e8] sm:$0xff] %v413
                %v415 = vld [vmem:[%s225 + $0x5b0] sm:$0xff]
                %416 = vst [vmem:[%s226 + $0x2f0] sm:$0xff] %v415
                %v417 = vld [vmem:[%s225 + $0x5b8] sm:$0xff]
                %418 = vst [vmem:[%s226 + $0x2f8] sm:$0xff] %v417
                %v419 = vld [vmem:[%s225 + $0x600] sm:$0xff]
                %420 = vst [vmem:[%s226 + $0x300] sm:$0xff] %v419
                %v421 = vld [vmem:[%s225 + $0x608] sm:$0xff]
                %422 = vst [vmem:[%s226 + $0x308] sm:$0xff] %v421
                %v423 = vld [vmem:[%s225 + $0x610] sm:$0xff]
                %424 = vst [vmem:[%s226 + $0x310] sm:$0xff] %v423
                %v425 = vld [vmem:[%s225 + $0x618] sm:$0xff]
                %426 = vst [vmem:[%s226 + $0x318] sm:$0xff] %v425
                %v427 = vld [vmem:[%s225 + $0x620] sm:$0xff]
                %428 = vst [vmem:[%s226 + $0x320] sm:$0xff] %v427
                %v429 = vld [vmem:[%s225 + $0x628] sm:$0xff]
                %430 = vst [vmem:[%s226 + $0x328] sm:$0xff] %v429
                %v431 = vld [vmem:[%s225 + $0x630] sm:$0xff]
                %432 = vst [vmem:[%s226 + $0x330] sm:$0xff] %v431
                %v433 = vld [vmem:[%s225 + $0x638] sm:$0xff]
                %434 = vst [vmem:[%s226 + $0x338] sm:$0xff] %v433
                %v435 = vld [vmem:[%s225 + $0x680] sm:$0xff]
                %436 = vst [vmem:[%s226 + $0x340] sm:$0xff] %v435
                %v437 = vld [vmem:[%s225 + $0x688] sm:$0xff]
                %438 = vst [vmem:[%s226 + $0x348] sm:$0xff] %v437
                %v439 = vld [vmem:[%s225 + $0x690] sm:$0xff]
                %440 = vst [vmem:[%s226 + $0x350] sm:$0xff] %v439
                %v441 = vld [vmem:[%s225 + $0x698] sm:$0xff]
                %442 = vst [vmem:[%s226 + $0x358] sm:$0xff] %v441
                %v443 = vld [vmem:[%s225 + $0x6a0] sm:$0xff]
                %444 = vst [vmem:[%s226 + $0x360] sm:$0xff] %v443
                %v445 = vld [vmem:[%s225 + $0x6a8] sm:$0xff]
                %446 = vst [vmem:[%s226 + $0x368] sm:$0xff] %v445
                %v447 = vld [vmem:[%s225 + $0x6b0] sm:$0xff]
                %448 = vst [vmem:[%s226 + $0x370] sm:$0xff] %v447
                %v449 = vld [vmem:[%s225 + $0x6b8] sm:$0xff]
                %450 = vst [vmem:[%s226 + $0x378] sm:$0xff] %v449
                %v451 = vld [vmem:[%s225 + $0x700] sm:$0xff]
                %452 = vst [vmem:[%s226 + $0x380] sm:$0xff] %v451
                %v453 = vld [vmem:[%s225 + $0x708] sm:$0xff]
                %454 = vst [vmem:[%s226 + $0x388] sm:$0xff] %v453
                %v455 = vld [vmem:[%s225 + $0x710] sm:$0xff]
                %456 = vst [vmem:[%s226 + $0x390] sm:$0xff] %v455
                %v457 = vld [vmem:[%s225 + $0x718] sm:$0xff]
                %458 = vst [vmem:[%s226 + $0x398] sm:$0xff] %v457
                %v459 = vld [vmem:[%s225 + $0x720] sm:$0xff]
                %460 = vst [vmem:[%s226 + $0x3a0] sm:$0xff] %v459
                %v461 = vld [vmem:[%s225 + $0x728] sm:$0xff]
                %462 = vst [vmem:[%s226 + $0x3a8] sm:$0xff] %v461
                %v463 = vld [vmem:[%s225 + $0x730] sm:$0xff]
                %464 = vst [vmem:[%s226 + $0x3b0] sm:$0xff] %v463
                %v465 = vld [vmem:[%s225 + $0x738] sm:$0xff]
                %466 = vst [vmem:[%s226 + $0x3b8] sm:$0xff] %v465
                %v467 = vld [vmem:[%s225 + $0x780] sm:$0xff]
                %468 = vst [vmem:[%s226 + $0x3c0] sm:$0xff] %v467
                %v469 = vld [vmem:[%s225 + $0x788] sm:$0xff]
                %470 = vst [vmem:[%s226 + $0x3c8] sm:$0xff] %v469
                %v471 = vld [vmem:[%s225 + $0x790] sm:$0xff]
                %472 = vst [vmem:[%s226 + $0x3d0] sm:$0xff] %v471
                %v473 = vld [vmem:[%s225 + $0x798] sm:$0xff]
                %474 = vst [vmem:[%s226 + $0x3d8] sm:$0xff] %v473
                %v475 = vld [vmem:[%s225 + $0x7a0] sm:$0xff]
                %476 = vst [vmem:[%s226 + $0x3e0] sm:$0xff] %v475
                %v477 = vld [vmem:[%s225 + $0x7a8] sm:$0xff]
                %478 = vst [vmem:[%s226 + $0x3e8] sm:$0xff] %v477
                %v479 = vld [vmem:[%s225 + $0x7b0] sm:$0xff]
                %480 = vst [vmem:[%s226 + $0x3f0] sm:$0xff] %v479
                %v481 = vld [vmem:[%s225 + $0x7b8] sm:$0xff]
                %482 = vst [vmem:[%s226 + $0x3f8] sm:$0xff] %v481
                %v483 = vld [vmem:[%s225 + $0x800] sm:$0xff]
                %484 = vst [vmem:[%s226 + $0x400] sm:$0xff] %v483
                %v485 = vld [vmem:[%s225 + $0x808] sm:$0xff]
                %486 = vst [vmem:[%s226 + $0x408] sm:$0xff] %v485
                %v487 = vld [vmem:[%s225 + $0x810] sm:$0xff]
                %488 = vst [vmem:[%s226 + $0x410] sm:$0xff] %v487
                %v489 = vld [vmem:[%s225 + $0x818] sm:$0xff]
                %490 = vst [vmem:[%s226 + $0x418] sm:$0xff] %v489
                %v491 = vld [vmem:[%s225 + $0x820] sm:$0xff]
                %492 = vst [vmem:[%s226 + $0x420] sm:$0xff] %v491
                %v493 = vld [vmem:[%s225 + $0x828] sm:$0xff]
                %494 = vst [vmem:[%s226 + $0x428] sm:$0xff] %v493
                %v495 = vld [vmem:[%s225 + $0x830] sm:$0xff]
                %496 = vst [vmem:[%s226 + $0x430] sm:$0xff] %v495
                %v497 = vld [vmem:[%s225 + $0x838] sm:$0xff]
                %498 = vst [vmem:[%s226 + $0x438] sm:$0xff] %v497
                %v499 = vld [vmem:[%s225 + $0x880] sm:$0xff]
                %500 = vst [vmem:[%s226 + $0x440] sm:$0xff] %v499
                %v501 = vld [vmem:[%s225 + $0x888] sm:$0xff]
                %502 = vst [vmem:[%s226 + $0x448] sm:$0xff] %v501
                %v503 = vld [vmem:[%s225 + $0x890] sm:$0xff]
                %504 = vst [vmem:[%s226 + $0x450] sm:$0xff] %v503
                %v505 = vld [vmem:[%s225 + $0x898] sm:$0xff]
                %506 = vst [vmem:[%s226 + $0x458] sm:$0xff] %v505
                %v507 = vld [vmem:[%s225 + $0x8a0] sm:$0xff]
                %508 = vst [vmem:[%s226 + $0x460] sm:$0xff] %v507
                %v509 = vld [vmem:[%s225 + $0x8a8] sm:$0xff]
                %510 = vst [vmem:[%s226 + $0x468] sm:$0xff] %v509
                %v511 = vld [vmem:[%s225 + $0x8b0] sm:$0xff]
                %512 = vst [vmem:[%s226 + $0x470] sm:$0xff] %v511
                %v513 = vld [vmem:[%s225 + $0x8b8] sm:$0xff]
                %514 = vst [vmem:[%s226 + $0x478] sm:$0xff] %v513
                %v515 = vld [vmem:[%s225 + $0x900] sm:$0xff]
                %516 = vst [vmem:[%s226 + $0x480] sm:$0xff] %v515
                %v517 = vld [vmem:[%s225 + $0x908] sm:$0xff]
                %518 = vst [vmem:[%s226 + $0x488] sm:$0xff] %v517
                %v519 = vld [vmem:[%s225 + $0x910] sm:$0xff]
                %520 = vst [vmem:[%s226 + $0x490] sm:$0xff] %v519
                %v521 = vld [vmem:[%s225 + $0x918] sm:$0xff]
                %522 = vst [vmem:[%s226 + $0x498] sm:$0xff] %v521
                %v523 = vld [vmem:[%s225 + $0x920] sm:$0xff]
                %524 = vst [vmem:[%s226 + $0x4a0] sm:$0xff] %v523
                %v525 = vld [vmem:[%s225 + $0x928] sm:$0xff]
                %526 = vst [vmem:[%s226 + $0x4a8] sm:$0xff] %v525
                %v527 = vld [vmem:[%s225 + $0x930] sm:$0xff]
                %528 = vst [vmem:[%s226 + $0x4b0] sm:$0xff] %v527
                %v529 = vld [vmem:[%s225 + $0x938] sm:$0xff]
                %530 = vst [vmem:[%s226 + $0x4b8] sm:$0xff] %v529
                %v531 = vld [vmem:[%s225 + $0x980] sm:$0xff]
                %532 = vst [vmem:[%s226 + $0x4c0] sm:$0xff] %v531
                %v533 = vld [vmem:[%s225 + $0x988] sm:$0xff]
                %534 = vst [vmem:[%s226 + $0x4c8] sm:$0xff] %v533
                %v535 = vld [vmem:[%s225 + $0x990] sm:$0xff]
                %536 = vst [vmem:[%s226 + $0x4d0] sm:$0xff] %v535
                %v537 = vld [vmem:[%s225 + $0x998] sm:$0xff]
                %538 = vst [vmem:[%s226 + $0x4d8] sm:$0xff] %v537
                %v539 = vld [vmem:[%s225 + $0x9a0] sm:$0xff]
                %540 = vst [vmem:[%s226 + $0x4e0] sm:$0xff] %v539
                %v541 = vld [vmem:[%s225 + $0x9a8] sm:$0xff]
                %542 = vst [vmem:[%s226 + $0x4e8] sm:$0xff] %v541
                %v543 = vld [vmem:[%s225 + $0x9b0] sm:$0xff]
                %544 = vst [vmem:[%s226 + $0x4f0] sm:$0xff] %v543
                %v545 = vld [vmem:[%s225 + $0x9b8] sm:$0xff]
                %546 = vst [vmem:[%s226 + $0x4f8] sm:$0xff] %v545
                %v547 = vld [vmem:[%s225 + $0xa00] sm:$0xff]
                %548 = vst [vmem:[%s226 + $0x500] sm:$0xff] %v547
                %v549 = vld [vmem:[%s225 + $0xa08] sm:$0xff]
                %550 = vst [vmem:[%s226 + $0x508] sm:$0xff] %v549
                %v551 = vld [vmem:[%s225 + $0xa10] sm:$0xff]
                %552 = vst [vmem:[%s226 + $0x510] sm:$0xff] %v551
                %v553 = vld [vmem:[%s225 + $0xa18] sm:$0xff]
                %554 = vst [vmem:[%s226 + $0x518] sm:$0xff] %v553
                %v555 = vld [vmem:[%s225 + $0xa20] sm:$0xff]
                %556 = vst [vmem:[%s226 + $0x520] sm:$0xff] %v555
                %v557 = vld [vmem:[%s225 + $0xa28] sm:$0xff]
                %558 = vst [vmem:[%s226 + $0x528] sm:$0xff] %v557
                %v559 = vld [vmem:[%s225 + $0xa30] sm:$0xff]
                %560 = vst [vmem:[%s226 + $0x530] sm:$0xff] %v559
                %v561 = vld [vmem:[%s225 + $0xa38] sm:$0xff]
                %562 = vst [vmem:[%s226 + $0x538] sm:$0xff] %v561
                %v563 = vld [vmem:[%s225 + $0xa80] sm:$0xff]
                %564 = vst [vmem:[%s226 + $0x540] sm:$0xff] %v563
                %v565 = vld [vmem:[%s225 + $0xa88] sm:$0xff]
                %566 = vst [vmem:[%s226 + $0x548] sm:$0xff] %v565
                %v567 = vld [vmem:[%s225 + $0xa90] sm:$0xff]
                %568 = vst [vmem:[%s226 + $0x550] sm:$0xff] %v567
                %v569 = vld [vmem:[%s225 + $0xa98] sm:$0xff]
                %570 = vst [vmem:[%s226 + $0x558] sm:$0xff] %v569
                %v571 = vld [vmem:[%s225 + $0xaa0] sm:$0xff]
                %572 = vst [vmem:[%s226 + $0x560] sm:$0xff] %v571
                %v573 = vld [vmem:[%s225 + $0xaa8] sm:$0xff]
                %574 = vst [vmem:[%s226 + $0x568] sm:$0xff] %v573
                %v575 = vld [vmem:[%s225 + $0xab0] sm:$0xff]
                %576 = vst [vmem:[%s226 + $0x570] sm:$0xff] %v575
                %v577 = vld [vmem:[%s225 + $0xab8] sm:$0xff]
                %578 = vst [vmem:[%s226 + $0x578] sm:$0xff] %v577
                %v579 = vld [vmem:[%s225 + $0xb00] sm:$0xff]
                %580 = vst [vmem:[%s226 + $0x580] sm:$0xff] %v579
                %v581 = vld [vmem:[%s225 + $0xb08] sm:$0xff]
                %582 = vst [vmem:[%s226 + $0x588] sm:$0xff] %v581
                %v583 = vld [vmem:[%s225 + $0xb10] sm:$0xff]
                %584 = vst [vmem:[%s226 + $0x590] sm:$0xff] %v583
                %v585 = vld [vmem:[%s225 + $0xb18] sm:$0xff]
                %586 = vst [vmem:[%s226 + $0x598] sm:$0xff] %v585
                %v587 = vld [vmem:[%s225 + $0xb20] sm:$0xff]
                %588 = vst [vmem:[%s226 + $0x5a0] sm:$0xff] %v587
                %v589 = vld [vmem:[%s225 + $0xb28] sm:$0xff]
                %590 = vst [vmem:[%s226 + $0x5a8] sm:$0xff] %v589
                %v591 = vld [vmem:[%s225 + $0xb30] sm:$0xff]
                %592 = vst [vmem:[%s226 + $0x5b0] sm:$0xff] %v591
                %v593 = vld [vmem:[%s225 + $0xb38] sm:$0xff]
                %594 = vst [vmem:[%s226 + $0x5b8] sm:$0xff] %v593
                %v595 = vld [vmem:[%s225 + $0xb80] sm:$0xff]
                %596 = vst [vmem:[%s226 + $0x5c0] sm:$0xff] %v595
                %v597 = vld [vmem:[%s225 + $0xb88] sm:$0xff]
                %598 = vst [vmem:[%s226 + $0x5c8] sm:$0xff] %v597
                %v599 = vld [vmem:[%s225 + $0xb90] sm:$0xff]
                %600 = vst [vmem:[%s226 + $0x5d0] sm:$0xff] %v599
                %v601 = vld [vmem:[%s225 + $0xb98] sm:$0xff]
                %602 = vst [vmem:[%s226 + $0x5d8] sm:$0xff] %v601
                %v603 = vld [vmem:[%s225 + $0xba0] sm:$0xff]
                %604 = vst [vmem:[%s226 + $0x5e0] sm:$0xff] %v603
                %v605 = vld [vmem:[%s225 + $0xba8] sm:$0xff]
                %606 = vst [vmem:[%s226 + $0x5e8] sm:$0xff] %v605
                %v607 = vld [vmem:[%s225 + $0xbb0] sm:$0xff]
                %608 = vst [vmem:[%s226 + $0x5f0] sm:$0xff] %v607
                %v609 = vld [vmem:[%s225 + $0xbb8] sm:$0xff]
                %610 = vst [vmem:[%s226 + $0x5f8] sm:$0xff] %v609
                %v611 = vld [vmem:[%s225 + $0xc00] sm:$0xff]
                %612 = vst [vmem:[%s226 + $0x600] sm:$0xff] %v611
                %v613 = vld [vmem:[%s225 + $0xc08] sm:$0xff]
                %614 = vst [vmem:[%s226 + $0x608] sm:$0xff] %v613
                %v615 = vld [vmem:[%s225 + $0xc10] sm:$0xff]
                %616 = vst [vmem:[%s226 + $0x610] sm:$0xff] %v615
                %v617 = vld [vmem:[%s225 + $0xc18] sm:$0xff]
                %618 = vst [vmem:[%s226 + $0x618] sm:$0xff] %v617
                %v619 = vld [vmem:[%s225 + $0xc20] sm:$0xff]
                %620 = vst [vmem:[%s226 + $0x620] sm:$0xff] %v619
                %v621 = vld [vmem:[%s225 + $0xc28] sm:$0xff]
                %622 = vst [vmem:[%s226 + $0x628] sm:$0xff] %v621
                %v623 = vld [vmem:[%s225 + $0xc30] sm:$0xff]
                %624 = vst [vmem:[%s226 + $0x630] sm:$0xff] %v623
                %v625 = vld [vmem:[%s225 + $0xc38] sm:$0xff]
                %626 = vst [vmem:[%s226 + $0x638] sm:$0xff] %v625
                %v627 = vld [vmem:[%s225 + $0xc80] sm:$0xff]
                %628 = vst [vmem:[%s226 + $0x640] sm:$0xff] %v627
                %v629 = vld [vmem:[%s225 + $0xc88] sm:$0xff]
                %630 = vst [vmem:[%s226 + $0x648] sm:$0xff] %v629
                %v631 = vld [vmem:[%s225 + $0xc90] sm:$0xff]
                %632 = vst [vmem:[%s226 + $0x650] sm:$0xff] %v631
                %v633 = vld [vmem:[%s225 + $0xc98] sm:$0xff]
                %634 = vst [vmem:[%s226 + $0x658] sm:$0xff] %v633
                %v635 = vld [vmem:[%s225 + $0xca0] sm:$0xff]
                %636 = vst [vmem:[%s226 + $0x660] sm:$0xff] %v635
                %v637 = vld [vmem:[%s225 + $0xca8] sm:$0xff]
                %638 = vst [vmem:[%s226 + $0x668] sm:$0xff] %v637
                %v639 = vld [vmem:[%s225 + $0xcb0] sm:$0xff]
                %640 = vst [vmem:[%s226 + $0x670] sm:$0xff] %v639
                %v641 = vld [vmem:[%s225 + $0xcb8] sm:$0xff]
                %642 = vst [vmem:[%s226 + $0x678] sm:$0xff] %v641
                %v643 = vld [vmem:[%s225 + $0xd00] sm:$0xff]
                %644 = vst [vmem:[%s226 + $0x680] sm:$0xff] %v643
                %v645 = vld [vmem:[%s225 + $0xd08] sm:$0xff]
                %646 = vst [vmem:[%s226 + $0x688] sm:$0xff] %v645
                %v647 = vld [vmem:[%s225 + $0xd10] sm:$0xff]
                %648 = vst [vmem:[%s226 + $0x690] sm:$0xff] %v647
                %v649 = vld [vmem:[%s225 + $0xd18] sm:$0xff]
                %650 = vst [vmem:[%s226 + $0x698] sm:$0xff] %v649
                %v651 = vld [vmem:[%s225 + $0xd20] sm:$0xff]
                %652 = vst [vmem:[%s226 + $0x6a0] sm:$0xff] %v651
                %v653 = vld [vmem:[%s225 + $0xd28] sm:$0xff]
                %654 = vst [vmem:[%s226 + $0x6a8] sm:$0xff] %v653
                %v655 = vld [vmem:[%s225 + $0xd30] sm:$0xff]
                %656 = vst [vmem:[%s226 + $0x6b0] sm:$0xff] %v655
                %v657 = vld [vmem:[%s225 + $0xd38] sm:$0xff]
                %658 = vst [vmem:[%s226 + $0x6b8] sm:$0xff] %v657
                %v659 = vld [vmem:[%s225 + $0xd80] sm:$0xff]
                %660 = vst [vmem:[%s226 + $0x6c0] sm:$0xff] %v659
                %v661 = vld [vmem:[%s225 + $0xd88] sm:$0xff]
                %662 = vst [vmem:[%s226 + $0x6c8] sm:$0xff] %v661
                %v663 = vld [vmem:[%s225 + $0xd90] sm:$0xff]
                %664 = vst [vmem:[%s226 + $0x6d0] sm:$0xff] %v663
                %v665 = vld [vmem:[%s225 + $0xd98] sm:$0xff]
                %666 = vst [vmem:[%s226 + $0x6d8] sm:$0xff] %v665
                %v667 = vld [vmem:[%s225 + $0xda0] sm:$0xff]
                %668 = vst [vmem:[%s226 + $0x6e0] sm:$0xff] %v667
                %v669 = vld [vmem:[%s225 + $0xda8] sm:$0xff]
                %670 = vst [vmem:[%s226 + $0x6e8] sm:$0xff] %v669
                %v671 = vld [vmem:[%s225 + $0xdb0] sm:$0xff]
                %672 = vst [vmem:[%s226 + $0x6f0] sm:$0xff] %v671
                %v673 = vld [vmem:[%s225 + $0xdb8] sm:$0xff]
                %674 = vst [vmem:[%s226 + $0x6f8] sm:$0xff] %v673
                %v675 = vld [vmem:[%s225 + $0xe00] sm:$0xff]
                %676 = vst [vmem:[%s226 + $0x700] sm:$0xff] %v675
                %v677 = vld [vmem:[%s225 + $0xe08] sm:$0xff]
                %678 = vst [vmem:[%s226 + $0x708] sm:$0xff] %v677
                %v679 = vld [vmem:[%s225 + $0xe10] sm:$0xff]
                %680 = vst [vmem:[%s226 + $0x710] sm:$0xff] %v679
                %v681 = vld [vmem:[%s225 + $0xe18] sm:$0xff]
                %682 = vst [vmem:[%s226 + $0x718] sm:$0xff] %v681
                %v683 = vld [vmem:[%s225 + $0xe20] sm:$0xff]
                %684 = vst [vmem:[%s226 + $0x720] sm:$0xff] %v683
                %v685 = vld [vmem:[%s225 + $0xe28] sm:$0xff]
                %686 = vst [vmem:[%s226 + $0x728] sm:$0xff] %v685
                %v687 = vld [vmem:[%s225 + $0xe30] sm:$0xff]
                %688 = vst [vmem:[%s226 + $0x730] sm:$0xff] %v687
                %v689 = vld [vmem:[%s225 + $0xe38] sm:$0xff]
                %690 = vst [vmem:[%s226 + $0x738] sm:$0xff] %v689
                %v691 = vld [vmem:[%s225 + $0xe80] sm:$0xff]
                %692 = vst [vmem:[%s226 + $0x740] sm:$0xff] %v691
                %v693 = vld [vmem:[%s225 + $0xe88] sm:$0xff]
                %694 = vst [vmem:[%s226 + $0x748] sm:$0xff] %v693
                %v695 = vld [vmem:[%s225 + $0xe90] sm:$0xff]
                %696 = vst [vmem:[%s226 + $0x750] sm:$0xff] %v695
                %v697 = vld [vmem:[%s225 + $0xe98] sm:$0xff]
                %698 = vst [vmem:[%s226 + $0x758] sm:$0xff] %v697
                %v699 = vld [vmem:[%s225 + $0xea0] sm:$0xff]
                %700 = vst [vmem:[%s226 + $0x760] sm:$0xff] %v699
                %v701 = vld [vmem:[%s225 + $0xea8] sm:$0xff]
                %702 = vst [vmem:[%s226 + $0x768] sm:$0xff] %v701
                %v703 = vld [vmem:[%s225 + $0xeb0] sm:$0xff]
                %704 = vst [vmem:[%s226 + $0x770] sm:$0xff] %v703
                %v705 = vld [vmem:[%s225 + $0xeb8] sm:$0xff]
                %706 = vst [vmem:[%s226 + $0x778] sm:$0xff] %v705
                %v707 = vld [vmem:[%s225 + $0xf00] sm:$0xff]
                %708 = vst [vmem:[%s226 + $0x780] sm:$0xff] %v707
                %v709 = vld [vmem:[%s225 + $0xf08] sm:$0xff]
                %710 = vst [vmem:[%s226 + $0x788] sm:$0xff] %v709
                %v711 = vld [vmem:[%s225 + $0xf10] sm:$0xff]
                %712 = vst [vmem:[%s226 + $0x790] sm:$0xff] %v711
                %v713 = vld [vmem:[%s225 + $0xf18] sm:$0xff]
                %714 = vst [vmem:[%s226 + $0x798] sm:$0xff] %v713
                %v715 = vld [vmem:[%s225 + $0xf20] sm:$0xff]
                %716 = vst [vmem:[%s226 + $0x7a0] sm:$0xff] %v715
                %v717 = vld [vmem:[%s225 + $0xf28] sm:$0xff]
                %718 = vst [vmem:[%s226 + $0x7a8] sm:$0xff] %v717
                %v719 = vld [vmem:[%s225 + $0xf30] sm:$0xff]
                %720 = vst [vmem:[%s226 + $0x7b0] sm:$0xff] %v719
                %v721 = vld [vmem:[%s225 + $0xf38] sm:$0xff]
                %722 = vst [vmem:[%s226 + $0x7b8] sm:$0xff] %v721
                %v723 = vld [vmem:[%s225 + $0xf80] sm:$0xff]
                %724 = vst [vmem:[%s226 + $0x7c0] sm:$0xff] %v723
                %v725 = vld [vmem:[%s225 + $0xf88] sm:$0xff]
                %726 = vst [vmem:[%s226 + $0x7c8] sm:$0xff] %v725
                %v727 = vld [vmem:[%s225 + $0xf90] sm:$0xff]
                %728 = vst [vmem:[%s226 + $0x7d0] sm:$0xff] %v727
                %v729 = vld [vmem:[%s225 + $0xf98] sm:$0xff]
                %730 = vst [vmem:[%s226 + $0x7d8] sm:$0xff] %v729
                %v731 = vld [vmem:[%s225 + $0xfa0] sm:$0xff]
                %732 = vst [vmem:[%s226 + $0x7e0] sm:$0xff] %v731
                %v733 = vld [vmem:[%s225 + $0xfa8] sm:$0xff]
                %734 = vst [vmem:[%s226 + $0x7e8] sm:$0xff] %v733
                %v735 = vld [vmem:[%s225 + $0xfb0] sm:$0xff]
                %736 = vst [vmem:[%s226 + $0x7f0] sm:$0xff] %v735
                %v737 = vld [vmem:[%s225 + $0xfb8] sm:$0xff]
                %738 = vst [vmem:[%s226 + $0x7f8] sm:$0xff] %v737
                %v739 = vld [vmem:[%s225 + $0x1000] sm:$0xff]
                %740 = vst [vmem:[%s226 + $0x800] sm:$0xff] %v739
                %v741 = vld [vmem:[%s225 + $0x1008] sm:$0xff]
                %742 = vst [vmem:[%s226 + $0x808] sm:$0xff] %v741
                %v743 = vld [vmem:[%s225 + $0x1010] sm:$0xff]
                %744 = vst [vmem:[%s226 + $0x810] sm:$0xff] %v743
                %v745 = vld [vmem:[%s225 + $0x1018] sm:$0xff]
                %746 = vst [vmem:[%s226 + $0x818] sm:$0xff] %v745
                %v747 = vld [vmem:[%s225 + $0x1020] sm:$0xff]
                %748 = vst [vmem:[%s226 + $0x820] sm:$0xff] %v747
                %v749 = vld [vmem:[%s225 + $0x1028] sm:$0xff]
                %750 = vst [vmem:[%s226 + $0x828] sm:$0xff] %v749
                %v751 = vld [vmem:[%s225 + $0x1030] sm:$0xff]
                %752 = vst [vmem:[%s226 + $0x830] sm:$0xff] %v751
                %v753 = vld [vmem:[%s225 + $0x1038] sm:$0xff]
                %754 = vst [vmem:[%s226 + $0x838] sm:$0xff] %v753
                %v755 = vld [vmem:[%s225 + $0x1080] sm:$0xff]
                %756 = vst [vmem:[%s226 + $0x840] sm:$0xff] %v755
                %v757 = vld [vmem:[%s225 + $0x1088] sm:$0xff]
                %758 = vst [vmem:[%s226 + $0x848] sm:$0xff] %v757
                %v759 = vld [vmem:[%s225 + $0x1090] sm:$0xff]
                %760 = vst [vmem:[%s226 + $0x850] sm:$0xff] %v759
                %v761 = vld [vmem:[%s225 + $0x1098] sm:$0xff]
                %762 = vst [vmem:[%s226 + $0x858] sm:$0xff] %v761
                %v763 = vld [vmem:[%s225 + $0x10a0] sm:$0xff]
                %764 = vst [vmem:[%s226 + $0x860] sm:$0xff] %v763
                %v765 = vld [vmem:[%s225 + $0x10a8] sm:$0xff]
                %766 = vst [vmem:[%s226 + $0x868] sm:$0xff] %v765
                %v767 = vld [vmem:[%s225 + $0x10b0] sm:$0xff]
                %768 = vst [vmem:[%s226 + $0x870] sm:$0xff] %v767
                %v769 = vld [vmem:[%s225 + $0x10b8] sm:$0xff]
                %770 = vst [vmem:[%s226 + $0x878] sm:$0xff] %v769
                %v771 = vld [vmem:[%s225 + $0x1100] sm:$0xff]
                %772 = vst [vmem:[%s226 + $0x880] sm:$0xff] %v771
                %v773 = vld [vmem:[%s225 + $0x1108] sm:$0xff]
                %774 = vst [vmem:[%s226 + $0x888] sm:$0xff] %v773
                %v775 = vld [vmem:[%s225 + $0x1110] sm:$0xff]
                %776 = vst [vmem:[%s226 + $0x890] sm:$0xff] %v775
                %v777 = vld [vmem:[%s225 + $0x1118] sm:$0xff]
                %778 = vst [vmem:[%s226 + $0x898] sm:$0xff] %v777
                %v779 = vld [vmem:[%s225 + $0x1120] sm:$0xff]
                %780 = vst [vmem:[%s226 + $0x8a0] sm:$0xff] %v779
                %v781 = vld [vmem:[%s225 + $0x1128] sm:$0xff]
                %782 = vst [vmem:[%s226 + $0x8a8] sm:$0xff] %v781
                %v783 = vld [vmem:[%s225 + $0x1130] sm:$0xff]
                %784 = vst [vmem:[%s226 + $0x8b0] sm:$0xff] %v783
                %v785 = vld [vmem:[%s225 + $0x1138] sm:$0xff]
                %786 = vst [vmem:[%s226 + $0x8b8] sm:$0xff] %v785
                %v787 = vld [vmem:[%s225 + $0x1180] sm:$0xff]
                %788 = vst [vmem:[%s226 + $0x8c0] sm:$0xff] %v787
                %v789 = vld [vmem:[%s225 + $0x1188] sm:$0xff]
                %790 = vst [vmem:[%s226 + $0x8c8] sm:$0xff] %v789
                %v791 = vld [vmem:[%s225 + $0x1190] sm:$0xff]
                %792 = vst [vmem:[%s226 + $0x8d0] sm:$0xff] %v791
                %v793 = vld [vmem:[%s225 + $0x1198] sm:$0xff]
                %794 = vst [vmem:[%s226 + $0x8d8] sm:$0xff] %v793
                %v795 = vld [vmem:[%s225 + $0x11a0] sm:$0xff]
                %796 = vst [vmem:[%s226 + $0x8e0] sm:$0xff] %v795
                %v797 = vld [vmem:[%s225 + $0x11a8] sm:$0xff]
                %798 = vst [vmem:[%s226 + $0x8e8] sm:$0xff] %v797
                %v799 = vld [vmem:[%s225 + $0x11b0] sm:$0xff]
                %800 = vst [vmem:[%s226 + $0x8f0] sm:$0xff] %v799
                %v801 = vld [vmem:[%s225 + $0x11b8] sm:$0xff]
                %802 = vst [vmem:[%s226 + $0x8f8] sm:$0xff] %v801
              $region53: #{mynet_forward.1} parent=47 // loop_footer
                %s224 = sadd.s32 1, %s220
              $region54: #{mynet_forward.1} parent=47 // loop_footer_branch
                %219 = sbr.rel target = $region50
              $region55: #{mynet_forward.1} parent=47 // loop_exit
                _
            $region48: #{mynet_forward.1} parent=43 // pred_fallthru
              _
            // Predicated region
            $region56: #{mynet_forward.1} parent=43 // pred_check
              _
            $region57: #{mynet_forward.1} parent=43 // pred_check_branch
              %804 = sbr.rel target = $region59
            $region58: #{mynet_forward.1} parent=43 // pred_region
              _
            $region59: #{mynet_forward.1} parent=43 // pred_fallthru
              _
          $region44: #{mynet_forward.1} parent=39 // pred_fallthru
            _
          %805 = vnop
        $region40: #{mynet_forward.1} parent=35 // pred_fallthru
          _
      $region36: #{mynet_forward.1} parent=5 // pred_fallthru
        _
      %p806 = scmp.le.s32.totalorder 1, %s14
      %p807 = scmp.lt.s32.totalorder %s14, 3
      %p808 = pnand %p806, %p807
      %p809 = pneg %p808
      // Predicated region
      $region60: #{mynet_forward.1} parent=5 // pred_check
        _
      $region61: #{mynet_forward.1} parent=5 // pred_check_branch
        %811 = sbr.rel (%p808) target = $region63
      $region62: #{mynet_forward.1} parent=5 // pred_region
        %s812 = ssub.s32 %s14, 1
        %s813 = sand.u32 %s27, 1
        %s814 = sand.u32 %s27, 1
        %s815 = smul.addr %s814, 2304
        %s816 = scalar_lea.vmem [#allocation3], %s815
        // Predicated region
        $region64: #{mynet_forward.1} parent=62 // pred_check
          %p817 = pneg %p40
        $region65: #{mynet_forward.1} parent=62 // pred_check_branch
          %819 = sbr.rel (%p817) target = $region67
        $region66: #{mynet_forward.1} parent=62 // pred_region
          _
        $region67: #{mynet_forward.1} parent=62 // pred_fallthru
          _
        %s820 = sand.u32 %s27, 1
        %s821 = sand.u32 %s27, 1
        %s822 = smul.addr %s821, 2304
        %s823 = scalar_lea.vmem [#allocation3], %s822
        %p824 = pneg %p40
        %p825 = pneg %p37
        %p826 = pneg %p61
        %p827 = pneg %p58
        %p828 = pneg %p82
        %p829 = pneg %p79
        %p830 = pneg %p103
        %p831 = pneg %p100
        %p832 = pneg %p124
        %p833 = pneg %p121
        %p834 = pneg %p145
        %p835 = pneg %p142
        %p836 = pneg %p171
        %p837 = pneg %p168
        %p838 = scmp.lt.s32.totalorder %s19, 1
        %s839 = scalar_select %p838, %s19, 1
        %s840 = scalar_lea.vmem %s6, %s839
        %s841 = smul.u32 8, %s19
        %p842 = scmp.lt.s32.totalorder %s19, 1
        %s843 = scalar_select %p842, %s19, 1
        %s844 = scalar_lea.vmem %s6, %s843
        %v845 = vld [vmem:[%s1] sm:$0xff]
        %v846 = vld [vmem:[%s1 + $0x8] sm:$0xff]
        %v847 = vld [vmem:[%s816] sm:$0xff]
        %v848 = vld [vmem:[%s816 + $0x8] sm:$0xff]
        %v849 = vld [vmem:[%s816 + $0x10] sm:$0xff]
        %v850 = vld [vmem:[%s816 + $0x18] sm:$0xff]
        %v851 = vld [vmem:[%s816 + $0x20] sm:$0xff]
        %v852 = vld [vmem:[%s816 + $0x28] sm:$0xff]
        %v853 = vld [vmem:[%s816 + $0x30] sm:$0xff]
        %v854 = vld [vmem:[%s816 + $0x38] sm:$0xff]
        %v855 = vld [vmem:[%s816 + $0x40] sm:$0xff]
        %v856 = vld [vmem:[%s816 + $0x48] sm:$0xff]
        %v857 = vld [vmem:[%s816 + $0x50] sm:$0xff]
        %v858 = vld [vmem:[%s816 + $0x58] sm:$0xff]
        %v859 = vld [vmem:[%s816 + $0x60] sm:$0xff]
        %v860 = vld [vmem:[%s816 + $0x68] sm:$0xff]
        %v861 = vld [vmem:[%s816 + $0x70] sm:$0xff]
        %v862 = vld [vmem:[%s816 + $0x78] sm:$0xff]
        %v863 = vld [vmem:[%s816 + $0x80] sm:$0xff]
        %v864 = vld [vmem:[%s816 + $0x88] sm:$0xff]
        %v865 = vld [vmem:[%s816 + $0x90] sm:$0xff]
        %v866 = vld [vmem:[%s816 + $0x98] sm:$0xff]
        %v867 = vld [vmem:[%s816 + $0xa0] sm:$0xff]
        %v868 = vld [vmem:[%s816 + $0xa8] sm:$0xff]
        %v869 = vld [vmem:[%s816 + $0xb0] sm:$0xff]
        %v870 = vld [vmem:[%s816 + $0xb8] sm:$0xff]
        %v871 = vld [vmem:[%s816 + $0xc0] sm:$0xff]
        %v872 = vld [vmem:[%s816 + $0xc8] sm:$0xff]
        %v873 = vld [vmem:[%s816 + $0xd0] sm:$0xff]
        %v874 = vld [vmem:[%s816 + $0xd8] sm:$0xff]
        %v875 = vld [vmem:[%s816 + $0xe0] sm:$0xff]
        %v876 = vld [vmem:[%s816 + $0xe8] sm:$0xff]
        %v877 = vld [vmem:[%s816 + $0xf0] sm:$0xff]
        %v878 = vld [vmem:[%s816 + $0xf8] sm:$0xff]
        %vm879 = vcmask 261120
        %v881 = vsel %vm879, %v845, 0
        %v884 = vsel %vm879, %v846, 0
        %886 = vmatprep.subr.mxu0 0.0
        %887 = vmatpush1.msra.mxu0 0.0
        %888 = vmatprep.subr.mxu0 0.0
        %889 = vmatpush1.msra.mxu0 0.0
        %890 = vmatprep.subr.mxu0 0.0
        %891 = vmatpush1.msra.mxu0 0.0
        %892 = vmatprep.subr.mxu0 0.0
        %893 = vmatpush1.msra.mxu0 0.0
        %894 = vmatprep.subr.mxu0 0.0
        %895 = vmatpush1.msra.mxu0 0.0
        %896 = vmatprep.subr.mxu0 0.0
        %897 = vmatpush1.msra.mxu0 0.0
        %898 = vmatprep.subr.mxu0 0.0
        %899 = vmatpush1.msra.mxu0 0.0
        %900 = vmatprep.subr.mxu0 0.0
        %901 = vmatpush1.msra.mxu0 0.0
        %902 = vmatprep.subr.mxu0 0.0
        %903 = vmatpush1.msra.mxu0 0.0
        %904 = vmatprep.subr.mxu0 0.0
        %905 = vmatpush1.msra.mxu0 0.0
        %906 = vmatprep.subr.mxu0 0.0
        %907 = vmatpush1.msra.mxu0 0.0
        %908 = vmatprep.subr.mxu0 0.0
        %909 = vmatpush1.msra.mxu0 0.0
        %910 = vmatprep.subr.mxu0 %v872
        %911 = vmatpush1.msra.mxu0 %v871
        %912 = vmatprep.subr.mxu0 %v864
        %913 = vmatpush1.msra.mxu0 %v863
        %914 = vmatprep.subr.mxu0 %v856
        %915 = vmatpush1.msra.mxu0 %v855
        %916 = vmatprep.subr.mxu0 %v848
        %917 = vmatpush1.msra.mxu0 %v847
        %918 = vmatprep.subr.mxu0 0.0
        %919 = vmatpush2.msra.mxu0 0.0
        %920 = vmatprep.subr.mxu0 0.0
        %921 = vmatpush2.msra.mxu0 0.0
        %922 = vmatprep.subr.mxu0 0.0
        %923 = vmatpush2.msra.mxu0 0.0
        %924 = vmatprep.subr.mxu0 0.0
        %925 = vmatpush2.msra.mxu0 0.0
        %926 = vmatprep.subr.mxu0 0.0
        %927 = vmatpush2.msra.mxu0 0.0
        %928 = vmatprep.subr.mxu0 0.0
        %929 = vmatpush2.msra.mxu0 0.0
        %930 = vmatprep.subr.mxu0 0.0
        %931 = vmatpush2.msra.mxu0 0.0
        %932 = vmatprep.subr.mxu0 0.0
        %933 = vmatpush2.msra.mxu0 0.0
        %934 = vmatprep.subr.mxu0 0.0
        %935 = vmatpush2.msra.mxu0 0.0
        %936 = vmatprep.subr.mxu0 0.0
        %937 = vmatpush2.msra.mxu0 0.0
        %938 = vmatprep.subr.mxu0 0.0
        %939 = vmatpush2.msra.mxu0 0.0
        %940 = vmatprep.subr.mxu0 0.0
        %941 = vmatpush2.msra.mxu0 0.0
        %942 = vmatprep.subr.mxu0 0.0
        %943 = vmatpush2.msra.mxu0 0.0
        %944 = vmatprep.subr.mxu0 0.0
        %945 = vmatpush2.msra.mxu0 0.0
        %946 = vmatprep.subr.mxu0 0.0
        %947 = vmatpush2.msra.mxu0 0.0
        %948 = vmatprep.subr.mxu0 0.0
        %949 = vmatpush2.msra.mxu0 0.0
        %950 = vmatprep.mubr.f32.mxu0 0.0
        %951 = vmatmul.mubr.f32.gmra.mxu0 %v881
        %v952 = vpop.f32.mrf.mxu0
        %v953 = vadd.f32 0.0, %v952
        %v954 = vpop.f32.mrf.mxu0
        %v955 = vadd.f32 0.0, %v954
        %956 = vmatprep.mubr.f32.mxu0 0.0
        %957 = vmatmul.mubr.f32.gmra.mxu0 %v884
        %v958 = vpop.f32.mrf.mxu0
        %v959 = vadd.f32 0.0, %v958
        %v960 = vpop.f32.mrf.mxu0
        %v961 = vadd.f32 0.0, %v960
        %962 = vdwg.mxu0
        %963 = vmatprep.subr.mxu0 0.0
        %964 = vmatpush1.msra.mxu0 0.0
        %965 = vmatprep.subr.mxu0 0.0
        %966 = vmatpush1.msra.mxu0 0.0
        %967 = vmatprep.subr.mxu0 0.0
        %968 = vmatpush1.msra.mxu0 0.0
        %969 = vmatprep.subr.mxu0 0.0
        %970 = vmatpush1.msra.mxu0 0.0
        %971 = vmatprep.subr.mxu0 0.0
        %972 = vmatpush1.msra.mxu0 0.0
        %973 = vmatprep.subr.mxu0 0.0
        %974 = vmatpush1.msra.mxu0 0.0
        %975 = vmatprep.subr.mxu0 0.0
        %976 = vmatpush1.msra.mxu0 0.0
        %977 = vmatprep.subr.mxu0 0.0
        %978 = vmatpush1.msra.mxu0 0.0
        %979 = vmatprep.subr.mxu0 0.0
        %980 = vmatpush1.msra.mxu0 0.0
        %981 = vmatprep.subr.mxu0 0.0
        %982 = vmatpush1.msra.mxu0 0.0
        %983 = vmatprep.subr.mxu0 0.0
        %984 = vmatpush1.msra.mxu0 0.0
        %985 = vmatprep.subr.mxu0 0.0
        %986 = vmatpush1.msra.mxu0 0.0
        %987 = vmatprep.subr.mxu0 %v874
        %988 = vmatpush1.msra.mxu0 %v873
        %989 = vmatprep.subr.mxu0 %v866
        %990 = vmatpush1.msra.mxu0 %v865
        %991 = vmatprep.subr.mxu0 %v858
        %992 = vmatpush1.msra.mxu0 %v857
        %993 = vmatprep.subr.mxu0 %v850
        %994 = vmatpush1.msra.mxu0 %v849
        %995 = vmatprep.subr.mxu0 0.0
        %996 = vmatpush2.msra.mxu0 0.0
        %997 = vmatprep.subr.mxu0 0.0
        %998 = vmatpush2.msra.mxu0 0.0
        %999 = vmatprep.subr.mxu0 0.0
        %1000 = vmatpush2.msra.mxu0 0.0
        %1001 = vmatprep.subr.mxu0 0.0
        %1002 = vmatpush2.msra.mxu0 0.0
        %1003 = vmatprep.subr.mxu0 0.0
        %1004 = vmatpush2.msra.mxu0 0.0
        %1005 = vmatprep.subr.mxu0 0.0
        %1006 = vmatpush2.msra.mxu0 0.0
        %1007 = vmatprep.subr.mxu0 0.0
        %1008 = vmatpush2.msra.mxu0 0.0
        %1009 = vmatprep.subr.mxu0 0.0
        %1010 = vmatpush2.msra.mxu0 0.0
        %1011 = vmatprep.subr.mxu0 0.0
        %1012 = vmatpush2.msra.mxu0 0.0
        %1013 = vmatprep.subr.mxu0 0.0
        %1014 = vmatpush2.msra.mxu0 0.0
        %1015 = vmatprep.subr.mxu0 0.0
        %1016 = vmatpush2.msra.mxu0 0.0
        %1017 = vmatprep.subr.mxu0 0.0
        %1018 = vmatpush2.msra.mxu0 0.0
        %1019 = vmatprep.subr.mxu0 0.0
        %1020 = vmatpush2.msra.mxu0 0.0
        %1021 = vmatprep.subr.mxu0 0.0
        %1022 = vmatpush2.msra.mxu0 0.0
        %1023 = vmatprep.subr.mxu0 0.0
        %1024 = vmatpush2.msra.mxu0 0.0
        %1025 = vmatprep.subr.mxu0 0.0
        %1026 = vmatpush2.msra.mxu0 0.0
        %1027 = vmatprep.mubr.f32.mxu0 0.0
        %1028 = vmatmul.mubr.f32.gmra.mxu0 %v881
        %v1029 = vpop.f32.mrf.mxu0
        %v1030 = vadd.f32 0.0, %v1029
        %v1031 = vpop.f32.mrf.mxu0
        %v1032 = vadd.f32 0.0, %v1031
        %1033 = vmatprep.mubr.f32.mxu0 0.0
        %1034 = vmatmul.mubr.f32.gmra.mxu0 %v884
        %v1035 = vpop.f32.mrf.mxu0
        %v1036 = vadd.f32 0.0, %v1035
        %v1037 = vpop.f32.mrf.mxu0
        %v1038 = vadd.f32 0.0, %v1037
        %1039 = vdwg.mxu0
        %1040 = vmatprep.subr.mxu0 0.0
        %1041 = vmatpush1.msra.mxu0 0.0
        %1042 = vmatprep.subr.mxu0 0.0
        %1043 = vmatpush1.msra.mxu0 0.0
        %1044 = vmatprep.subr.mxu0 0.0
        %1045 = vmatpush1.msra.mxu0 0.0
        %1046 = vmatprep.subr.mxu0 0.0
        %1047 = vmatpush1.msra.mxu0 0.0
        %1048 = vmatprep.subr.mxu0 0.0
        %1049 = vmatpush1.msra.mxu0 0.0
        %1050 = vmatprep.subr.mxu0 0.0
        %1051 = vmatpush1.msra.mxu0 0.0
        %1052 = vmatprep.subr.mxu0 0.0
        %1053 = vmatpush1.msra.mxu0 0.0
        %1054 = vmatprep.subr.mxu0 0.0
        %1055 = vmatpush1.msra.mxu0 0.0
        %1056 = vmatprep.subr.mxu0 0.0
        %1057 = vmatpush1.msra.mxu0 0.0
        %1058 = vmatprep.subr.mxu0 0.0
        %1059 = vmatpush1.msra.mxu0 0.0
        %1060 = vmatprep.subr.mxu0 0.0
        %1061 = vmatpush1.msra.mxu0 0.0
        %1062 = vmatprep.subr.mxu0 0.0
        %1063 = vmatpush1.msra.mxu0 0.0
        %1064 = vmatprep.subr.mxu0 %v876
        %1065 = vmatpush1.msra.mxu0 %v875
        %1066 = vmatprep.subr.mxu0 %v868
        %1067 = vmatpush1.msra.mxu0 %v867
        %1068 = vmatprep.subr.mxu0 %v860
        %1069 = vmatpush1.msra.mxu0 %v859
        %1070 = vmatprep.subr.mxu0 %v852
        %1071 = vmatpush1.msra.mxu0 %v851
        %1072 = vmatprep.subr.mxu0 0.0
        %1073 = vmatpush2.msra.mxu0 0.0
        %1074 = vmatprep.subr.mxu0 0.0
        %1075 = vmatpush2.msra.mxu0 0.0
        %1076 = vmatprep.subr.mxu0 0.0
        %1077 = vmatpush2.msra.mxu0 0.0
        %1078 = vmatprep.subr.mxu0 0.0
        %1079 = vmatpush2.msra.mxu0 0.0
        %1080 = vmatprep.subr.mxu0 0.0
        %1081 = vmatpush2.msra.mxu0 0.0
        %1082 = vmatprep.subr.mxu0 0.0
        %1083 = vmatpush2.msra.mxu0 0.0
        %1084 = vmatprep.subr.mxu0 0.0
        %1085 = vmatpush2.msra.mxu0 0.0
        %1086 = vmatprep.subr.mxu0 0.0
        %1087 = vmatpush2.msra.mxu0 0.0
        %1088 = vmatprep.subr.mxu0 0.0
        %1089 = vmatpush2.msra.mxu0 0.0
        %1090 = vmatprep.subr.mxu0 0.0
        %1091 = vmatpush2.msra.mxu0 0.0
        %1092 = vmatprep.subr.mxu0 0.0
        %1093 = vmatpush2.msra.mxu0 0.0
        %1094 = vmatprep.subr.mxu0 0.0
        %1095 = vmatpush2.msra.mxu0 0.0
        %1096 = vmatprep.subr.mxu0 0.0
        %1097 = vmatpush2.msra.mxu0 0.0
        %1098 = vmatprep.subr.mxu0 0.0
        %1099 = vmatpush2.msra.mxu0 0.0
        %1100 = vmatprep.subr.mxu0 0.0
        %1101 = vmatpush2.msra.mxu0 0.0
        %1102 = vmatprep.subr.mxu0 0.0
        %1103 = vmatpush2.msra.mxu0 0.0
        %1104 = vmatprep.mubr.f32.mxu0 0.0
        %1105 = vmatmul.mubr.f32.gmra.mxu0 %v881
        %v1106 = vpop.f32.mrf.mxu0
        %v1107 = vadd.f32 0.0, %v1106
        %v1108 = vpop.f32.mrf.mxu0
        %v1109 = vadd.f32 0.0, %v1108
        %1110 = vmatprep.mubr.f32.mxu0 0.0
        %1111 = vmatmul.mubr.f32.gmra.mxu0 %v884
        %v1112 = vpop.f32.mrf.mxu0
        %v1113 = vadd.f32 0.0, %v1112
        %v1114 = vpop.f32.mrf.mxu0
        %v1115 = vadd.f32 0.0, %v1114
        %1116 = vdwg.mxu0
        %1117 = vmatprep.subr.mxu0 0.0
        %1118 = vmatpush1.msra.mxu0 0.0
        %1119 = vmatprep.subr.mxu0 0.0
        %1120 = vmatpush1.msra.mxu0 0.0
        %1121 = vmatprep.subr.mxu0 0.0
        %1122 = vmatpush1.msra.mxu0 0.0
        %1123 = vmatprep.subr.mxu0 0.0
        %1124 = vmatpush1.msra.mxu0 0.0
        %1125 = vmatprep.subr.mxu0 0.0
        %1126 = vmatpush1.msra.mxu0 0.0
        %1127 = vmatprep.subr.mxu0 0.0
        %1128 = vmatpush1.msra.mxu0 0.0
        %1129 = vmatprep.subr.mxu0 0.0
        %1130 = vmatpush1.msra.mxu0 0.0
        %1131 = vmatprep.subr.mxu0 0.0
        %1132 = vmatpush1.msra.mxu0 0.0
        %1133 = vmatprep.subr.mxu0 0.0
        %1134 = vmatpush1.msra.mxu0 0.0
        %1135 = vmatprep.subr.mxu0 0.0
        %1136 = vmatpush1.msra.mxu0 0.0
        %1137 = vmatprep.subr.mxu0 0.0
        %1138 = vmatpush1.msra.mxu0 0.0
        %1139 = vmatprep.subr.mxu0 0.0
        %1140 = vmatpush1.msra.mxu0 0.0
        %1141 = vmatprep.subr.mxu0 %v878
        %1142 = vmatpush1.msra.mxu0 %v877
        %1143 = vmatprep.subr.mxu0 %v870
        %1144 = vmatpush1.msra.mxu0 %v869
        %1145 = vmatprep.subr.mxu0 %v862
        %1146 = vmatpush1.msra.mxu0 %v861
        %1147 = vmatprep.subr.mxu0 %v854
        %1148 = vmatpush1.msra.mxu0 %v853
        %1149 = vmatprep.subr.mxu0 0.0
        %1150 = vmatpush2.msra.mxu0 0.0
        %1151 = vmatprep.subr.mxu0 0.0
        %1152 = vmatpush2.msra.mxu0 0.0
        %1153 = vmatprep.subr.mxu0 0.0
        %1154 = vmatpush2.msra.mxu0 0.0
        %1155 = vmatprep.subr.mxu0 0.0
        %1156 = vmatpush2.msra.mxu0 0.0
        %1157 = vmatprep.subr.mxu0 0.0
        %1158 = vmatpush2.msra.mxu0 0.0
        %1159 = vmatprep.subr.mxu0 0.0
        %1160 = vmatpush2.msra.mxu0 0.0
        %1161 = vmatprep.subr.mxu0 0.0
        %1162 = vmatpush2.msra.mxu0 0.0
        %1163 = vmatprep.subr.mxu0 0.0
        %1164 = vmatpush2.msra.mxu0 0.0
        %1165 = vmatprep.subr.mxu0 0.0
        %1166 = vmatpush2.msra.mxu0 0.0
        %1167 = vmatprep.subr.mxu0 0.0
        %1168 = vmatpush2.msra.mxu0 0.0
        %1169 = vmatprep.subr.mxu0 0.0
        %1170 = vmatpush2.msra.mxu0 0.0
        %1171 = vmatprep.subr.mxu0 0.0
        %1172 = vmatpush2.msra.mxu0 0.0
        %1173 = vmatprep.subr.mxu0 0.0
        %1174 = vmatpush2.msra.mxu0 0.0
        %1175 = vmatprep.subr.mxu0 0.0
        %1176 = vmatpush2.msra.mxu0 0.0
        %1177 = vmatprep.subr.mxu0 0.0
        %1178 = vmatpush2.msra.mxu0 0.0
        %1179 = vmatprep.subr.mxu0 0.0
        %1180 = vmatpush2.msra.mxu0 0.0
        %1181 = vmatprep.mubr.f32.mxu0 0.0
        %1182 = vmatmul.mubr.f32.gmra.mxu0 %v881
        %v1183 = vpop.f32.mrf.mxu0
        %v1184 = vadd.f32 0.0, %v1183
        %v1185 = vpop.f32.mrf.mxu0
        %v1186 = vadd.f32 0.0, %v1185
        %1187 = vmatprep.mubr.f32.mxu0 0.0
        %1188 = vmatmul.mubr.f32.gmra.mxu0 %v884
        %v1189 = vpop.f32.mrf.mxu0
        %v1190 = vadd.f32 0.0, %v1189
        %v1191 = vpop.f32.mrf.mxu0
        %v1192 = vadd.f32 0.0, %v1191
        %1193 = vdwg.mxu0
        %s1194 = scalar_lea.vmem %s816, 256 [#allocation3]
        %v1195 = vld [vmem:[%s1194] sm:$0xff]
        %v1196 = vld [vmem:[%s1194 + $0x8] sm:$0xff]
        %v1197 = vld [vmem:[%s1194 + $0x10] sm:$0xff]
        %v1198 = vld [vmem:[%s1194 + $0x18] sm:$0xff]
        %v1199 = vld [vmem:[%s1194 + $0x20] sm:$0xff]
        %v1200 = vld [vmem:[%s1194 + $0x28] sm:$0xff]
        %v1201 = vld [vmem:[%s1194 + $0x30] sm:$0xff]
        %v1202 = vld [vmem:[%s1194 + $0x38] sm:$0xff]
        %v1203 = vld [vmem:[%s1194 + $0x40] sm:$0xff]
        %v1204 = vld [vmem:[%s1194 + $0x48] sm:$0xff]
        %v1205 = vld [vmem:[%s1194 + $0x50] sm:$0xff]
        %v1206 = vld [vmem:[%s1194 + $0x58] sm:$0xff]
        %v1207 = vld [vmem:[%s1194 + $0x60] sm:$0xff]
        %v1208 = vld [vmem:[%s1194 + $0x68] sm:$0xff]
        %v1209 = vld [vmem:[%s1194 + $0x70] sm:$0xff]
        %v1210 = vld [vmem:[%s1194 + $0x78] sm:$0xff]
        %v1211 = vld [vmem:[%s1194 + $0x80] sm:$0xff]
        %v1212 = vld [vmem:[%s1194 + $0x88] sm:$0xff]
        %v1213 = vld [vmem:[%s1194 + $0x90] sm:$0xff]
        %v1214 = vld [vmem:[%s1194 + $0x98] sm:$0xff]
        %v1215 = vld [vmem:[%s1194 + $0xa0] sm:$0xff]
        %v1216 = vld [vmem:[%s1194 + $0xa8] sm:$0xff]
        %v1217 = vld [vmem:[%s1194 + $0xb0] sm:$0xff]
        %v1218 = vld [vmem:[%s1194 + $0xb8] sm:$0xff]
        %v1219 = vld [vmem:[%s1194 + $0xc0] sm:$0xff]
        %v1220 = vld [vmem:[%s1194 + $0xc8] sm:$0xff]
        %v1221 = vld [vmem:[%s1194 + $0xd0] sm:$0xff]
        %v1222 = vld [vmem:[%s1194 + $0xd8] sm:$0xff]
        %v1223 = vld [vmem:[%s1194 + $0xe0] sm:$0xff]
        %v1224 = vld [vmem:[%s1194 + $0xe8] sm:$0xff]
        %v1225 = vld [vmem:[%s1194 + $0xf0] sm:$0xff]
        %v1226 = vld [vmem:[%s1194 + $0xf8] sm:$0xff]
        %1227 = vmatprep.subr.mxu0 0.0
        %1228 = vmatpush1.msra.mxu0 0.0
        %1229 = vmatprep.subr.mxu0 0.0
        %1230 = vmatpush1.msra.mxu0 0.0
        %1231 = vmatprep.subr.mxu0 0.0
        %1232 = vmatpush1.msra.mxu0 0.0
        %1233 = vmatprep.subr.mxu0 0.0
        %1234 = vmatpush1.msra.mxu0 0.0
        %1235 = vmatprep.subr.mxu0 0.0
        %1236 = vmatpush1.msra.mxu0 0.0
        %1237 = vmatprep.subr.mxu0 0.0
        %1238 = vmatpush1.msra.mxu0 0.0
        %1239 = vmatprep.subr.mxu0 0.0
        %1240 = vmatpush1.msra.mxu0 0.0
        %1241 = vmatprep.subr.mxu0 0.0
        %1242 = vmatpush1.msra.mxu0 0.0
        %1243 = vmatprep.subr.mxu0 0.0
        %1244 = vmatpush1.msra.mxu0 0.0
        %1245 = vmatprep.subr.mxu0 0.0
        %1246 = vmatpush1.msra.mxu0 0.0
        %1247 = vmatprep.subr.mxu0 0.0
        %1248 = vmatpush1.msra.mxu0 0.0
        %1249 = vmatprep.subr.mxu0 0.0
        %1250 = vmatpush1.msra.mxu0 0.0
        %1251 = vmatprep.subr.mxu0 %v1220
        %1252 = vmatpush1.msra.mxu0 %v1219
        %1253 = vmatprep.subr.mxu0 %v1212
        %1254 = vmatpush1.msra.mxu0 %v1211
        %1255 = vmatprep.subr.mxu0 %v1204
        %1256 = vmatpush1.msra.mxu0 %v1203
        %1257 = vmatprep.subr.mxu0 %v1196
        %1258 = vmatpush1.msra.mxu0 %v1195
        %1259 = vmatprep.subr.mxu0 0.0
        %1260 = vmatpush2.msra.mxu0 0.0
        %1261 = vmatprep.subr.mxu0 0.0
        %1262 = vmatpush2.msra.mxu0 0.0
        %1263 = vmatprep.subr.mxu0 0.0
        %1264 = vmatpush2.msra.mxu0 0.0
        %1265 = vmatprep.subr.mxu0 0.0
        %1266 = vmatpush2.msra.mxu0 0.0
        %1267 = vmatprep.subr.mxu0 0.0
        %1268 = vmatpush2.msra.mxu0 0.0
        %1269 = vmatprep.subr.mxu0 0.0
        %1270 = vmatpush2.msra.mxu0 0.0
        %1271 = vmatprep.subr.mxu0 0.0
        %1272 = vmatpush2.msra.mxu0 0.0
        %1273 = vmatprep.subr.mxu0 0.0
        %1274 = vmatpush2.msra.mxu0 0.0
        %1275 = vmatprep.subr.mxu0 0.0
        %1276 = vmatpush2.msra.mxu0 0.0
        %1277 = vmatprep.subr.mxu0 0.0
        %1278 = vmatpush2.msra.mxu0 0.0
        %1279 = vmatprep.subr.mxu0 0.0
        %1280 = vmatpush2.msra.mxu0 0.0
        %1281 = vmatprep.subr.mxu0 0.0
        %1282 = vmatpush2.msra.mxu0 0.0
        %1283 = vmatprep.subr.mxu0 0.0
        %1284 = vmatpush2.msra.mxu0 0.0
        %1285 = vmatprep.subr.mxu0 0.0
        %1286 = vmatpush2.msra.mxu0 0.0
        %1287 = vmatprep.subr.mxu0 0.0
        %1288 = vmatpush2.msra.mxu0 0.0
        %1289 = vmatprep.subr.mxu0 0.0
        %1290 = vmatpush2.msra.mxu0 0.0
        %1291 = vmatprep.mubr.f32.mxu0 0.0
        %1292 = vmatmul.mubr.f32.gmra.mxu0 %v881
        %v1293 = vpop.f32.mrf.mxu0
        %v1294 = vadd.f32 0.0, %v1293
        %v1295 = vpop.f32.mrf.mxu0
        %v1296 = vadd.f32 0.0, %v1295
        %1297 = vmatprep.mubr.f32.mxu0 0.0
        %1298 = vmatmul.mubr.f32.gmra.mxu0 %v884
        %v1299 = vpop.f32.mrf.mxu0
        %v1300 = vadd.f32 0.0, %v1299
        %v1301 = vpop.f32.mrf.mxu0
        %v1302 = vadd.f32 0.0, %v1301
        %1303 = vdwg.mxu0
        %1304 = vmatprep.subr.mxu0 0.0
        %1305 = vmatpush1.msra.mxu0 0.0
        %1306 = vmatprep.subr.mxu0 0.0
        %1307 = vmatpush1.msra.mxu0 0.0
        %1308 = vmatprep.subr.mxu0 0.0
        %1309 = vmatpush1.msra.mxu0 0.0
        %1310 = vmatprep.subr.mxu0 0.0
        %1311 = vmatpush1.msra.mxu0 0.0
        %1312 = vmatprep.subr.mxu0 0.0
        %1313 = vmatpush1.msra.mxu0 0.0
        %1314 = vmatprep.subr.mxu0 0.0
        %1315 = vmatpush1.msra.mxu0 0.0
        %1316 = vmatprep.subr.mxu0 0.0
        %1317 = vmatpush1.msra.mxu0 0.0
        %1318 = vmatprep.subr.mxu0 0.0
        %1319 = vmatpush1.msra.mxu0 0.0
        %1320 = vmatprep.subr.mxu0 0.0
        %1321 = vmatpush1.msra.mxu0 0.0
        %1322 = vmatprep.subr.mxu0 0.0
        %1323 = vmatpush1.msra.mxu0 0.0
        %1324 = vmatprep.subr.mxu0 0.0
        %1325 = vmatpush1.msra.mxu0 0.0
        %1326 = vmatprep.subr.mxu0 0.0
        %1327 = vmatpush1.msra.mxu0 0.0
        %1328 = vmatprep.subr.mxu0 %v1222
        %1329 = vmatpush1.msra.mxu0 %v1221
        %1330 = vmatprep.subr.mxu0 %v1214
        %1331 = vmatpush1.msra.mxu0 %v1213
        %1332 = vmatprep.subr.mxu0 %v1206
        %1333 = vmatpush1.msra.mxu0 %v1205
        %1334 = vmatprep.subr.mxu0 %v1198
        %1335 = vmatpush1.msra.mxu0 %v1197
        %1336 = vmatprep.subr.mxu0 0.0
        %1337 = vmatpush2.msra.mxu0 0.0
        %1338 = vmatprep.subr.mxu0 0.0
        %1339 = vmatpush2.msra.mxu0 0.0
        %1340 = vmatprep.subr.mxu0 0.0
        %1341 = vmatpush2.msra.mxu0 0.0
        %1342 = vmatprep.subr.mxu0 0.0
        %1343 = vmatpush2.msra.mxu0 0.0
        %1344 = vmatprep.subr.mxu0 0.0
        %1345 = vmatpush2.msra.mxu0 0.0
        %1346 = vmatprep.subr.mxu0 0.0
        %1347 = vmatpush2.msra.mxu0 0.0
        %1348 = vmatprep.subr.mxu0 0.0
        %1349 = vmatpush2.msra.mxu0 0.0
        %1350 = vmatprep.subr.mxu0 0.0
        %1351 = vmatpush2.msra.mxu0 0.0
        %1352 = vmatprep.subr.mxu0 0.0
        %1353 = vmatpush2.msra.mxu0 0.0
        %1354 = vmatprep.subr.mxu0 0.0
        %1355 = vmatpush2.msra.mxu0 0.0
        %1356 = vmatprep.subr.mxu0 0.0
        %1357 = vmatpush2.msra.mxu0 0.0
        %1358 = vmatprep.subr.mxu0 0.0
        %1359 = vmatpush2.msra.mxu0 0.0
        %1360 = vmatprep.subr.mxu0 0.0
        %1361 = vmatpush2.msra.mxu0 0.0
        %1362 = vmatprep.subr.mxu0 0.0
        %1363 = vmatpush2.msra.mxu0 0.0
        %1364 = vmatprep.subr.mxu0 0.0
        %1365 = vmatpush2.msra.mxu0 0.0
        %1366 = vmatprep.subr.mxu0 0.0
        %1367 = vmatpush2.msra.mxu0 0.0
        %1368 = vmatprep.mubr.f32.mxu0 0.0
        %1369 = vmatmul.mubr.f32.gmra.mxu0 %v881
        %v1370 = vpop.f32.mrf.mxu0
        %v1371 = vadd.f32 0.0, %v1370
        %v1372 = vpop.f32.mrf.mxu0
        %v1373 = vadd.f32 0.0, %v1372
        %1374 = vmatprep.mubr.f32.mxu0 0.0
        %1375 = vmatmul.mubr.f32.gmra.mxu0 %v884
        %v1376 = vpop.f32.mrf.mxu0
        %v1377 = vadd.f32 0.0, %v1376
        %v1378 = vpop.f32.mrf.mxu0
        %v1379 = vadd.f32 0.0, %v1378
        %1380 = vdwg.mxu0
        %1381 = vmatprep.subr.mxu0 0.0
        %1382 = vmatpush1.msra.mxu0 0.0
        %1383 = vmatprep.subr.mxu0 0.0
        %1384 = vmatpush1.msra.mxu0 0.0
        %1385 = vmatprep.subr.mxu0 0.0
        %1386 = vmatpush1.msra.mxu0 0.0
        %1387 = vmatprep.subr.mxu0 0.0
        %1388 = vmatpush1.msra.mxu0 0.0
        %1389 = vmatprep.subr.mxu0 0.0
        %1390 = vmatpush1.msra.mxu0 0.0
        %1391 = vmatprep.subr.mxu0 0.0
        %1392 = vmatpush1.msra.mxu0 0.0
        %1393 = vmatprep.subr.mxu0 0.0
        %1394 = vmatpush1.msra.mxu0 0.0
        %1395 = vmatprep.subr.mxu0 0.0
        %1396 = vmatpush1.msra.mxu0 0.0
        %1397 = vmatprep.subr.mxu0 0.0
        %1398 = vmatpush1.msra.mxu0 0.0
        %1399 = vmatprep.subr.mxu0 0.0
        %1400 = vmatpush1.msra.mxu0 0.0
        %1401 = vmatprep.subr.mxu0 0.0
        %1402 = vmatpush1.msra.mxu0 0.0
        %1403 = vmatprep.subr.mxu0 0.0
        %1404 = vmatpush1.msra.mxu0 0.0
        %1405 = vmatprep.subr.mxu0 %v1224
        %1406 = vmatpush1.msra.mxu0 %v1223
        %1407 = vmatprep.subr.mxu0 %v1216
        %1408 = vmatpush1.msra.mxu0 %v1215
        %1409 = vmatprep.subr.mxu0 %v1208
        %1410 = vmatpush1.msra.mxu0 %v1207
        %1411 = vmatprep.subr.mxu0 %v1200
        %1412 = vmatpush1.msra.mxu0 %v1199
        %1413 = vmatprep.subr.mxu0 0.0
        %1414 = vmatpush2.msra.mxu0 0.0
        %1415 = vmatprep.subr.mxu0 0.0
        %1416 = vmatpush2.msra.mxu0 0.0
        %1417 = vmatprep.subr.mxu0 0.0
        %1418 = vmatpush2.msra.mxu0 0.0
        %1419 = vmatprep.subr.mxu0 0.0
        %1420 = vmatpush2.msra.mxu0 0.0
        %1421 = vmatprep.subr.mxu0 0.0
        %1422 = vmatpush2.msra.mxu0 0.0
        %1423 = vmatprep.subr.mxu0 0.0
        %1424 = vmatpush2.msra.mxu0 0.0
        %1425 = vmatprep.subr.mxu0 0.0
        %1426 = vmatpush2.msra.mxu0 0.0
        %1427 = vmatprep.subr.mxu0 0.0
        %1428 = vmatpush2.msra.mxu0 0.0
        %1429 = vmatprep.subr.mxu0 0.0
        %1430 = vmatpush2.msra.mxu0 0.0
        %1431 = vmatprep.subr.mxu0 0.0
        %1432 = vmatpush2.msra.mxu0 0.0
        %1433 = vmatprep.subr.mxu0 0.0
        %1434 = vmatpush2.msra.mxu0 0.0
        %1435 = vmatprep.subr.mxu0 0.0
        %1436 = vmatpush2.msra.mxu0 0.0
        %1437 = vmatprep.subr.mxu0 0.0
        %1438 = vmatpush2.msra.mxu0 0.0
        %1439 = vmatprep.subr.mxu0 0.0
        %1440 = vmatpush2.msra.mxu0 0.0
        %1441 = vmatprep.subr.mxu0 0.0
        %1442 = vmatpush2.msra.mxu0 0.0
        %1443 = vmatprep.subr.mxu0 0.0
        %1444 = vmatpush2.msra.mxu0 0.0
        %1445 = vmatprep.mubr.f32.mxu0 0.0
        %1446 = vmatmul.mubr.f32.gmra.mxu0 %v881
        %v1447 = vpop.f32.mrf.mxu0
        %v1448 = vadd.f32 0.0, %v1447
        %v1449 = vpop.f32.mrf.mxu0
        %v1450 = vadd.f32 0.0, %v1449
        %1451 = vmatprep.mubr.f32.mxu0 0.0
        %1452 = vmatmul.mubr.f32.gmra.mxu0 %v884
        %v1453 = vpop.f32.mrf.mxu0
        %v1454 = vadd.f32 0.0, %v1453
        %v1455 = vpop.f32.mrf.mxu0
        %v1456 = vadd.f32 0.0, %v1455
        %1457 = vdwg.mxu0
        %1458 = vmatprep.subr.mxu0 0.0
        %1459 = vmatpush1.msra.mxu0 0.0
        %1460 = vmatprep.subr.mxu0 0.0
        %1461 = vmatpush1.msra.mxu0 0.0
        %1462 = vmatprep.subr.mxu0 0.0
        %1463 = vmatpush1.msra.mxu0 0.0
        %1464 = vmatprep.subr.mxu0 0.0
        %1465 = vmatpush1.msra.mxu0 0.0
        %1466 = vmatprep.subr.mxu0 0.0
        %1467 = vmatpush1.msra.mxu0 0.0
        %1468 = vmatprep.subr.mxu0 0.0
        %1469 = vmatpush1.msra.mxu0 0.0
        %1470 = vmatprep.subr.mxu0 0.0
        %1471 = vmatpush1.msra.mxu0 0.0
        %1472 = vmatprep.subr.mxu0 0.0
        %1473 = vmatpush1.msra.mxu0 0.0
        %1474 = vmatprep.subr.mxu0 0.0
        %1475 = vmatpush1.msra.mxu0 0.0
        %1476 = vmatprep.subr.mxu0 0.0
        %1477 = vmatpush1.msra.mxu0 0.0
        %1478 = vmatprep.subr.mxu0 0.0
        %1479 = vmatpush1.msra.mxu0 0.0
        %1480 = vmatprep.subr.mxu0 0.0
        %1481 = vmatpush1.msra.mxu0 0.0
        %1482 = vmatprep.subr.mxu0 %v1226
        %1483 = vmatpush1.msra.mxu0 %v1225
        %1484 = vmatprep.subr.mxu0 %v1218
        %1485 = vmatpush1.msra.mxu0 %v1217
        %1486 = vmatprep.subr.mxu0 %v1210
        %1487 = vmatpush1.msra.mxu0 %v1209
        %1488 = vmatprep.subr.mxu0 %v1202
        %1489 = vmatpush1.msra.mxu0 %v1201
        %1490 = vmatprep.subr.mxu0 0.0
        %1491 = vmatpush2.msra.mxu0 0.0
        %1492 = vmatprep.subr.mxu0 0.0
        %1493 = vmatpush2.msra.mxu0 0.0
        %1494 = vmatprep.subr.mxu0 0.0
        %1495 = vmatpush2.msra.mxu0 0.0
        %1496 = vmatprep.subr.mxu0 0.0
        %1497 = vmatpush2.msra.mxu0 0.0
        %1498 = vmatprep.subr.mxu0 0.0
        %1499 = vmatpush2.msra.mxu0 0.0
        %1500 = vmatprep.subr.mxu0 0.0
        %1501 = vmatpush2.msra.mxu0 0.0
        %1502 = vmatprep.subr.mxu0 0.0
        %1503 = vmatpush2.msra.mxu0 0.0
        %1504 = vmatprep.subr.mxu0 0.0
        %1505 = vmatpush2.msra.mxu0 0.0
        %1506 = vmatprep.subr.mxu0 0.0
        %1507 = vmatpush2.msra.mxu0 0.0
        %1508 = vmatprep.subr.mxu0 0.0
        %1509 = vmatpush2.msra.mxu0 0.0
        %1510 = vmatprep.subr.mxu0 0.0
        %1511 = vmatpush2.msra.mxu0 0.0
        %1512 = vmatprep.subr.mxu0 0.0
        %1513 = vmatpush2.msra.mxu0 0.0
        %1514 = vmatprep.subr.mxu0 0.0
        %1515 = vmatpush2.msra.mxu0 0.0
        %1516 = vmatprep.subr.mxu0 0.0
        %1517 = vmatpush2.msra.mxu0 0.0
        %1518 = vmatprep.subr.mxu0 0.0
        %1519 = vmatpush2.msra.mxu0 0.0
        %1520 = vmatprep.subr.mxu0 0.0
        %1521 = vmatpush2.msra.mxu0 0.0
        %1522 = vmatprep.mubr.f32.mxu0 0.0
        %1523 = vmatmul.mubr.f32.gmra.mxu0 %v881
        %v1524 = vpop.f32.mrf.mxu0
        %v1525 = vadd.f32 0.0, %v1524
        %v1526 = vpop.f32.mrf.mxu0
        %v1527 = vadd.f32 0.0, %v1526
        %1528 = vmatprep.mubr.f32.mxu0 0.0
        %1529 = vmatmul.mubr.f32.gmra.mxu0 %v884
        %v1530 = vpop.f32.mrf.mxu0
        %v1531 = vadd.f32 0.0, %v1530
        %v1532 = vpop.f32.mrf.mxu0
        %v1533 = vadd.f32 0.0, %v1532
        %1534 = vdwg.mxu0
        %v1535 = vmax.f32 %v953, %v1294
        %v1536 = vmax.f32 %v955, %v1296
        %v1537 = vmax.f32 %v1030, %v1371
        %v1538 = vmax.f32 %v1032, %v1373
        %v1539 = vmax.f32 %v1107, %v1448
        %v1540 = vmax.f32 %v1109, %v1450
        %v1541 = vmax.f32 %v1184, %v1525
        %v1542 = vmax.f32 %v1186, %v1527
        %v1543 = vmax.f32 %v959, %v1300
        %v1544 = vmax.f32 %v961, %v1302
        %v1545 = vmax.f32 %v1036, %v1377
        %v1546 = vmax.f32 %v1038, %v1379
        %v1547 = vmax.f32 %v1113, %v1454
        %v1548 = vmax.f32 %v1115, %v1456
        %v1549 = vmax.f32 %v1190, %v1531
        %v1550 = vmax.f32 %v1192, %v1533
        %s1551 = scalar_lea.vmem %s816, 512 [#allocation3]
        %v1552 = vld [vmem:[%s1551] sm:$0xff]
        %v1553 = vld [vmem:[%s1551 + $0x8] sm:$0xff]
        %v1554 = vld [vmem:[%s1551 + $0x10] sm:$0xff]
        %v1555 = vld [vmem:[%s1551 + $0x18] sm:$0xff]
        %v1556 = vld [vmem:[%s1551 + $0x20] sm:$0xff]
        %v1557 = vld [vmem:[%s1551 + $0x28] sm:$0xff]
        %v1558 = vld [vmem:[%s1551 + $0x30] sm:$0xff]
        %v1559 = vld [vmem:[%s1551 + $0x38] sm:$0xff]
        %v1560 = vld [vmem:[%s1551 + $0x40] sm:$0xff]
        %v1561 = vld [vmem:[%s1551 + $0x48] sm:$0xff]
        %v1562 = vld [vmem:[%s1551 + $0x50] sm:$0xff]
        %v1563 = vld [vmem:[%s1551 + $0x58] sm:$0xff]
        %v1564 = vld [vmem:[%s1551 + $0x60] sm:$0xff]
        %v1565 = vld [vmem:[%s1551 + $0x68] sm:$0xff]
        %v1566 = vld [vmem:[%s1551 + $0x70] sm:$0xff]
        %v1567 = vld [vmem:[%s1551 + $0x78] sm:$0xff]
        %v1568 = vld [vmem:[%s1551 + $0x80] sm:$0xff]
        %v1569 = vld [vmem:[%s1551 + $0x88] sm:$0xff]
        %v1570 = vld [vmem:[%s1551 + $0x90] sm:$0xff]
        %v1571 = vld [vmem:[%s1551 + $0x98] sm:$0xff]
        %v1572 = vld [vmem:[%s1551 + $0xa0] sm:$0xff]
        %v1573 = vld [vmem:[%s1551 + $0xa8] sm:$0xff]
        %v1574 = vld [vmem:[%s1551 + $0xb0] sm:$0xff]
        %v1575 = vld [vmem:[%s1551 + $0xb8] sm:$0xff]
        %v1576 = vld [vmem:[%s1551 + $0xc0] sm:$0xff]
        %v1577 = vld [vmem:[%s1551 + $0xc8] sm:$0xff]
        %v1578 = vld [vmem:[%s1551 + $0xd0] sm:$0xff]
        %v1579 = vld [vmem:[%s1551 + $0xd8] sm:$0xff]
        %v1580 = vld [vmem:[%s1551 + $0xe0] sm:$0xff]
        %v1581 = vld [vmem:[%s1551 + $0xe8] sm:$0xff]
        %v1582 = vld [vmem:[%s1551 + $0xf0] sm:$0xff]
        %v1583 = vld [vmem:[%s1551 + $0xf8] sm:$0xff]
        %1584 = vmatprep.subr.mxu0 0.0
        %1585 = vmatpush1.msra.mxu0 0.0
        %1586 = vmatprep.subr.mxu0 0.0
        %1587 = vmatpush1.msra.mxu0 0.0
        %1588 = vmatprep.subr.mxu0 0.0
        %1589 = vmatpush1.msra.mxu0 0.0
        %1590 = vmatprep.subr.mxu0 0.0
        %1591 = vmatpush1.msra.mxu0 0.0
        %1592 = vmatprep.subr.mxu0 0.0
        %1593 = vmatpush1.msra.mxu0 0.0
        %1594 = vmatprep.subr.mxu0 0.0
        %1595 = vmatpush1.msra.mxu0 0.0
        %1596 = vmatprep.subr.mxu0 0.0
        %1597 = vmatpush1.msra.mxu0 0.0
        %1598 = vmatprep.subr.mxu0 0.0
        %1599 = vmatpush1.msra.mxu0 0.0
        %1600 = vmatprep.subr.mxu0 0.0
        %1601 = vmatpush1.msra.mxu0 0.0
        %1602 = vmatprep.subr.mxu0 0.0
        %1603 = vmatpush1.msra.mxu0 0.0
        %1604 = vmatprep.subr.mxu0 0.0
        %1605 = vmatpush1.msra.mxu0 0.0
        %1606 = vmatprep.subr.mxu0 0.0
        %1607 = vmatpush1.msra.mxu0 0.0
        %1608 = vmatprep.subr.mxu0 %v1577
        %1609 = vmatpush1.msra.mxu0 %v1576
        %1610 = vmatprep.subr.mxu0 %v1569
        %1611 = vmatpush1.msra.mxu0 %v1568
        %1612 = vmatprep.subr.mxu0 %v1561
        %1613 = vmatpush1.msra.mxu0 %v1560
        %1614 = vmatprep.subr.mxu0 %v1553
        %1615 = vmatpush1.msra.mxu0 %v1552
        %1616 = vmatprep.subr.mxu0 0.0
        %1617 = vmatpush2.msra.mxu0 0.0
        %1618 = vmatprep.subr.mxu0 0.0
        %1619 = vmatpush2.msra.mxu0 0.0
        %1620 = vmatprep.subr.mxu0 0.0
        %1621 = vmatpush2.msra.mxu0 0.0
        %1622 = vmatprep.subr.mxu0 0.0
        %1623 = vmatpush2.msra.mxu0 0.0
        %1624 = vmatprep.subr.mxu0 0.0
        %1625 = vmatpush2.msra.mxu0 0.0
        %1626 = vmatprep.subr.mxu0 0.0
        %1627 = vmatpush2.msra.mxu0 0.0
        %1628 = vmatprep.subr.mxu0 0.0
        %1629 = vmatpush2.msra.mxu0 0.0
        %1630 = vmatprep.subr.mxu0 0.0
        %1631 = vmatpush2.msra.mxu0 0.0
        %1632 = vmatprep.subr.mxu0 0.0
        %1633 = vmatpush2.msra.mxu0 0.0
        %1634 = vmatprep.subr.mxu0 0.0
        %1635 = vmatpush2.msra.mxu0 0.0
        %1636 = vmatprep.subr.mxu0 0.0
        %1637 = vmatpush2.msra.mxu0 0.0
        %1638 = vmatprep.subr.mxu0 0.0
        %1639 = vmatpush2.msra.mxu0 0.0
        %1640 = vmatprep.subr.mxu0 0.0
        %1641 = vmatpush2.msra.mxu0 0.0
        %1642 = vmatprep.subr.mxu0 0.0
        %1643 = vmatpush2.msra.mxu0 0.0
        %1644 = vmatprep.subr.mxu0 0.0
        %1645 = vmatpush2.msra.mxu0 0.0
        %1646 = vmatprep.subr.mxu0 0.0
        %1647 = vmatpush2.msra.mxu0 0.0
        %1648 = vmatprep.mubr.f32.mxu0 0.0
        %1649 = vmatmul.mubr.f32.gmra.mxu0 %v881
        %v1650 = vpop.f32.mrf.mxu0
        %v1651 = vadd.f32 0.0, %v1650
        %v1652 = vpop.f32.mrf.mxu0
        %v1653 = vadd.f32 0.0, %v1652
        %1654 = vmatprep.mubr.f32.mxu0 0.0
        %1655 = vmatmul.mubr.f32.gmra.mxu0 %v884
        %v1656 = vpop.f32.mrf.mxu0
        %v1657 = vadd.f32 0.0, %v1656
        %v1658 = vpop.f32.mrf.mxu0
        %v1659 = vadd.f32 0.0, %v1658
        %1660 = vdwg.mxu0
        %1661 = vmatprep.subr.mxu0 0.0
        %1662 = vmatpush1.msra.mxu0 0.0
        %1663 = vmatprep.subr.mxu0 0.0
        %1664 = vmatpush1.msra.mxu0 0.0
        %1665 = vmatprep.subr.mxu0 0.0
        %1666 = vmatpush1.msra.mxu0 0.0
        %1667 = vmatprep.subr.mxu0 0.0
        %1668 = vmatpush1.msra.mxu0 0.0
        %1669 = vmatprep.subr.mxu0 0.0
        %1670 = vmatpush1.msra.mxu0 0.0
        %1671 = vmatprep.subr.mxu0 0.0
        %1672 = vmatpush1.msra.mxu0 0.0
        %1673 = vmatprep.subr.mxu0 0.0
        %1674 = vmatpush1.msra.mxu0 0.0
        %1675 = vmatprep.subr.mxu0 0.0
        %1676 = vmatpush1.msra.mxu0 0.0
        %1677 = vmatprep.subr.mxu0 0.0
        %1678 = vmatpush1.msra.mxu0 0.0
        %1679 = vmatprep.subr.mxu0 0.0
        %1680 = vmatpush1.msra.mxu0 0.0
        %1681 = vmatprep.subr.mxu0 0.0
        %1682 = vmatpush1.msra.mxu0 0.0
        %1683 = vmatprep.subr.mxu0 0.0
        %1684 = vmatpush1.msra.mxu0 0.0
        %1685 = vmatprep.subr.mxu0 %v1579
        %1686 = vmatpush1.msra.mxu0 %v1578
        %1687 = vmatprep.subr.mxu0 %v1571
        %1688 = vmatpush1.msra.mxu0 %v1570
        %1689 = vmatprep.subr.mxu0 %v1563
        %1690 = vmatpush1.msra.mxu0 %v1562
        %1691 = vmatprep.subr.mxu0 %v1555
        %1692 = vmatpush1.msra.mxu0 %v1554
        %1693 = vmatprep.subr.mxu0 0.0
        %1694 = vmatpush2.msra.mxu0 0.0
        %1695 = vmatprep.subr.mxu0 0.0
        %1696 = vmatpush2.msra.mxu0 0.0
        %1697 = vmatprep.subr.mxu0 0.0
        %1698 = vmatpush2.msra.mxu0 0.0
        %1699 = vmatprep.subr.mxu0 0.0
        %1700 = vmatpush2.msra.mxu0 0.0
        %1701 = vmatprep.subr.mxu0 0.0
        %1702 = vmatpush2.msra.mxu0 0.0
        %1703 = vmatprep.subr.mxu0 0.0
        %1704 = vmatpush2.msra.mxu0 0.0
        %1705 = vmatprep.subr.mxu0 0.0
        %1706 = vmatpush2.msra.mxu0 0.0
        %1707 = vmatprep.subr.mxu0 0.0
        %1708 = vmatpush2.msra.mxu0 0.0
        %1709 = vmatprep.subr.mxu0 0.0
        %1710 = vmatpush2.msra.mxu0 0.0
        %1711 = vmatprep.subr.mxu0 0.0
        %1712 = vmatpush2.msra.mxu0 0.0
        %1713 = vmatprep.subr.mxu0 0.0
        %1714 = vmatpush2.msra.mxu0 0.0
        %1715 = vmatprep.subr.mxu0 0.0
        %1716 = vmatpush2.msra.mxu0 0.0
        %1717 = vmatprep.subr.mxu0 0.0
        %1718 = vmatpush2.msra.mxu0 0.0
        %1719 = vmatprep.subr.mxu0 0.0
        %1720 = vmatpush2.msra.mxu0 0.0
        %1721 = vmatprep.subr.mxu0 0.0
        %1722 = vmatpush2.msra.mxu0 0.0
        %1723 = vmatprep.subr.mxu0 0.0
        %1724 = vmatpush2.msra.mxu0 0.0
        %1725 = vmatprep.mubr.f32.mxu0 0.0
        %1726 = vmatmul.mubr.f32.gmra.mxu0 %v881
        %v1727 = vpop.f32.mrf.mxu0
        %v1728 = vadd.f32 0.0, %v1727
        %v1729 = vpop.f32.mrf.mxu0
        %v1730 = vadd.f32 0.0, %v1729
        %1731 = vmatprep.mubr.f32.mxu0 0.0
        %1732 = vmatmul.mubr.f32.gmra.mxu0 %v884
        %v1733 = vpop.f32.mrf.mxu0
        %v1734 = vadd.f32 0.0, %v1733
        %v1735 = vpop.f32.mrf.mxu0
        %v1736 = vadd.f32 0.0, %v1735
        %1737 = vdwg.mxu0
        %1738 = vmatprep.subr.mxu0 0.0
        %1739 = vmatpush1.msra.mxu0 0.0
        %1740 = vmatprep.subr.mxu0 0.0
        %1741 = vmatpush1.msra.mxu0 0.0
        %1742 = vmatprep.subr.mxu0 0.0
        %1743 = vmatpush1.msra.mxu0 0.0
        %1744 = vmatprep.subr.mxu0 0.0
        %1745 = vmatpush1.msra.mxu0 0.0
        %1746 = vmatprep.subr.mxu0 0.0
        %1747 = vmatpush1.msra.mxu0 0.0
        %1748 = vmatprep.subr.mxu0 0.0
        %1749 = vmatpush1.msra.mxu0 0.0
        %1750 = vmatprep.subr.mxu0 0.0
        %1751 = vmatpush1.msra.mxu0 0.0
        %1752 = vmatprep.subr.mxu0 0.0
        %1753 = vmatpush1.msra.mxu0 0.0
        %1754 = vmatprep.subr.mxu0 0.0
        %1755 = vmatpush1.msra.mxu0 0.0
        %1756 = vmatprep.subr.mxu0 0.0
        %1757 = vmatpush1.msra.mxu0 0.0
        %1758 = vmatprep.subr.mxu0 0.0
        %1759 = vmatpush1.msra.mxu0 0.0
        %1760 = vmatprep.subr.mxu0 0.0
        %1761 = vmatpush1.msra.mxu0 0.0
        %1762 = vmatprep.subr.mxu0 %v1581
        %1763 = vmatpush1.msra.mxu0 %v1580
        %1764 = vmatprep.subr.mxu0 %v1573
        %1765 = vmatpush1.msra.mxu0 %v1572
        %1766 = vmatprep.subr.mxu0 %v1565
        %1767 = vmatpush1.msra.mxu0 %v1564
        %1768 = vmatprep.subr.mxu0 %v1557
        %1769 = vmatpush1.msra.mxu0 %v1556
        %1770 = vmatprep.subr.mxu0 0.0
        %1771 = vmatpush2.msra.mxu0 0.0
        %1772 = vmatprep.subr.mxu0 0.0
        %1773 = vmatpush2.msra.mxu0 0.0
        %1774 = vmatprep.subr.mxu0 0.0
        %1775 = vmatpush2.msra.mxu0 0.0
        %1776 = vmatprep.subr.mxu0 0.0
        %1777 = vmatpush2.msra.mxu0 0.0
        %1778 = vmatprep.subr.mxu0 0.0
        %1779 = vmatpush2.msra.mxu0 0.0
        %1780 = vmatprep.subr.mxu0 0.0
        %1781 = vmatpush2.msra.mxu0 0.0
        %1782 = vmatprep.subr.mxu0 0.0
        %1783 = vmatpush2.msra.mxu0 0.0
        %1784 = vmatprep.subr.mxu0 0.0
        %1785 = vmatpush2.msra.mxu0 0.0
        %1786 = vmatprep.subr.mxu0 0.0
        %1787 = vmatpush2.msra.mxu0 0.0
        %1788 = vmatprep.subr.mxu0 0.0
        %1789 = vmatpush2.msra.mxu0 0.0
        %1790 = vmatprep.subr.mxu0 0.0
        %1791 = vmatpush2.msra.mxu0 0.0
        %1792 = vmatprep.subr.mxu0 0.0
        %1793 = vmatpush2.msra.mxu0 0.0
        %1794 = vmatprep.subr.mxu0 0.0
        %1795 = vmatpush2.msra.mxu0 0.0
        %1796 = vmatprep.subr.mxu0 0.0
        %1797 = vmatpush2.msra.mxu0 0.0
        %1798 = vmatprep.subr.mxu0 0.0
        %1799 = vmatpush2.msra.mxu0 0.0
        %1800 = vmatprep.subr.mxu0 0.0
        %1801 = vmatpush2.msra.mxu0 0.0
        %1802 = vmatprep.mubr.f32.mxu0 0.0
        %1803 = vmatmul.mubr.f32.gmra.mxu0 %v881
        %v1804 = vpop.f32.mrf.mxu0
        %v1805 = vadd.f32 0.0, %v1804
        %v1806 = vpop.f32.mrf.mxu0
        %v1807 = vadd.f32 0.0, %v1806
        %1808 = vmatprep.mubr.f32.mxu0 0.0
        %1809 = vmatmul.mubr.f32.gmra.mxu0 %v884
        %v1810 = vpop.f32.mrf.mxu0
        %v1811 = vadd.f32 0.0, %v1810
        %v1812 = vpop.f32.mrf.mxu0
        %v1813 = vadd.f32 0.0, %v1812
        %1814 = vdwg.mxu0
        %1815 = vmatprep.subr.mxu0 0.0
        %1816 = vmatpush1.msra.mxu0 0.0
        %1817 = vmatprep.subr.mxu0 0.0
        %1818 = vmatpush1.msra.mxu0 0.0
        %1819 = vmatprep.subr.mxu0 0.0
        %1820 = vmatpush1.msra.mxu0 0.0
        %1821 = vmatprep.subr.mxu0 0.0
        %1822 = vmatpush1.msra.mxu0 0.0
        %1823 = vmatprep.subr.mxu0 0.0
        %1824 = vmatpush1.msra.mxu0 0.0
        %1825 = vmatprep.subr.mxu0 0.0
        %1826 = vmatpush1.msra.mxu0 0.0
        %1827 = vmatprep.subr.mxu0 0.0
        %1828 = vmatpush1.msra.mxu0 0.0
        %1829 = vmatprep.subr.mxu0 0.0
        %1830 = vmatpush1.msra.mxu0 0.0
        %1831 = vmatprep.subr.mxu0 0.0
        %1832 = vmatpush1.msra.mxu0 0.0
        %1833 = vmatprep.subr.mxu0 0.0
        %1834 = vmatpush1.msra.mxu0 0.0
        %1835 = vmatprep.subr.mxu0 0.0
        %1836 = vmatpush1.msra.mxu0 0.0
        %1837 = vmatprep.subr.mxu0 0.0
        %1838 = vmatpush1.msra.mxu0 0.0
        %1839 = vmatprep.subr.mxu0 %v1583
        %1840 = vmatpush1.msra.mxu0 %v1582
        %1841 = vmatprep.subr.mxu0 %v1575
        %1842 = vmatpush1.msra.mxu0 %v1574
        %1843 = vmatprep.subr.mxu0 %v1567
        %1844 = vmatpush1.msra.mxu0 %v1566
        %1845 = vmatprep.subr.mxu0 %v1559
        %1846 = vmatpush1.msra.mxu0 %v1558
        %1847 = vmatprep.subr.mxu0 0.0
        %1848 = vmatpush2.msra.mxu0 0.0
        %1849 = vmatprep.subr.mxu0 0.0
        %1850 = vmatpush2.msra.mxu0 0.0
        %1851 = vmatprep.subr.mxu0 0.0
        %1852 = vmatpush2.msra.mxu0 0.0
        %1853 = vmatprep.subr.mxu0 0.0
        %1854 = vmatpush2.msra.mxu0 0.0
        %1855 = vmatprep.subr.mxu0 0.0
        %1856 = vmatpush2.msra.mxu0 0.0
        %1857 = vmatprep.subr.mxu0 0.0
        %1858 = vmatpush2.msra.mxu0 0.0
        %1859 = vmatprep.subr.mxu0 0.0
        %1860 = vmatpush2.msra.mxu0 0.0
        %1861 = vmatprep.subr.mxu0 0.0
        %1862 = vmatpush2.msra.mxu0 0.0
        %1863 = vmatprep.subr.mxu0 0.0
        %1864 = vmatpush2.msra.mxu0 0.0
        %1865 = vmatprep.subr.mxu0 0.0
        %1866 = vmatpush2.msra.mxu0 0.0
        %1867 = vmatprep.subr.mxu0 0.0
        %1868 = vmatpush2.msra.mxu0 0.0
        %1869 = vmatprep.subr.mxu0 0.0
        %1870 = vmatpush2.msra.mxu0 0.0
        %1871 = vmatprep.subr.mxu0 0.0
        %1872 = vmatpush2.msra.mxu0 0.0
        %1873 = vmatprep.subr.mxu0 0.0
        %1874 = vmatpush2.msra.mxu0 0.0
        %1875 = vmatprep.subr.mxu0 0.0
        %1876 = vmatpush2.msra.mxu0 0.0
        %1877 = vmatprep.subr.mxu0 0.0
        %1878 = vmatpush2.msra.mxu0 0.0
        %1879 = vmatprep.mubr.f32.mxu0 0.0
        %1880 = vmatmul.mubr.f32.gmra.mxu0 %v881
        %v1881 = vpop.f32.mrf.mxu0
        %v1882 = vadd.f32 0.0, %v1881
        %v1883 = vpop.f32.mrf.mxu0
        %v1884 = vadd.f32 0.0, %v1883
        %1885 = vmatprep.mubr.f32.mxu0 0.0
        %1886 = vmatmul.mubr.f32.gmra.mxu0 %v884
        %v1887 = vpop.f32.mrf.mxu0
        %v1888 = vadd.f32 0.0, %v1887
        %v1889 = vpop.f32.mrf.mxu0
        %v1890 = vadd.f32 0.0, %v1889
        %1891 = vdwg.mxu0
        %v1892 = vmax.f32 %v1535, %v1651
        %v1893 = vmax.f32 %v1536, %v1653
        %v1894 = vmax.f32 %v1537, %v1728
        %v1895 = vmax.f32 %v1538, %v1730
        %v1896 = vmax.f32 %v1539, %v1805
        %v1897 = vmax.f32 %v1540, %v1807
        %v1898 = vmax.f32 %v1541, %v1882
        %v1899 = vmax.f32 %v1542, %v1884
        %v1900 = vmax.f32 %v1543, %v1657
        %v1901 = vmax.f32 %v1544, %v1659
        %v1902 = vmax.f32 %v1545, %v1734
        %v1903 = vmax.f32 %v1546, %v1736
        %v1904 = vmax.f32 %v1547, %v1811
        %v1905 = vmax.f32 %v1548, %v1813
        %v1906 = vmax.f32 %v1549, %v1888
        %v1907 = vmax.f32 %v1550, %v1890
        %s1908 = scalar_lea.vmem %s816, 768 [#allocation3]
        %v1909 = vld [vmem:[%s1908] sm:$0xff]
        %v1910 = vld [vmem:[%s1908 + $0x8] sm:$0xff]
        %v1911 = vld [vmem:[%s1908 + $0x10] sm:$0xff]
        %v1912 = vld [vmem:[%s1908 + $0x18] sm:$0xff]
        %v1913 = vld [vmem:[%s1908 + $0x20] sm:$0xff]
        %v1914 = vld [vmem:[%s1908 + $0x28] sm:$0xff]
        %v1915 = vld [vmem:[%s1908 + $0x30] sm:$0xff]
        %v1916 = vld [vmem:[%s1908 + $0x38] sm:$0xff]
        %v1917 = vld [vmem:[%s1908 + $0x40] sm:$0xff]
        %v1918 = vld [vmem:[%s1908 + $0x48] sm:$0xff]
        %v1919 = vld [vmem:[%s1908 + $0x50] sm:$0xff]
        %v1920 = vld [vmem:[%s1908 + $0x58] sm:$0xff]
        %v1921 = vld [vmem:[%s1908 + $0x60] sm:$0xff]
        %v1922 = vld [vmem:[%s1908 + $0x68] sm:$0xff]
        %v1923 = vld [vmem:[%s1908 + $0x70] sm:$0xff]
        %v1924 = vld [vmem:[%s1908 + $0x78] sm:$0xff]
        %v1925 = vld [vmem:[%s1908 + $0x80] sm:$0xff]
        %v1926 = vld [vmem:[%s1908 + $0x88] sm:$0xff]
        %v1927 = vld [vmem:[%s1908 + $0x90] sm:$0xff]
        %v1928 = vld [vmem:[%s1908 + $0x98] sm:$0xff]
        %v1929 = vld [vmem:[%s1908 + $0xa0] sm:$0xff]
        %v1930 = vld [vmem:[%s1908 + $0xa8] sm:$0xff]
        %v1931 = vld [vmem:[%s1908 + $0xb0] sm:$0xff]
        %v1932 = vld [vmem:[%s1908 + $0xb8] sm:$0xff]
        %v1933 = vld [vmem:[%s1908 + $0xc0] sm:$0xff]
        %v1934 = vld [vmem:[%s1908 + $0xc8] sm:$0xff]
        %v1935 = vld [vmem:[%s1908 + $0xd0] sm:$0xff]
        %v1936 = vld [vmem:[%s1908 + $0xd8] sm:$0xff]
        %v1937 = vld [vmem:[%s1908 + $0xe0] sm:$0xff]
        %v1938 = vld [vmem:[%s1908 + $0xe8] sm:$0xff]
        %v1939 = vld [vmem:[%s1908 + $0xf0] sm:$0xff]
        %v1940 = vld [vmem:[%s1908 + $0xf8] sm:$0xff]
        %1941 = vmatprep.subr.mxu0 0.0
        %1942 = vmatpush1.msra.mxu0 0.0
        %1943 = vmatprep.subr.mxu0 0.0
        %1944 = vmatpush1.msra.mxu0 0.0
        %1945 = vmatprep.subr.mxu0 0.0
        %1946 = vmatpush1.msra.mxu0 0.0
        %1947 = vmatprep.subr.mxu0 0.0
        %1948 = vmatpush1.msra.mxu0 0.0
        %1949 = vmatprep.subr.mxu0 0.0
        %1950 = vmatpush1.msra.mxu0 0.0
        %1951 = vmatprep.subr.mxu0 0.0
        %1952 = vmatpush1.msra.mxu0 0.0
        %1953 = vmatprep.subr.mxu0 0.0
        %1954 = vmatpush1.msra.mxu0 0.0
        %1955 = vmatprep.subr.mxu0 0.0
        %1956 = vmatpush1.msra.mxu0 0.0
        %1957 = vmatprep.subr.mxu0 0.0
        %1958 = vmatpush1.msra.mxu0 0.0
        %1959 = vmatprep.subr.mxu0 0.0
        %1960 = vmatpush1.msra.mxu0 0.0
        %1961 = vmatprep.subr.mxu0 0.0
        %1962 = vmatpush1.msra.mxu0 0.0
        %1963 = vmatprep.subr.mxu0 0.0
        %1964 = vmatpush1.msra.mxu0 0.0
        %1965 = vmatprep.subr.mxu0 %v1934
        %1966 = vmatpush1.msra.mxu0 %v1933
        %1967 = vmatprep.subr.mxu0 %v1926
        %1968 = vmatpush1.msra.mxu0 %v1925
        %1969 = vmatprep.subr.mxu0 %v1918
        %1970 = vmatpush1.msra.mxu0 %v1917
        %1971 = vmatprep.subr.mxu0 %v1910
        %1972 = vmatpush1.msra.mxu0 %v1909
        %1973 = vmatprep.subr.mxu0 0.0
        %1974 = vmatpush2.msra.mxu0 0.0
        %1975 = vmatprep.subr.mxu0 0.0
        %1976 = vmatpush2.msra.mxu0 0.0
        %1977 = vmatprep.subr.mxu0 0.0
        %1978 = vmatpush2.msra.mxu0 0.0
        %1979 = vmatprep.subr.mxu0 0.0
        %1980 = vmatpush2.msra.mxu0 0.0
        %1981 = vmatprep.subr.mxu0 0.0
        %1982 = vmatpush2.msra.mxu0 0.0
        %1983 = vmatprep.subr.mxu0 0.0
        %1984 = vmatpush2.msra.mxu0 0.0
        %1985 = vmatprep.subr.mxu0 0.0
        %1986 = vmatpush2.msra.mxu0 0.0
        %1987 = vmatprep.subr.mxu0 0.0
        %1988 = vmatpush2.msra.mxu0 0.0
        %1989 = vmatprep.subr.mxu0 0.0
        %1990 = vmatpush2.msra.mxu0 0.0
        %1991 = vmatprep.subr.mxu0 0.0
        %1992 = vmatpush2.msra.mxu0 0.0
        %1993 = vmatprep.subr.mxu0 0.0
        %1994 = vmatpush2.msra.mxu0 0.0
        %1995 = vmatprep.subr.mxu0 0.0
        %1996 = vmatpush2.msra.mxu0 0.0
        %1997 = vmatprep.subr.mxu0 0.0
        %1998 = vmatpush2.msra.mxu0 0.0
        %1999 = vmatprep.subr.mxu0 0.0
        %2000 = vmatpush2.msra.mxu0 0.0
        %2001 = vmatprep.subr.mxu0 0.0
        %2002 = vmatpush2.msra.mxu0 0.0
        %2003 = vmatprep.subr.mxu0 0.0
        %2004 = vmatpush2.msra.mxu0 0.0
        %2005 = vmatprep.mubr.f32.mxu0 0.0
        %2006 = vmatmul.mubr.f32.gmra.mxu0 %v881
        %v2007 = vpop.f32.mrf.mxu0
        %v2008 = vadd.f32 0.0, %v2007
        %v2009 = vpop.f32.mrf.mxu0
        %v2010 = vadd.f32 0.0, %v2009
        %2011 = vmatprep.mubr.f32.mxu0 0.0
        %2012 = vmatmul.mubr.f32.gmra.mxu0 %v884
        %v2013 = vpop.f32.mrf.mxu0
        %v2014 = vadd.f32 0.0, %v2013
        %v2015 = vpop.f32.mrf.mxu0
        %v2016 = vadd.f32 0.0, %v2015
        %2017 = vdwg.mxu0
        %2018 = vmatprep.subr.mxu0 0.0
        %2019 = vmatpush1.msra.mxu0 0.0
        %2020 = vmatprep.subr.mxu0 0.0
        %2021 = vmatpush1.msra.mxu0 0.0
        %2022 = vmatprep.subr.mxu0 0.0
        %2023 = vmatpush1.msra.mxu0 0.0
        %2024 = vmatprep.subr.mxu0 0.0
        %2025 = vmatpush1.msra.mxu0 0.0
        %2026 = vmatprep.subr.mxu0 0.0
        %2027 = vmatpush1.msra.mxu0 0.0
        %2028 = vmatprep.subr.mxu0 0.0
        %2029 = vmatpush1.msra.mxu0 0.0
        %2030 = vmatprep.subr.mxu0 0.0
        %2031 = vmatpush1.msra.mxu0 0.0
        %2032 = vmatprep.subr.mxu0 0.0
        %2033 = vmatpush1.msra.mxu0 0.0
        %2034 = vmatprep.subr.mxu0 0.0
        %2035 = vmatpush1.msra.mxu0 0.0
        %2036 = vmatprep.subr.mxu0 0.0
        %2037 = vmatpush1.msra.mxu0 0.0
        %2038 = vmatprep.subr.mxu0 0.0
        %2039 = vmatpush1.msra.mxu0 0.0
        %2040 = vmatprep.subr.mxu0 0.0
        %2041 = vmatpush1.msra.mxu0 0.0
        %2042 = vmatprep.subr.mxu0 %v1936
        %2043 = vmatpush1.msra.mxu0 %v1935
        %2044 = vmatprep.subr.mxu0 %v1928
        %2045 = vmatpush1.msra.mxu0 %v1927
        %2046 = vmatprep.subr.mxu0 %v1920
        %2047 = vmatpush1.msra.mxu0 %v1919
        %2048 = vmatprep.subr.mxu0 %v1912
        %2049 = vmatpush1.msra.mxu0 %v1911
        %2050 = vmatprep.subr.mxu0 0.0
        %2051 = vmatpush2.msra.mxu0 0.0
        %2052 = vmatprep.subr.mxu0 0.0
        %2053 = vmatpush2.msra.mxu0 0.0
        %2054 = vmatprep.subr.mxu0 0.0
        %2055 = vmatpush2.msra.mxu0 0.0
        %2056 = vmatprep.subr.mxu0 0.0
        %2057 = vmatpush2.msra.mxu0 0.0
        %2058 = vmatprep.subr.mxu0 0.0
        %2059 = vmatpush2.msra.mxu0 0.0
        %2060 = vmatprep.subr.mxu0 0.0
        %2061 = vmatpush2.msra.mxu0 0.0
        %2062 = vmatprep.subr.mxu0 0.0
        %2063 = vmatpush2.msra.mxu0 0.0
        %2064 = vmatprep.subr.mxu0 0.0
        %2065 = vmatpush2.msra.mxu0 0.0
        %2066 = vmatprep.subr.mxu0 0.0
        %2067 = vmatpush2.msra.mxu0 0.0
        %2068 = vmatprep.subr.mxu0 0.0
        %2069 = vmatpush2.msra.mxu0 0.0
        %2070 = vmatprep.subr.mxu0 0.0
        %2071 = vmatpush2.msra.mxu0 0.0
        %2072 = vmatprep.subr.mxu0 0.0
        %2073 = vmatpush2.msra.mxu0 0.0
        %2074 = vmatprep.subr.mxu0 0.0
        %2075 = vmatpush2.msra.mxu0 0.0
        %2076 = vmatprep.subr.mxu0 0.0
        %2077 = vmatpush2.msra.mxu0 0.0
        %2078 = vmatprep.subr.mxu0 0.0
        %2079 = vmatpush2.msra.mxu0 0.0
        %2080 = vmatprep.subr.mxu0 0.0
        %2081 = vmatpush2.msra.mxu0 0.0
        %2082 = vmatprep.mubr.f32.mxu0 0.0
        %2083 = vmatmul.mubr.f32.gmra.mxu0 %v881
        %v2084 = vpop.f32.mrf.mxu0
        %v2085 = vadd.f32 0.0, %v2084
        %v2086 = vpop.f32.mrf.mxu0
        %v2087 = vadd.f32 0.0, %v2086
        %2088 = vmatprep.mubr.f32.mxu0 0.0
        %2089 = vmatmul.mubr.f32.gmra.mxu0 %v884
        %v2090 = vpop.f32.mrf.mxu0
        %v2091 = vadd.f32 0.0, %v2090
        %v2092 = vpop.f32.mrf.mxu0
        %v2093 = vadd.f32 0.0, %v2092
        %2094 = vdwg.mxu0
        %2095 = vmatprep.subr.mxu0 0.0
        %2096 = vmatpush1.msra.mxu0 0.0
        %2097 = vmatprep.subr.mxu0 0.0
        %2098 = vmatpush1.msra.mxu0 0.0
        %2099 = vmatprep.subr.mxu0 0.0
        %2100 = vmatpush1.msra.mxu0 0.0
        %2101 = vmatprep.subr.mxu0 0.0
        %2102 = vmatpush1.msra.mxu0 0.0
        %2103 = vmatprep.subr.mxu0 0.0
        %2104 = vmatpush1.msra.mxu0 0.0
        %2105 = vmatprep.subr.mxu0 0.0
        %2106 = vmatpush1.msra.mxu0 0.0
        %2107 = vmatprep.subr.mxu0 0.0
        %2108 = vmatpush1.msra.mxu0 0.0
        %2109 = vmatprep.subr.mxu0 0.0
        %2110 = vmatpush1.msra.mxu0 0.0
        %2111 = vmatprep.subr.mxu0 0.0
        %2112 = vmatpush1.msra.mxu0 0.0
        %2113 = vmatprep.subr.mxu0 0.0
        %2114 = vmatpush1.msra.mxu0 0.0
        %2115 = vmatprep.subr.mxu0 0.0
        %2116 = vmatpush1.msra.mxu0 0.0
        %2117 = vmatprep.subr.mxu0 0.0
        %2118 = vmatpush1.msra.mxu0 0.0
        %2119 = vmatprep.subr.mxu0 %v1938
        %2120 = vmatpush1.msra.mxu0 %v1937
        %2121 = vmatprep.subr.mxu0 %v1930
        %2122 = vmatpush1.msra.mxu0 %v1929
        %2123 = vmatprep.subr.mxu0 %v1922
        %2124 = vmatpush1.msra.mxu0 %v1921
        %2125 = vmatprep.subr.mxu0 %v1914
        %2126 = vmatpush1.msra.mxu0 %v1913
        %2127 = vmatprep.subr.mxu0 0.0
        %2128 = vmatpush2.msra.mxu0 0.0
        %2129 = vmatprep.subr.mxu0 0.0
        %2130 = vmatpush2.msra.mxu0 0.0
        %2131 = vmatprep.subr.mxu0 0.0
        %2132 = vmatpush2.msra.mxu0 0.0
        %2133 = vmatprep.subr.mxu0 0.0
        %2134 = vmatpush2.msra.mxu0 0.0
        %2135 = vmatprep.subr.mxu0 0.0
        %2136 = vmatpush2.msra.mxu0 0.0
        %2137 = vmatprep.subr.mxu0 0.0
        %2138 = vmatpush2.msra.mxu0 0.0
        %2139 = vmatprep.subr.mxu0 0.0
        %2140 = vmatpush2.msra.mxu0 0.0
        %2141 = vmatprep.subr.mxu0 0.0
        %2142 = vmatpush2.msra.mxu0 0.0
        %2143 = vmatprep.subr.mxu0 0.0
        %2144 = vmatpush2.msra.mxu0 0.0
        %2145 = vmatprep.subr.mxu0 0.0
        %2146 = vmatpush2.msra.mxu0 0.0
        %2147 = vmatprep.subr.mxu0 0.0
        %2148 = vmatpush2.msra.mxu0 0.0
        %2149 = vmatprep.subr.mxu0 0.0
        %2150 = vmatpush2.msra.mxu0 0.0
        %2151 = vmatprep.subr.mxu0 0.0
        %2152 = vmatpush2.msra.mxu0 0.0
        %2153 = vmatprep.subr.mxu0 0.0
        %2154 = vmatpush2.msra.mxu0 0.0
        %2155 = vmatprep.subr.mxu0 0.0
        %2156 = vmatpush2.msra.mxu0 0.0
        %2157 = vmatprep.subr.mxu0 0.0
        %2158 = vmatpush2.msra.mxu0 0.0
        %2159 = vmatprep.mubr.f32.mxu0 0.0
        %2160 = vmatmul.mubr.f32.gmra.mxu0 %v881
        %v2161 = vpop.f32.mrf.mxu0
        %v2162 = vadd.f32 0.0, %v2161
        %v2163 = vpop.f32.mrf.mxu0
        %v2164 = vadd.f32 0.0, %v2163
        %2165 = vmatprep.mubr.f32.mxu0 0.0
        %2166 = vmatmul.mubr.f32.gmra.mxu0 %v884
        %v2167 = vpop.f32.mrf.mxu0
        %v2168 = vadd.f32 0.0, %v2167
        %v2169 = vpop.f32.mrf.mxu0
        %v2170 = vadd.f32 0.0, %v2169
        %2171 = vdwg.mxu0
        %2172 = vmatprep.subr.mxu0 0.0
        %2173 = vmatpush1.msra.mxu0 0.0
        %2174 = vmatprep.subr.mxu0 0.0
        %2175 = vmatpush1.msra.mxu0 0.0
        %2176 = vmatprep.subr.mxu0 0.0
        %2177 = vmatpush1.msra.mxu0 0.0
        %2178 = vmatprep.subr.mxu0 0.0
        %2179 = vmatpush1.msra.mxu0 0.0
        %2180 = vmatprep.subr.mxu0 0.0
        %2181 = vmatpush1.msra.mxu0 0.0
        %2182 = vmatprep.subr.mxu0 0.0
        %2183 = vmatpush1.msra.mxu0 0.0
        %2184 = vmatprep.subr.mxu0 0.0
        %2185 = vmatpush1.msra.mxu0 0.0
        %2186 = vmatprep.subr.mxu0 0.0
        %2187 = vmatpush1.msra.mxu0 0.0
        %2188 = vmatprep.subr.mxu0 0.0
        %2189 = vmatpush1.msra.mxu0 0.0
        %2190 = vmatprep.subr.mxu0 0.0
        %2191 = vmatpush1.msra.mxu0 0.0
        %2192 = vmatprep.subr.mxu0 0.0
        %2193 = vmatpush1.msra.mxu0 0.0
        %2194 = vmatprep.subr.mxu0 0.0
        %2195 = vmatpush1.msra.mxu0 0.0
        %2196 = vmatprep.subr.mxu0 %v1940
        %2197 = vmatpush1.msra.mxu0 %v1939
        %2198 = vmatprep.subr.mxu0 %v1932
        %2199 = vmatpush1.msra.mxu0 %v1931
        %2200 = vmatprep.subr.mxu0 %v1924
        %2201 = vmatpush1.msra.mxu0 %v1923
        %2202 = vmatprep.subr.mxu0 %v1916
        %2203 = vmatpush1.msra.mxu0 %v1915
        %2204 = vmatprep.subr.mxu0 0.0
        %2205 = vmatpush2.msra.mxu0 0.0
        %2206 = vmatprep.subr.mxu0 0.0
        %2207 = vmatpush2.msra.mxu0 0.0
        %2208 = vmatprep.subr.mxu0 0.0
        %2209 = vmatpush2.msra.mxu0 0.0
        %2210 = vmatprep.subr.mxu0 0.0
        %2211 = vmatpush2.msra.mxu0 0.0
        %2212 = vmatprep.subr.mxu0 0.0
        %2213 = vmatpush2.msra.mxu0 0.0
        %2214 = vmatprep.subr.mxu0 0.0
        %2215 = vmatpush2.msra.mxu0 0.0
        %2216 = vmatprep.subr.mxu0 0.0
        %2217 = vmatpush2.msra.mxu0 0.0
        %2218 = vmatprep.subr.mxu0 0.0
        %2219 = vmatpush2.msra.mxu0 0.0
        %2220 = vmatprep.subr.mxu0 0.0
        %2221 = vmatpush2.msra.mxu0 0.0
        %2222 = vmatprep.subr.mxu0 0.0
        %2223 = vmatpush2.msra.mxu0 0.0
        %2224 = vmatprep.subr.mxu0 0.0
        %2225 = vmatpush2.msra.mxu0 0.0
        %2226 = vmatprep.subr.mxu0 0.0
        %2227 = vmatpush2.msra.mxu0 0.0
        %2228 = vmatprep.subr.mxu0 0.0
        %2229 = vmatpush2.msra.mxu0 0.0
        %2230 = vmatprep.subr.mxu0 0.0
        %2231 = vmatpush2.msra.mxu0 0.0
        %2232 = vmatprep.subr.mxu0 0.0
        %2233 = vmatpush2.msra.mxu0 0.0
        %2234 = vmatprep.subr.mxu0 0.0
        %2235 = vmatpush2.msra.mxu0 0.0
        %2236 = vmatprep.mubr.f32.mxu0 0.0
        %2237 = vmatmul.mubr.f32.gmra.mxu0 %v881
        %v2238 = vpop.f32.mrf.mxu0
        %v2239 = vadd.f32 0.0, %v2238
        %v2240 = vpop.f32.mrf.mxu0
        %v2241 = vadd.f32 0.0, %v2240
        %2242 = vmatprep.mubr.f32.mxu0 0.0
        %2243 = vmatmul.mubr.f32.gmra.mxu0 %v884
        %v2244 = vpop.f32.mrf.mxu0
        %v2245 = vadd.f32 0.0, %v2244
        %v2246 = vpop.f32.mrf.mxu0
        %v2247 = vadd.f32 0.0, %v2246
        %2248 = vdwg.mxu0
        %v2249 = vmax.f32 %v1892, %v2008
        %v2250 = vmax.f32 %v1893, %v2010
        %v2251 = vmax.f32 %v1894, %v2085
        %v2252 = vmax.f32 %v1895, %v2087
        %v2253 = vmax.f32 %v1896, %v2162
        %v2254 = vmax.f32 %v1897, %v2164
        %v2255 = vmax.f32 %v1898, %v2239
        %v2256 = vmax.f32 %v1899, %v2241
        %v2257 = vmax.f32 %v1900, %v2014
        %v2258 = vmax.f32 %v1901, %v2016
        %v2259 = vmax.f32 %v1902, %v2091
        %v2260 = vmax.f32 %v1903, %v2093
        %v2261 = vmax.f32 %v1904, %v2168
        %v2262 = vmax.f32 %v1905, %v2170
        %v2263 = vmax.f32 %v1906, %v2245
        %v2264 = vmax.f32 %v1907, %v2247
        %s2265 = scalar_lea.vmem %s816, 1024 [#allocation3]
        %v2266 = vld [vmem:[%s2265] sm:$0xff]
        %v2267 = vld [vmem:[%s2265 + $0x8] sm:$0xff]
        %v2268 = vld [vmem:[%s2265 + $0x10] sm:$0xff]
        %v2269 = vld [vmem:[%s2265 + $0x18] sm:$0xff]
        %v2270 = vld [vmem:[%s2265 + $0x20] sm:$0xff]
        %v2271 = vld [vmem:[%s2265 + $0x28] sm:$0xff]
        %v2272 = vld [vmem:[%s2265 + $0x30] sm:$0xff]
        %v2273 = vld [vmem:[%s2265 + $0x38] sm:$0xff]
        %v2274 = vld [vmem:[%s2265 + $0x40] sm:$0xff]
        %v2275 = vld [vmem:[%s2265 + $0x48] sm:$0xff]
        %v2276 = vld [vmem:[%s2265 + $0x50] sm:$0xff]
        %v2277 = vld [vmem:[%s2265 + $0x58] sm:$0xff]
        %v2278 = vld [vmem:[%s2265 + $0x60] sm:$0xff]
        %v2279 = vld [vmem:[%s2265 + $0x68] sm:$0xff]
        %v2280 = vld [vmem:[%s2265 + $0x70] sm:$0xff]
        %v2281 = vld [vmem:[%s2265 + $0x78] sm:$0xff]
        %v2282 = vld [vmem:[%s2265 + $0x80] sm:$0xff]
        %v2283 = vld [vmem:[%s2265 + $0x88] sm:$0xff]
        %v2284 = vld [vmem:[%s2265 + $0x90] sm:$0xff]
        %v2285 = vld [vmem:[%s2265 + $0x98] sm:$0xff]
        %v2286 = vld [vmem:[%s2265 + $0xa0] sm:$0xff]
        %v2287 = vld [vmem:[%s2265 + $0xa8] sm:$0xff]
        %v2288 = vld [vmem:[%s2265 + $0xb0] sm:$0xff]
        %v2289 = vld [vmem:[%s2265 + $0xb8] sm:$0xff]
        %v2290 = vld [vmem:[%s2265 + $0xc0] sm:$0xff]
        %v2291 = vld [vmem:[%s2265 + $0xc8] sm:$0xff]
        %v2292 = vld [vmem:[%s2265 + $0xd0] sm:$0xff]
        %v2293 = vld [vmem:[%s2265 + $0xd8] sm:$0xff]
        %v2294 = vld [vmem:[%s2265 + $0xe0] sm:$0xff]
        %v2295 = vld [vmem:[%s2265 + $0xe8] sm:$0xff]
        %v2296 = vld [vmem:[%s2265 + $0xf0] sm:$0xff]
        %v2297 = vld [vmem:[%s2265 + $0xf8] sm:$0xff]
        %2298 = vmatprep.subr.mxu0 0.0
        %2299 = vmatpush1.msra.mxu0 0.0
        %2300 = vmatprep.subr.mxu0 0.0
        %2301 = vmatpush1.msra.mxu0 0.0
        %2302 = vmatprep.subr.mxu0 0.0
        %2303 = vmatpush1.msra.mxu0 0.0
        %2304 = vmatprep.subr.mxu0 0.0
        %2305 = vmatpush1.msra.mxu0 0.0
        %2306 = vmatprep.subr.mxu0 0.0
        %2307 = vmatpush1.msra.mxu0 0.0
        %2308 = vmatprep.subr.mxu0 0.0
        %2309 = vmatpush1.msra.mxu0 0.0
        %2310 = vmatprep.subr.mxu0 0.0
        %2311 = vmatpush1.msra.mxu0 0.0
        %2312 = vmatprep.subr.mxu0 0.0
        %2313 = vmatpush1.msra.mxu0 0.0
        %2314 = vmatprep.subr.mxu0 0.0
        %2315 = vmatpush1.msra.mxu0 0.0
        %2316 = vmatprep.subr.mxu0 0.0
        %2317 = vmatpush1.msra.mxu0 0.0
        %2318 = vmatprep.subr.mxu0 0.0
        %2319 = vmatpush1.msra.mxu0 0.0
        %2320 = vmatprep.subr.mxu0 0.0
        %2321 = vmatpush1.msra.mxu0 0.0
        %2322 = vmatprep.subr.mxu0 %v2291
        %2323 = vmatpush1.msra.mxu0 %v2290
        %2324 = vmatprep.subr.mxu0 %v2283
        %2325 = vmatpush1.msra.mxu0 %v2282
        %2326 = vmatprep.subr.mxu0 %v2275
        %2327 = vmatpush1.msra.mxu0 %v2274
        %2328 = vmatprep.subr.mxu0 %v2267
        %2329 = vmatpush1.msra.mxu0 %v2266
        %2330 = vmatprep.subr.mxu0 0.0
        %2331 = vmatpush2.msra.mxu0 0.0
        %2332 = vmatprep.subr.mxu0 0.0
        %2333 = vmatpush2.msra.mxu0 0.0
        %2334 = vmatprep.subr.mxu0 0.0
        %2335 = vmatpush2.msra.mxu0 0.0
        %2336 = vmatprep.subr.mxu0 0.0
        %2337 = vmatpush2.msra.mxu0 0.0
        %2338 = vmatprep.subr.mxu0 0.0
        %2339 = vmatpush2.msra.mxu0 0.0
        %2340 = vmatprep.subr.mxu0 0.0
        %2341 = vmatpush2.msra.mxu0 0.0
        %2342 = vmatprep.subr.mxu0 0.0
        %2343 = vmatpush2.msra.mxu0 0.0
        %2344 = vmatprep.subr.mxu0 0.0
        %2345 = vmatpush2.msra.mxu0 0.0
        %2346 = vmatprep.subr.mxu0 0.0
        %2347 = vmatpush2.msra.mxu0 0.0
        %2348 = vmatprep.subr.mxu0 0.0
        %2349 = vmatpush2.msra.mxu0 0.0
        %2350 = vmatprep.subr.mxu0 0.0
        %2351 = vmatpush2.msra.mxu0 0.0
        %2352 = vmatprep.subr.mxu0 0.0
        %2353 = vmatpush2.msra.mxu0 0.0
        %2354 = vmatprep.subr.mxu0 0.0
        %2355 = vmatpush2.msra.mxu0 0.0
        %2356 = vmatprep.subr.mxu0 0.0
        %2357 = vmatpush2.msra.mxu0 0.0
        %2358 = vmatprep.subr.mxu0 0.0
        %2359 = vmatpush2.msra.mxu0 0.0
        %2360 = vmatprep.subr.mxu0 0.0
        %2361 = vmatpush2.msra.mxu0 0.0
        %2362 = vmatprep.mubr.f32.mxu0 0.0
        %2363 = vmatmul.mubr.f32.gmra.mxu0 %v881
        %v2364 = vpop.f32.mrf.mxu0
        %v2365 = vadd.f32 0.0, %v2364
        %v2366 = vpop.f32.mrf.mxu0
        %v2367 = vadd.f32 0.0, %v2366
        %2368 = vmatprep.mubr.f32.mxu0 0.0
        %2369 = vmatmul.mubr.f32.gmra.mxu0 %v884
        %v2370 = vpop.f32.mrf.mxu0
        %v2371 = vadd.f32 0.0, %v2370
        %v2372 = vpop.f32.mrf.mxu0
        %v2373 = vadd.f32 0.0, %v2372
        %2374 = vdwg.mxu0
        %2375 = vmatprep.subr.mxu0 0.0
        %2376 = vmatpush1.msra.mxu0 0.0
        %2377 = vmatprep.subr.mxu0 0.0
        %2378 = vmatpush1.msra.mxu0 0.0
        %2379 = vmatprep.subr.mxu0 0.0
        %2380 = vmatpush1.msra.mxu0 0.0
        %2381 = vmatprep.subr.mxu0 0.0
        %2382 = vmatpush1.msra.mxu0 0.0
        %2383 = vmatprep.subr.mxu0 0.0
        %2384 = vmatpush1.msra.mxu0 0.0
        %2385 = vmatprep.subr.mxu0 0.0
        %2386 = vmatpush1.msra.mxu0 0.0
        %2387 = vmatprep.subr.mxu0 0.0
        %2388 = vmatpush1.msra.mxu0 0.0
        %2389 = vmatprep.subr.mxu0 0.0
        %2390 = vmatpush1.msra.mxu0 0.0
        %2391 = vmatprep.subr.mxu0 0.0
        %2392 = vmatpush1.msra.mxu0 0.0
        %2393 = vmatprep.subr.mxu0 0.0
        %2394 = vmatpush1.msra.mxu0 0.0
        %2395 = vmatprep.subr.mxu0 0.0
        %2396 = vmatpush1.msra.mxu0 0.0
        %2397 = vmatprep.subr.mxu0 0.0
        %2398 = vmatpush1.msra.mxu0 0.0
        %2399 = vmatprep.subr.mxu0 %v2293
        %2400 = vmatpush1.msra.mxu0 %v2292
        %2401 = vmatprep.subr.mxu0 %v2285
        %2402 = vmatpush1.msra.mxu0 %v2284
        %2403 = vmatprep.subr.mxu0 %v2277
        %2404 = vmatpush1.msra.mxu0 %v2276
        %2405 = vmatprep.subr.mxu0 %v2269
        %2406 = vmatpush1.msra.mxu0 %v2268
        %2407 = vmatprep.subr.mxu0 0.0
        %2408 = vmatpush2.msra.mxu0 0.0
        %2409 = vmatprep.subr.mxu0 0.0
        %2410 = vmatpush2.msra.mxu0 0.0
        %2411 = vmatprep.subr.mxu0 0.0
        %2412 = vmatpush2.msra.mxu0 0.0
        %2413 = vmatprep.subr.mxu0 0.0
        %2414 = vmatpush2.msra.mxu0 0.0
        %2415 = vmatprep.subr.mxu0 0.0
        %2416 = vmatpush2.msra.mxu0 0.0
        %2417 = vmatprep.subr.mxu0 0.0
        %2418 = vmatpush2.msra.mxu0 0.0
        %2419 = vmatprep.subr.mxu0 0.0
        %2420 = vmatpush2.msra.mxu0 0.0
        %2421 = vmatprep.subr.mxu0 0.0
        %2422 = vmatpush2.msra.mxu0 0.0
        %2423 = vmatprep.subr.mxu0 0.0
        %2424 = vmatpush2.msra.mxu0 0.0
        %2425 = vmatprep.subr.mxu0 0.0
        %2426 = vmatpush2.msra.mxu0 0.0
        %2427 = vmatprep.subr.mxu0 0.0
        %2428 = vmatpush2.msra.mxu0 0.0
        %2429 = vmatprep.subr.mxu0 0.0
        %2430 = vmatpush2.msra.mxu0 0.0
        %2431 = vmatprep.subr.mxu0 0.0
        %2432 = vmatpush2.msra.mxu0 0.0
        %2433 = vmatprep.subr.mxu0 0.0
        %2434 = vmatpush2.msra.mxu0 0.0
        %2435 = vmatprep.subr.mxu0 0.0
        %2436 = vmatpush2.msra.mxu0 0.0
        %2437 = vmatprep.subr.mxu0 0.0
        %2438 = vmatpush2.msra.mxu0 0.0
        %2439 = vmatprep.mubr.f32.mxu0 0.0
        %2440 = vmatmul.mubr.f32.gmra.mxu0 %v881
        %v2441 = vpop.f32.mrf.mxu0
        %v2442 = vadd.f32 0.0, %v2441
        %v2443 = vpop.f32.mrf.mxu0
        %v2444 = vadd.f32 0.0, %v2443
        %2445 = vmatprep.mubr.f32.mxu0 0.0
        %2446 = vmatmul.mubr.f32.gmra.mxu0 %v884
        %v2447 = vpop.f32.mrf.mxu0
        %v2448 = vadd.f32 0.0, %v2447
        %v2449 = vpop.f32.mrf.mxu0
        %v2450 = vadd.f32 0.0, %v2449
        %2451 = vdwg.mxu0
        %2452 = vmatprep.subr.mxu0 0.0
        %2453 = vmatpush1.msra.mxu0 0.0
        %2454 = vmatprep.subr.mxu0 0.0
        %2455 = vmatpush1.msra.mxu0 0.0
        %2456 = vmatprep.subr.mxu0 0.0
        %2457 = vmatpush1.msra.mxu0 0.0
        %2458 = vmatprep.subr.mxu0 0.0
        %2459 = vmatpush1.msra.mxu0 0.0
        %2460 = vmatprep.subr.mxu0 0.0
        %2461 = vmatpush1.msra.mxu0 0.0
        %2462 = vmatprep.subr.mxu0 0.0
        %2463 = vmatpush1.msra.mxu0 0.0
        %2464 = vmatprep.subr.mxu0 0.0
        %2465 = vmatpush1.msra.mxu0 0.0
        %2466 = vmatprep.subr.mxu0 0.0
        %2467 = vmatpush1.msra.mxu0 0.0
        %2468 = vmatprep.subr.mxu0 0.0
        %2469 = vmatpush1.msra.mxu0 0.0
        %2470 = vmatprep.subr.mxu0 0.0
        %2471 = vmatpush1.msra.mxu0 0.0
        %2472 = vmatprep.subr.mxu0 0.0
        %2473 = vmatpush1.msra.mxu0 0.0
        %2474 = vmatprep.subr.mxu0 0.0
        %2475 = vmatpush1.msra.mxu0 0.0
        %2476 = vmatprep.subr.mxu0 %v2295
        %2477 = vmatpush1.msra.mxu0 %v2294
        %2478 = vmatprep.subr.mxu0 %v2287
        %2479 = vmatpush1.msra.mxu0 %v2286
        %2480 = vmatprep.subr.mxu0 %v2279
        %2481 = vmatpush1.msra.mxu0 %v2278
        %2482 = vmatprep.subr.mxu0 %v2271
        %2483 = vmatpush1.msra.mxu0 %v2270
        %2484 = vmatprep.subr.mxu0 0.0
        %2485 = vmatpush2.msra.mxu0 0.0
        %2486 = vmatprep.subr.mxu0 0.0
        %2487 = vmatpush2.msra.mxu0 0.0
        %2488 = vmatprep.subr.mxu0 0.0
        %2489 = vmatpush2.msra.mxu0 0.0
        %2490 = vmatprep.subr.mxu0 0.0
        %2491 = vmatpush2.msra.mxu0 0.0
        %2492 = vmatprep.subr.mxu0 0.0
        %2493 = vmatpush2.msra.mxu0 0.0
        %2494 = vmatprep.subr.mxu0 0.0
        %2495 = vmatpush2.msra.mxu0 0.0
        %2496 = vmatprep.subr.mxu0 0.0
        %2497 = vmatpush2.msra.mxu0 0.0
        %2498 = vmatprep.subr.mxu0 0.0
        %2499 = vmatpush2.msra.mxu0 0.0
        %2500 = vmatprep.subr.mxu0 0.0
        %2501 = vmatpush2.msra.mxu0 0.0
        %2502 = vmatprep.subr.mxu0 0.0
        %2503 = vmatpush2.msra.mxu0 0.0
        %2504 = vmatprep.subr.mxu0 0.0
        %2505 = vmatpush2.msra.mxu0 0.0
        %2506 = vmatprep.subr.mxu0 0.0
        %2507 = vmatpush2.msra.mxu0 0.0
        %2508 = vmatprep.subr.mxu0 0.0
        %2509 = vmatpush2.msra.mxu0 0.0
        %2510 = vmatprep.subr.mxu0 0.0
        %2511 = vmatpush2.msra.mxu0 0.0
        %2512 = vmatprep.subr.mxu0 0.0
        %2513 = vmatpush2.msra.mxu0 0.0
        %2514 = vmatprep.subr.mxu0 0.0
        %2515 = vmatpush2.msra.mxu0 0.0
        %2516 = vmatprep.mubr.f32.mxu0 0.0
        %2517 = vmatmul.mubr.f32.gmra.mxu0 %v881
        %v2518 = vpop.f32.mrf.mxu0
        %v2519 = vadd.f32 0.0, %v2518
        %v2520 = vpop.f32.mrf.mxu0
        %v2521 = vadd.f32 0.0, %v2520
        %2522 = vmatprep.mubr.f32.mxu0 0.0
        %2523 = vmatmul.mubr.f32.gmra.mxu0 %v884
        %v2524 = vpop.f32.mrf.mxu0
        %v2525 = vadd.f32 0.0, %v2524
        %v2526 = vpop.f32.mrf.mxu0
        %v2527 = vadd.f32 0.0, %v2526
        %2528 = vdwg.mxu0
        %2529 = vmatprep.subr.mxu0 0.0
        %2530 = vmatpush1.msra.mxu0 0.0
        %2531 = vmatprep.subr.mxu0 0.0
        %2532 = vmatpush1.msra.mxu0 0.0
        %2533 = vmatprep.subr.mxu0 0.0
        %2534 = vmatpush1.msra.mxu0 0.0
        %2535 = vmatprep.subr.mxu0 0.0
        %2536 = vmatpush1.msra.mxu0 0.0
        %2537 = vmatprep.subr.mxu0 0.0
        %2538 = vmatpush1.msra.mxu0 0.0
        %2539 = vmatprep.subr.mxu0 0.0
        %2540 = vmatpush1.msra.mxu0 0.0
        %2541 = vmatprep.subr.mxu0 0.0
        %2542 = vmatpush1.msra.mxu0 0.0
        %2543 = vmatprep.subr.mxu0 0.0
        %2544 = vmatpush1.msra.mxu0 0.0
        %2545 = vmatprep.subr.mxu0 0.0
        %2546 = vmatpush1.msra.mxu0 0.0
        %2547 = vmatprep.subr.mxu0 0.0
        %2548 = vmatpush1.msra.mxu0 0.0
        %2549 = vmatprep.subr.mxu0 0.0
        %2550 = vmatpush1.msra.mxu0 0.0
        %2551 = vmatprep.subr.mxu0 0.0
        %2552 = vmatpush1.msra.mxu0 0.0
        %2553 = vmatprep.subr.mxu0 %v2297
        %2554 = vmatpush1.msra.mxu0 %v2296
        %2555 = vmatprep.subr.mxu0 %v2289
        %2556 = vmatpush1.msra.mxu0 %v2288
        %2557 = vmatprep.subr.mxu0 %v2281
        %2558 = vmatpush1.msra.mxu0 %v2280
        %2559 = vmatprep.subr.mxu0 %v2273
        %2560 = vmatpush1.msra.mxu0 %v2272
        %2561 = vmatprep.subr.mxu0 0.0
        %2562 = vmatpush2.msra.mxu0 0.0
        %2563 = vmatprep.subr.mxu0 0.0
        %2564 = vmatpush2.msra.mxu0 0.0
        %2565 = vmatprep.subr.mxu0 0.0
        %2566 = vmatpush2.msra.mxu0 0.0
        %2567 = vmatprep.subr.mxu0 0.0
        %2568 = vmatpush2.msra.mxu0 0.0
        %2569 = vmatprep.subr.mxu0 0.0
        %2570 = vmatpush2.msra.mxu0 0.0
        %2571 = vmatprep.subr.mxu0 0.0
        %2572 = vmatpush2.msra.mxu0 0.0
        %2573 = vmatprep.subr.mxu0 0.0
        %2574 = vmatpush2.msra.mxu0 0.0
        %2575 = vmatprep.subr.mxu0 0.0
        %2576 = vmatpush2.msra.mxu0 0.0
        %2577 = vmatprep.subr.mxu0 0.0
        %2578 = vmatpush2.msra.mxu0 0.0
        %2579 = vmatprep.subr.mxu0 0.0
        %2580 = vmatpush2.msra.mxu0 0.0
        %2581 = vmatprep.subr.mxu0 0.0
        %2582 = vmatpush2.msra.mxu0 0.0
        %2583 = vmatprep.subr.mxu0 0.0
        %2584 = vmatpush2.msra.mxu0 0.0
        %2585 = vmatprep.subr.mxu0 0.0
        %2586 = vmatpush2.msra.mxu0 0.0
        %2587 = vmatprep.subr.mxu0 0.0
        %2588 = vmatpush2.msra.mxu0 0.0
        %2589 = vmatprep.subr.mxu0 0.0
        %2590 = vmatpush2.msra.mxu0 0.0
        %2591 = vmatprep.subr.mxu0 0.0
        %2592 = vmatpush2.msra.mxu0 0.0
        %2593 = vmatprep.mubr.f32.mxu0 0.0
        %2594 = vmatmul.mubr.f32.gmra.mxu0 %v881
        %v2595 = vpop.f32.mrf.mxu0
        %v2596 = vadd.f32 0.0, %v2595
        %v2597 = vpop.f32.mrf.mxu0
        %v2598 = vadd.f32 0.0, %v2597
        %2599 = vmatprep.mubr.f32.mxu0 0.0
        %2600 = vmatmul.mubr.f32.gmra.mxu0 %v884
        %v2601 = vpop.f32.mrf.mxu0
        %v2602 = vadd.f32 0.0, %v2601
        %v2603 = vpop.f32.mrf.mxu0
        %v2604 = vadd.f32 0.0, %v2603
        %2605 = vdwg.mxu0
        %v2606 = vmax.f32 %v2249, %v2365
        %v2607 = vmax.f32 %v2250, %v2367
        %v2608 = vmax.f32 %v2251, %v2442
        %v2609 = vmax.f32 %v2252, %v2444
        %v2610 = vmax.f32 %v2253, %v2519
        %v2611 = vmax.f32 %v2254, %v2521
        %v2612 = vmax.f32 %v2255, %v2596
        %v2613 = vmax.f32 %v2256, %v2598
        %v2614 = vmax.f32 %v2257, %v2371
        %v2615 = vmax.f32 %v2258, %v2373
        %v2616 = vmax.f32 %v2259, %v2448
        %v2617 = vmax.f32 %v2260, %v2450
        %v2618 = vmax.f32 %v2261, %v2525
        %v2619 = vmax.f32 %v2262, %v2527
        %v2620 = vmax.f32 %v2263, %v2602
        %v2621 = vmax.f32 %v2264, %v2604
        %s2622 = scalar_lea.vmem %s816, 1280 [#allocation3]
        %v2623 = vld [vmem:[%s2622] sm:$0xff]
        %v2624 = vld [vmem:[%s2622 + $0x8] sm:$0xff]
        %v2625 = vld [vmem:[%s2622 + $0x10] sm:$0xff]
        %v2626 = vld [vmem:[%s2622 + $0x18] sm:$0xff]
        %v2627 = vld [vmem:[%s2622 + $0x20] sm:$0xff]
        %v2628 = vld [vmem:[%s2622 + $0x28] sm:$0xff]
        %v2629 = vld [vmem:[%s2622 + $0x30] sm:$0xff]
        %v2630 = vld [vmem:[%s2622 + $0x38] sm:$0xff]
        %v2631 = vld [vmem:[%s2622 + $0x40] sm:$0xff]
        %v2632 = vld [vmem:[%s2622 + $0x48] sm:$0xff]
        %v2633 = vld [vmem:[%s2622 + $0x50] sm:$0xff]
        %v2634 = vld [vmem:[%s2622 + $0x58] sm:$0xff]
        %v2635 = vld [vmem:[%s2622 + $0x60] sm:$0xff]
        %v2636 = vld [vmem:[%s2622 + $0x68] sm:$0xff]
        %v2637 = vld [vmem:[%s2622 + $0x70] sm:$0xff]
        %v2638 = vld [vmem:[%s2622 + $0x78] sm:$0xff]
        %v2639 = vld [vmem:[%s2622 + $0x80] sm:$0xff]
        %v2640 = vld [vmem:[%s2622 + $0x88] sm:$0xff]
        %v2641 = vld [vmem:[%s2622 + $0x90] sm:$0xff]
        %v2642 = vld [vmem:[%s2622 + $0x98] sm:$0xff]
        %v2643 = vld [vmem:[%s2622 + $0xa0] sm:$0xff]
        %v2644 = vld [vmem:[%s2622 + $0xa8] sm:$0xff]
        %v2645 = vld [vmem:[%s2622 + $0xb0] sm:$0xff]
        %v2646 = vld [vmem:[%s2622 + $0xb8] sm:$0xff]
        %v2647 = vld [vmem:[%s2622 + $0xc0] sm:$0xff]
        %v2648 = vld [vmem:[%s2622 + $0xc8] sm:$0xff]
        %v2649 = vld [vmem:[%s2622 + $0xd0] sm:$0xff]
        %v2650 = vld [vmem:[%s2622 + $0xd8] sm:$0xff]
        %v2651 = vld [vmem:[%s2622 + $0xe0] sm:$0xff]
        %v2652 = vld [vmem:[%s2622 + $0xe8] sm:$0xff]
        %v2653 = vld [vmem:[%s2622 + $0xf0] sm:$0xff]
        %v2654 = vld [vmem:[%s2622 + $0xf8] sm:$0xff]
        %2655 = vmatprep.subr.mxu0 0.0
        %2656 = vmatpush1.msra.mxu0 0.0
        %2657 = vmatprep.subr.mxu0 0.0
        %2658 = vmatpush1.msra.mxu0 0.0
        %2659 = vmatprep.subr.mxu0 0.0
        %2660 = vmatpush1.msra.mxu0 0.0
        %2661 = vmatprep.subr.mxu0 0.0
        %2662 = vmatpush1.msra.mxu0 0.0
        %2663 = vmatprep.subr.mxu0 0.0
        %2664 = vmatpush1.msra.mxu0 0.0
        %2665 = vmatprep.subr.mxu0 0.0
        %2666 = vmatpush1.msra.mxu0 0.0
        %2667 = vmatprep.subr.mxu0 0.0
        %2668 = vmatpush1.msra.mxu0 0.0
        %2669 = vmatprep.subr.mxu0 0.0
        %2670 = vmatpush1.msra.mxu0 0.0
        %2671 = vmatprep.subr.mxu0 0.0
        %2672 = vmatpush1.msra.mxu0 0.0
        %2673 = vmatprep.subr.mxu0 0.0
        %2674 = vmatpush1.msra.mxu0 0.0
        %2675 = vmatprep.subr.mxu0 0.0
        %2676 = vmatpush1.msra.mxu0 0.0
        %2677 = vmatprep.subr.mxu0 0.0
        %2678 = vmatpush1.msra.mxu0 0.0
        %2679 = vmatprep.subr.mxu0 %v2648
        %2680 = vmatpush1.msra.mxu0 %v2647
        %2681 = vmatprep.subr.mxu0 %v2640
        %2682 = vmatpush1.msra.mxu0 %v2639
        %2683 = vmatprep.subr.mxu0 %v2632
        %2684 = vmatpush1.msra.mxu0 %v2631
        %2685 = vmatprep.subr.mxu0 %v2624
        %2686 = vmatpush1.msra.mxu0 %v2623
        %2687 = vmatprep.subr.mxu0 0.0
        %2688 = vmatpush2.msra.mxu0 0.0
        %2689 = vmatprep.subr.mxu0 0.0
        %2690 = vmatpush2.msra.mxu0 0.0
        %2691 = vmatprep.subr.mxu0 0.0
        %2692 = vmatpush2.msra.mxu0 0.0
        %2693 = vmatprep.subr.mxu0 0.0
        %2694 = vmatpush2.msra.mxu0 0.0
        %2695 = vmatprep.subr.mxu0 0.0
        %2696 = vmatpush2.msra.mxu0 0.0
        %2697 = vmatprep.subr.mxu0 0.0
        %2698 = vmatpush2.msra.mxu0 0.0
        %2699 = vmatprep.subr.mxu0 0.0
        %2700 = vmatpush2.msra.mxu0 0.0
        %2701 = vmatprep.subr.mxu0 0.0
        %2702 = vmatpush2.msra.mxu0 0.0
        %2703 = vmatprep.subr.mxu0 0.0
        %2704 = vmatpush2.msra.mxu0 0.0
        %2705 = vmatprep.subr.mxu0 0.0
        %2706 = vmatpush2.msra.mxu0 0.0
        %2707 = vmatprep.subr.mxu0 0.0
        %2708 = vmatpush2.msra.mxu0 0.0
        %2709 = vmatprep.subr.mxu0 0.0
        %2710 = vmatpush2.msra.mxu0 0.0
        %2711 = vmatprep.subr.mxu0 0.0
        %2712 = vmatpush2.msra.mxu0 0.0
        %2713 = vmatprep.subr.mxu0 0.0
        %2714 = vmatpush2.msra.mxu0 0.0
        %2715 = vmatprep.subr.mxu0 0.0
        %2716 = vmatpush2.msra.mxu0 0.0
        %2717 = vmatprep.subr.mxu0 0.0
        %2718 = vmatpush2.msra.mxu0 0.0
        %2719 = vmatprep.mubr.f32.mxu0 0.0
        %2720 = vmatmul.mubr.f32.gmra.mxu0 %v881
        %v2721 = vpop.f32.mrf.mxu0
        %v2722 = vadd.f32 0.0, %v2721
        %v2723 = vpop.f32.mrf.mxu0
        %v2724 = vadd.f32 0.0, %v2723
        %2725 = vmatprep.mubr.f32.mxu0 0.0
        %2726 = vmatmul.mubr.f32.gmra.mxu0 %v884
        %v2727 = vpop.f32.mrf.mxu0
        %v2728 = vadd.f32 0.0, %v2727
        %v2729 = vpop.f32.mrf.mxu0
        %v2730 = vadd.f32 0.0, %v2729
        %2731 = vdwg.mxu0
        %2732 = vmatprep.subr.mxu0 0.0
        %2733 = vmatpush1.msra.mxu0 0.0
        %2734 = vmatprep.subr.mxu0 0.0
        %2735 = vmatpush1.msra.mxu0 0.0
        %2736 = vmatprep.subr.mxu0 0.0
        %2737 = vmatpush1.msra.mxu0 0.0
        %2738 = vmatprep.subr.mxu0 0.0
        %2739 = vmatpush1.msra.mxu0 0.0
        %2740 = vmatprep.subr.mxu0 0.0
        %2741 = vmatpush1.msra.mxu0 0.0
        %2742 = vmatprep.subr.mxu0 0.0
        %2743 = vmatpush1.msra.mxu0 0.0
        %2744 = vmatprep.subr.mxu0 0.0
        %2745 = vmatpush1.msra.mxu0 0.0
        %2746 = vmatprep.subr.mxu0 0.0
        %2747 = vmatpush1.msra.mxu0 0.0
        %2748 = vmatprep.subr.mxu0 0.0
        %2749 = vmatpush1.msra.mxu0 0.0
        %2750 = vmatprep.subr.mxu0 0.0
        %2751 = vmatpush1.msra.mxu0 0.0
        %2752 = vmatprep.subr.mxu0 0.0
        %2753 = vmatpush1.msra.mxu0 0.0
        %2754 = vmatprep.subr.mxu0 0.0
        %2755 = vmatpush1.msra.mxu0 0.0
        %2756 = vmatprep.subr.mxu0 %v2650
        %2757 = vmatpush1.msra.mxu0 %v2649
        %2758 = vmatprep.subr.mxu0 %v2642
        %2759 = vmatpush1.msra.mxu0 %v2641
        %2760 = vmatprep.subr.mxu0 %v2634
        %2761 = vmatpush1.msra.mxu0 %v2633
        %2762 = vmatprep.subr.mxu0 %v2626
        %2763 = vmatpush1.msra.mxu0 %v2625
        %2764 = vmatprep.subr.mxu0 0.0
        %2765 = vmatpush2.msra.mxu0 0.0
        %2766 = vmatprep.subr.mxu0 0.0
        %2767 = vmatpush2.msra.mxu0 0.0
        %2768 = vmatprep.subr.mxu0 0.0
        %2769 = vmatpush2.msra.mxu0 0.0
        %2770 = vmatprep.subr.mxu0 0.0
        %2771 = vmatpush2.msra.mxu0 0.0
        %2772 = vmatprep.subr.mxu0 0.0
        %2773 = vmatpush2.msra.mxu0 0.0
        %2774 = vmatprep.subr.mxu0 0.0
        %2775 = vmatpush2.msra.mxu0 0.0
        %2776 = vmatprep.subr.mxu0 0.0
        %2777 = vmatpush2.msra.mxu0 0.0
        %2778 = vmatprep.subr.mxu0 0.0
        %2779 = vmatpush2.msra.mxu0 0.0
        %2780 = vmatprep.subr.mxu0 0.0
        %2781 = vmatpush2.msra.mxu0 0.0
        %2782 = vmatprep.subr.mxu0 0.0
        %2783 = vmatpush2.msra.mxu0 0.0
        %2784 = vmatprep.subr.mxu0 0.0
        %2785 = vmatpush2.msra.mxu0 0.0
        %2786 = vmatprep.subr.mxu0 0.0
        %2787 = vmatpush2.msra.mxu0 0.0
        %2788 = vmatprep.subr.mxu0 0.0
        %2789 = vmatpush2.msra.mxu0 0.0
        %2790 = vmatprep.subr.mxu0 0.0
        %2791 = vmatpush2.msra.mxu0 0.0
        %2792 = vmatprep.subr.mxu0 0.0
        %2793 = vmatpush2.msra.mxu0 0.0
        %2794 = vmatprep.subr.mxu0 0.0
        %2795 = vmatpush2.msra.mxu0 0.0
        %2796 = vmatprep.mubr.f32.mxu0 0.0
        %2797 = vmatmul.mubr.f32.gmra.mxu0 %v881
        %v2798 = vpop.f32.mrf.mxu0
        %v2799 = vadd.f32 0.0, %v2798
        %v2800 = vpop.f32.mrf.mxu0
        %v2801 = vadd.f32 0.0, %v2800
        %2802 = vmatprep.mubr.f32.mxu0 0.0
        %2803 = vmatmul.mubr.f32.gmra.mxu0 %v884
        %v2804 = vpop.f32.mrf.mxu0
        %v2805 = vadd.f32 0.0, %v2804
        %v2806 = vpop.f32.mrf.mxu0
        %v2807 = vadd.f32 0.0, %v2806
        %2808 = vdwg.mxu0
        %2809 = vmatprep.subr.mxu0 0.0
        %2810 = vmatpush1.msra.mxu0 0.0
        %2811 = vmatprep.subr.mxu0 0.0
        %2812 = vmatpush1.msra.mxu0 0.0
        %2813 = vmatprep.subr.mxu0 0.0
        %2814 = vmatpush1.msra.mxu0 0.0
        %2815 = vmatprep.subr.mxu0 0.0
        %2816 = vmatpush1.msra.mxu0 0.0
        %2817 = vmatprep.subr.mxu0 0.0
        %2818 = vmatpush1.msra.mxu0 0.0
        %2819 = vmatprep.subr.mxu0 0.0
        %2820 = vmatpush1.msra.mxu0 0.0
        %2821 = vmatprep.subr.mxu0 0.0
        %2822 = vmatpush1.msra.mxu0 0.0
        %2823 = vmatprep.subr.mxu0 0.0
        %2824 = vmatpush1.msra.mxu0 0.0
        %2825 = vmatprep.subr.mxu0 0.0
        %2826 = vmatpush1.msra.mxu0 0.0
        %2827 = vmatprep.subr.mxu0 0.0
        %2828 = vmatpush1.msra.mxu0 0.0
        %2829 = vmatprep.subr.mxu0 0.0
        %2830 = vmatpush1.msra.mxu0 0.0
        %2831 = vmatprep.subr.mxu0 0.0
        %2832 = vmatpush1.msra.mxu0 0.0
        %2833 = vmatprep.subr.mxu0 %v2652
        %2834 = vmatpush1.msra.mxu0 %v2651
        %2835 = vmatprep.subr.mxu0 %v2644
        %2836 = vmatpush1.msra.mxu0 %v2643
        %2837 = vmatprep.subr.mxu0 %v2636
        %2838 = vmatpush1.msra.mxu0 %v2635
        %2839 = vmatprep.subr.mxu0 %v2628
        %2840 = vmatpush1.msra.mxu0 %v2627
        %2841 = vmatprep.subr.mxu0 0.0
        %2842 = vmatpush2.msra.mxu0 0.0
        %2843 = vmatprep.subr.mxu0 0.0
        %2844 = vmatpush2.msra.mxu0 0.0
        %2845 = vmatprep.subr.mxu0 0.0
        %2846 = vmatpush2.msra.mxu0 0.0
        %2847 = vmatprep.subr.mxu0 0.0
        %2848 = vmatpush2.msra.mxu0 0.0
        %2849 = vmatprep.subr.mxu0 0.0
        %2850 = vmatpush2.msra.mxu0 0.0
        %2851 = vmatprep.subr.mxu0 0.0
        %2852 = vmatpush2.msra.mxu0 0.0
        %2853 = vmatprep.subr.mxu0 0.0
        %2854 = vmatpush2.msra.mxu0 0.0
        %2855 = vmatprep.subr.mxu0 0.0
        %2856 = vmatpush2.msra.mxu0 0.0
        %2857 = vmatprep.subr.mxu0 0.0
        %2858 = vmatpush2.msra.mxu0 0.0
        %2859 = vmatprep.subr.mxu0 0.0
        %2860 = vmatpush2.msra.mxu0 0.0
        %2861 = vmatprep.subr.mxu0 0.0
        %2862 = vmatpush2.msra.mxu0 0.0
        %2863 = vmatprep.subr.mxu0 0.0
        %2864 = vmatpush2.msra.mxu0 0.0
        %2865 = vmatprep.subr.mxu0 0.0
        %2866 = vmatpush2.msra.mxu0 0.0
        %2867 = vmatprep.subr.mxu0 0.0
        %2868 = vmatpush2.msra.mxu0 0.0
        %2869 = vmatprep.subr.mxu0 0.0
        %2870 = vmatpush2.msra.mxu0 0.0
        %2871 = vmatprep.subr.mxu0 0.0
        %2872 = vmatpush2.msra.mxu0 0.0
        %2873 = vmatprep.mubr.f32.mxu0 0.0
        %2874 = vmatmul.mubr.f32.gmra.mxu0 %v881
        %v2875 = vpop.f32.mrf.mxu0
        %v2876 = vadd.f32 0.0, %v2875
        %v2877 = vpop.f32.mrf.mxu0
        %v2878 = vadd.f32 0.0, %v2877
        %2879 = vmatprep.mubr.f32.mxu0 0.0
        %2880 = vmatmul.mubr.f32.gmra.mxu0 %v884
        %v2881 = vpop.f32.mrf.mxu0
        %v2882 = vadd.f32 0.0, %v2881
        %v2883 = vpop.f32.mrf.mxu0
        %v2884 = vadd.f32 0.0, %v2883
        %2885 = vdwg.mxu0
        %2886 = vmatprep.subr.mxu0 0.0
        %2887 = vmatpush1.msra.mxu0 0.0
        %2888 = vmatprep.subr.mxu0 0.0
        %2889 = vmatpush1.msra.mxu0 0.0
        %2890 = vmatprep.subr.mxu0 0.0
        %2891 = vmatpush1.msra.mxu0 0.0
        %2892 = vmatprep.subr.mxu0 0.0
        %2893 = vmatpush1.msra.mxu0 0.0
        %2894 = vmatprep.subr.mxu0 0.0
        %2895 = vmatpush1.msra.mxu0 0.0
        %2896 = vmatprep.subr.mxu0 0.0
        %2897 = vmatpush1.msra.mxu0 0.0
        %2898 = vmatprep.subr.mxu0 0.0
        %2899 = vmatpush1.msra.mxu0 0.0
        %2900 = vmatprep.subr.mxu0 0.0
        %2901 = vmatpush1.msra.mxu0 0.0
        %2902 = vmatprep.subr.mxu0 0.0
        %2903 = vmatpush1.msra.mxu0 0.0
        %2904 = vmatprep.subr.mxu0 0.0
        %2905 = vmatpush1.msra.mxu0 0.0
        %2906 = vmatprep.subr.mxu0 0.0
        %2907 = vmatpush1.msra.mxu0 0.0
        %2908 = vmatprep.subr.mxu0 0.0
        %2909 = vmatpush1.msra.mxu0 0.0
        %2910 = vmatprep.subr.mxu0 %v2654
        %2911 = vmatpush1.msra.mxu0 %v2653
        %2912 = vmatprep.subr.mxu0 %v2646
        %2913 = vmatpush1.msra.mxu0 %v2645
        %2914 = vmatprep.subr.mxu0 %v2638
        %2915 = vmatpush1.msra.mxu0 %v2637
        %2916 = vmatprep.subr.mxu0 %v2630
        %2917 = vmatpush1.msra.mxu0 %v2629
        %2918 = vmatprep.subr.mxu0 0.0
        %2919 = vmatpush2.msra.mxu0 0.0
        %2920 = vmatprep.subr.mxu0 0.0
        %2921 = vmatpush2.msra.mxu0 0.0
        %2922 = vmatprep.subr.mxu0 0.0
        %2923 = vmatpush2.msra.mxu0 0.0
        %2924 = vmatprep.subr.mxu0 0.0
        %2925 = vmatpush2.msra.mxu0 0.0
        %2926 = vmatprep.subr.mxu0 0.0
        %2927 = vmatpush2.msra.mxu0 0.0
        %2928 = vmatprep.subr.mxu0 0.0
        %2929 = vmatpush2.msra.mxu0 0.0
        %2930 = vmatprep.subr.mxu0 0.0
        %2931 = vmatpush2.msra.mxu0 0.0
        %2932 = vmatprep.subr.mxu0 0.0
        %2933 = vmatpush2.msra.mxu0 0.0
        %2934 = vmatprep.subr.mxu0 0.0
        %2935 = vmatpush2.msra.mxu0 0.0
        %2936 = vmatprep.subr.mxu0 0.0
        %2937 = vmatpush2.msra.mxu0 0.0
        %2938 = vmatprep.subr.mxu0 0.0
        %2939 = vmatpush2.msra.mxu0 0.0
        %2940 = vmatprep.subr.mxu0 0.0
        %2941 = vmatpush2.msra.mxu0 0.0
        %2942 = vmatprep.subr.mxu0 0.0
        %2943 = vmatpush2.msra.mxu0 0.0
        %2944 = vmatprep.subr.mxu0 0.0
        %2945 = vmatpush2.msra.mxu0 0.0
        %2946 = vmatprep.subr.mxu0 0.0
        %2947 = vmatpush2.msra.mxu0 0.0
        %2948 = vmatprep.subr.mxu0 0.0
        %2949 = vmatpush2.msra.mxu0 0.0
        %2950 = vmatprep.mubr.f32.mxu0 0.0
        %2951 = vmatmul.mubr.f32.gmra.mxu0 %v881
        %v2952 = vpop.f32.mrf.mxu0
        %v2953 = vadd.f32 0.0, %v2952
        %v2954 = vpop.f32.mrf.mxu0
        %v2955 = vadd.f32 0.0, %v2954
        %2956 = vmatprep.mubr.f32.mxu0 0.0
        %2957 = vmatmul.mubr.f32.gmra.mxu0 %v884
        %v2958 = vpop.f32.mrf.mxu0
        %v2959 = vadd.f32 0.0, %v2958
        %v2960 = vpop.f32.mrf.mxu0
        %v2961 = vadd.f32 0.0, %v2960
        %2962 = vdwg.mxu0
        %v2963 = vmax.f32 %v2606, %v2722
        %v2964 = vmax.f32 %v2607, %v2724
        %v2965 = vmax.f32 %v2608, %v2799
        %v2966 = vmax.f32 %v2609, %v2801
        %v2967 = vmax.f32 %v2610, %v2876
        %v2968 = vmax.f32 %v2611, %v2878
        %v2969 = vmax.f32 %v2612, %v2953
        %v2970 = vmax.f32 %v2613, %v2955
        %v2971 = vmax.f32 %v2614, %v2728
        %v2972 = vmax.f32 %v2615, %v2730
        %v2973 = vmax.f32 %v2616, %v2805
        %v2974 = vmax.f32 %v2617, %v2807
        %v2975 = vmax.f32 %v2618, %v2882
        %v2976 = vmax.f32 %v2619, %v2884
        %v2977 = vmax.f32 %v2620, %v2959
        %v2978 = vmax.f32 %v2621, %v2961
        %s2979 = scalar_lea.vmem %s816, 1536 [#allocation3]
        %v2980 = vld [vmem:[%s2979] sm:$0xff]
        %v2981 = vld [vmem:[%s2979 + $0x8] sm:$0xff]
        %v2982 = vld [vmem:[%s2979 + $0x10] sm:$0xff]
        %v2983 = vld [vmem:[%s2979 + $0x18] sm:$0xff]
        %v2984 = vld [vmem:[%s2979 + $0x20] sm:$0xff]
        %v2985 = vld [vmem:[%s2979 + $0x28] sm:$0xff]
        %v2986 = vld [vmem:[%s2979 + $0x30] sm:$0xff]
        %v2987 = vld [vmem:[%s2979 + $0x38] sm:$0xff]
        %v2988 = vld [vmem:[%s2979 + $0x40] sm:$0xff]
        %v2989 = vld [vmem:[%s2979 + $0x48] sm:$0xff]
        %v2990 = vld [vmem:[%s2979 + $0x50] sm:$0xff]
        %v2991 = vld [vmem:[%s2979 + $0x58] sm:$0xff]
        %v2992 = vld [vmem:[%s2979 + $0x60] sm:$0xff]
        %v2993 = vld [vmem:[%s2979 + $0x68] sm:$0xff]
        %v2994 = vld [vmem:[%s2979 + $0x70] sm:$0xff]
        %v2995 = vld [vmem:[%s2979 + $0x78] sm:$0xff]
        %v2996 = vld [vmem:[%s2979 + $0x80] sm:$0xff]
        %v2997 = vld [vmem:[%s2979 + $0x88] sm:$0xff]
        %v2998 = vld [vmem:[%s2979 + $0x90] sm:$0xff]
        %v2999 = vld [vmem:[%s2979 + $0x98] sm:$0xff]
        %v3000 = vld [vmem:[%s2979 + $0xa0] sm:$0xff]
        %v3001 = vld [vmem:[%s2979 + $0xa8] sm:$0xff]
        %v3002 = vld [vmem:[%s2979 + $0xb0] sm:$0xff]
        %v3003 = vld [vmem:[%s2979 + $0xb8] sm:$0xff]
        %v3004 = vld [vmem:[%s2979 + $0xc0] sm:$0xff]
        %v3005 = vld [vmem:[%s2979 + $0xc8] sm:$0xff]
        %v3006 = vld [vmem:[%s2979 + $0xd0] sm:$0xff]
        %v3007 = vld [vmem:[%s2979 + $0xd8] sm:$0xff]
        %v3008 = vld [vmem:[%s2979 + $0xe0] sm:$0xff]
        %v3009 = vld [vmem:[%s2979 + $0xe8] sm:$0xff]
        %v3010 = vld [vmem:[%s2979 + $0xf0] sm:$0xff]
        %v3011 = vld [vmem:[%s2979 + $0xf8] sm:$0xff]
        %3012 = vmatprep.subr.mxu0 0.0
        %3013 = vmatpush1.msra.mxu0 0.0
        %3014 = vmatprep.subr.mxu0 0.0
        %3015 = vmatpush1.msra.mxu0 0.0
        %3016 = vmatprep.subr.mxu0 0.0
        %3017 = vmatpush1.msra.mxu0 0.0
        %3018 = vmatprep.subr.mxu0 0.0
        %3019 = vmatpush1.msra.mxu0 0.0
        %3020 = vmatprep.subr.mxu0 0.0
        %3021 = vmatpush1.msra.mxu0 0.0
        %3022 = vmatprep.subr.mxu0 0.0
        %3023 = vmatpush1.msra.mxu0 0.0
        %3024 = vmatprep.subr.mxu0 0.0
        %3025 = vmatpush1.msra.mxu0 0.0
        %3026 = vmatprep.subr.mxu0 0.0
        %3027 = vmatpush1.msra.mxu0 0.0
        %3028 = vmatprep.subr.mxu0 0.0
        %3029 = vmatpush1.msra.mxu0 0.0
        %3030 = vmatprep.subr.mxu0 0.0
        %3031 = vmatpush1.msra.mxu0 0.0
        %3032 = vmatprep.subr.mxu0 0.0
        %3033 = vmatpush1.msra.mxu0 0.0
        %3034 = vmatprep.subr.mxu0 0.0
        %3035 = vmatpush1.msra.mxu0 0.0
        %3036 = vmatprep.subr.mxu0 %v3005
        %3037 = vmatpush1.msra.mxu0 %v3004
        %3038 = vmatprep.subr.mxu0 %v2997
        %3039 = vmatpush1.msra.mxu0 %v2996
        %3040 = vmatprep.subr.mxu0 %v2989
        %3041 = vmatpush1.msra.mxu0 %v2988
        %3042 = vmatprep.subr.mxu0 %v2981
        %3043 = vmatpush1.msra.mxu0 %v2980
        %3044 = vmatprep.subr.mxu0 0.0
        %3045 = vmatpush2.msra.mxu0 0.0
        %3046 = vmatprep.subr.mxu0 0.0
        %3047 = vmatpush2.msra.mxu0 0.0
        %3048 = vmatprep.subr.mxu0 0.0
        %3049 = vmatpush2.msra.mxu0 0.0
        %3050 = vmatprep.subr.mxu0 0.0
        %3051 = vmatpush2.msra.mxu0 0.0
        %3052 = vmatprep.subr.mxu0 0.0
        %3053 = vmatpush2.msra.mxu0 0.0
        %3054 = vmatprep.subr.mxu0 0.0
        %3055 = vmatpush2.msra.mxu0 0.0
        %3056 = vmatprep.subr.mxu0 0.0
        %3057 = vmatpush2.msra.mxu0 0.0
        %3058 = vmatprep.subr.mxu0 0.0
        %3059 = vmatpush2.msra.mxu0 0.0
        %3060 = vmatprep.subr.mxu0 0.0
        %3061 = vmatpush2.msra.mxu0 0.0
        %3062 = vmatprep.subr.mxu0 0.0
        %3063 = vmatpush2.msra.mxu0 0.0
        %3064 = vmatprep.subr.mxu0 0.0
        %3065 = vmatpush2.msra.mxu0 0.0
        %3066 = vmatprep.subr.mxu0 0.0
        %3067 = vmatpush2.msra.mxu0 0.0
        %3068 = vmatprep.subr.mxu0 0.0
        %3069 = vmatpush2.msra.mxu0 0.0
        %3070 = vmatprep.subr.mxu0 0.0
        %3071 = vmatpush2.msra.mxu0 0.0
        %3072 = vmatprep.subr.mxu0 0.0
        %3073 = vmatpush2.msra.mxu0 0.0
        %3074 = vmatprep.subr.mxu0 0.0
        %3075 = vmatpush2.msra.mxu0 0.0
        %3076 = vmatprep.mubr.f32.mxu0 0.0
        %3077 = vmatmul.mubr.f32.gmra.mxu0 %v881
        %v3078 = vpop.f32.mrf.mxu0
        %v3079 = vadd.f32 0.0, %v3078
        %v3080 = vpop.f32.mrf.mxu0
        %v3081 = vadd.f32 0.0, %v3080
        %3082 = vmatprep.mubr.f32.mxu0 0.0
        %3083 = vmatmul.mubr.f32.gmra.mxu0 %v884
        %v3084 = vpop.f32.mrf.mxu0
        %v3085 = vadd.f32 0.0, %v3084
        %v3086 = vpop.f32.mrf.mxu0
        %v3087 = vadd.f32 0.0, %v3086
        %3088 = vdwg.mxu0
        %3089 = vmatprep.subr.mxu0 0.0
        %3090 = vmatpush1.msra.mxu0 0.0
        %3091 = vmatprep.subr.mxu0 0.0
        %3092 = vmatpush1.msra.mxu0 0.0
        %3093 = vmatprep.subr.mxu0 0.0
        %3094 = vmatpush1.msra.mxu0 0.0
        %3095 = vmatprep.subr.mxu0 0.0
        %3096 = vmatpush1.msra.mxu0 0.0
        %3097 = vmatprep.subr.mxu0 0.0
        %3098 = vmatpush1.msra.mxu0 0.0
        %3099 = vmatprep.subr.mxu0 0.0
        %3100 = vmatpush1.msra.mxu0 0.0
        %3101 = vmatprep.subr.mxu0 0.0
        %3102 = vmatpush1.msra.mxu0 0.0
        %3103 = vmatprep.subr.mxu0 0.0
        %3104 = vmatpush1.msra.mxu0 0.0
        %3105 = vmatprep.subr.mxu0 0.0
        %3106 = vmatpush1.msra.mxu0 0.0
        %3107 = vmatprep.subr.mxu0 0.0
        %3108 = vmatpush1.msra.mxu0 0.0
        %3109 = vmatprep.subr.mxu0 0.0
        %3110 = vmatpush1.msra.mxu0 0.0
        %3111 = vmatprep.subr.mxu0 0.0
        %3112 = vmatpush1.msra.mxu0 0.0
        %3113 = vmatprep.subr.mxu0 %v3007
        %3114 = vmatpush1.msra.mxu0 %v3006
        %3115 = vmatprep.subr.mxu0 %v2999
        %3116 = vmatpush1.msra.mxu0 %v2998
        %3117 = vmatprep.subr.mxu0 %v2991
        %3118 = vmatpush1.msra.mxu0 %v2990
        %3119 = vmatprep.subr.mxu0 %v2983
        %3120 = vmatpush1.msra.mxu0 %v2982
        %3121 = vmatprep.subr.mxu0 0.0
        %3122 = vmatpush2.msra.mxu0 0.0
        %3123 = vmatprep.subr.mxu0 0.0
        %3124 = vmatpush2.msra.mxu0 0.0
        %3125 = vmatprep.subr.mxu0 0.0
        %3126 = vmatpush2.msra.mxu0 0.0
        %3127 = vmatprep.subr.mxu0 0.0
        %3128 = vmatpush2.msra.mxu0 0.0
        %3129 = vmatprep.subr.mxu0 0.0
        %3130 = vmatpush2.msra.mxu0 0.0
        %3131 = vmatprep.subr.mxu0 0.0
        %3132 = vmatpush2.msra.mxu0 0.0
        %3133 = vmatprep.subr.mxu0 0.0
        %3134 = vmatpush2.msra.mxu0 0.0
        %3135 = vmatprep.subr.mxu0 0.0
        %3136 = vmatpush2.msra.mxu0 0.0
        %3137 = vmatprep.subr.mxu0 0.0
        %3138 = vmatpush2.msra.mxu0 0.0
        %3139 = vmatprep.subr.mxu0 0.0
        %3140 = vmatpush2.msra.mxu0 0.0
        %3141 = vmatprep.subr.mxu0 0.0
        %3142 = vmatpush2.msra.mxu0 0.0
        %3143 = vmatprep.subr.mxu0 0.0
        %3144 = vmatpush2.msra.mxu0 0.0
        %3145 = vmatprep.subr.mxu0 0.0
        %3146 = vmatpush2.msra.mxu0 0.0
        %3147 = vmatprep.subr.mxu0 0.0
        %3148 = vmatpush2.msra.mxu0 0.0
        %3149 = vmatprep.subr.mxu0 0.0
        %3150 = vmatpush2.msra.mxu0 0.0
        %3151 = vmatprep.subr.mxu0 0.0
        %3152 = vmatpush2.msra.mxu0 0.0
        %3153 = vmatprep.mubr.f32.mxu0 0.0
        %3154 = vmatmul.mubr.f32.gmra.mxu0 %v881
        %v3155 = vpop.f32.mrf.mxu0
        %v3156 = vadd.f32 0.0, %v3155
        %v3157 = vpop.f32.mrf.mxu0
        %v3158 = vadd.f32 0.0, %v3157
        %3159 = vmatprep.mubr.f32.mxu0 0.0
        %3160 = vmatmul.mubr.f32.gmra.mxu0 %v884
        %v3161 = vpop.f32.mrf.mxu0
        %v3162 = vadd.f32 0.0, %v3161
        %v3163 = vpop.f32.mrf.mxu0
        %v3164 = vadd.f32 0.0, %v3163
        %3165 = vdwg.mxu0
        %3166 = vmatprep.subr.mxu0 0.0
        %3167 = vmatpush1.msra.mxu0 0.0
        %3168 = vmatprep.subr.mxu0 0.0
        %3169 = vmatpush1.msra.mxu0 0.0
        %3170 = vmatprep.subr.mxu0 0.0
        %3171 = vmatpush1.msra.mxu0 0.0
        %3172 = vmatprep.subr.mxu0 0.0
        %3173 = vmatpush1.msra.mxu0 0.0
        %3174 = vmatprep.subr.mxu0 0.0
        %3175 = vmatpush1.msra.mxu0 0.0
        %3176 = vmatprep.subr.mxu0 0.0
        %3177 = vmatpush1.msra.mxu0 0.0
        %3178 = vmatprep.subr.mxu0 0.0
        %3179 = vmatpush1.msra.mxu0 0.0
        %3180 = vmatprep.subr.mxu0 0.0
        %3181 = vmatpush1.msra.mxu0 0.0
        %3182 = vmatprep.subr.mxu0 0.0
        %3183 = vmatpush1.msra.mxu0 0.0
        %3184 = vmatprep.subr.mxu0 0.0
        %3185 = vmatpush1.msra.mxu0 0.0
        %3186 = vmatprep.subr.mxu0 0.0
        %3187 = vmatpush1.msra.mxu0 0.0
        %3188 = vmatprep.subr.mxu0 0.0
        %3189 = vmatpush1.msra.mxu0 0.0
        %3190 = vmatprep.subr.mxu0 %v3009
        %3191 = vmatpush1.msra.mxu0 %v3008
        %3192 = vmatprep.subr.mxu0 %v3001
        %3193 = vmatpush1.msra.mxu0 %v3000
        %3194 = vmatprep.subr.mxu0 %v2993
        %3195 = vmatpush1.msra.mxu0 %v2992
        %3196 = vmatprep.subr.mxu0 %v2985
        %3197 = vmatpush1.msra.mxu0 %v2984
        %3198 = vmatprep.subr.mxu0 0.0
        %3199 = vmatpush2.msra.mxu0 0.0
        %3200 = vmatprep.subr.mxu0 0.0
        %3201 = vmatpush2.msra.mxu0 0.0
        %3202 = vmatprep.subr.mxu0 0.0
        %3203 = vmatpush2.msra.mxu0 0.0
        %3204 = vmatprep.subr.mxu0 0.0
        %3205 = vmatpush2.msra.mxu0 0.0
        %3206 = vmatprep.subr.mxu0 0.0
        %3207 = vmatpush2.msra.mxu0 0.0
        %3208 = vmatprep.subr.mxu0 0.0
        %3209 = vmatpush2.msra.mxu0 0.0
        %3210 = vmatprep.subr.mxu0 0.0
        %3211 = vmatpush2.msra.mxu0 0.0
        %3212 = vmatprep.subr.mxu0 0.0
        %3213 = vmatpush2.msra.mxu0 0.0
        %3214 = vmatprep.subr.mxu0 0.0
        %3215 = vmatpush2.msra.mxu0 0.0
        %3216 = vmatprep.subr.mxu0 0.0
        %3217 = vmatpush2.msra.mxu0 0.0
        %3218 = vmatprep.subr.mxu0 0.0
        %3219 = vmatpush2.msra.mxu0 0.0
        %3220 = vmatprep.subr.mxu0 0.0
        %3221 = vmatpush2.msra.mxu0 0.0
        %3222 = vmatprep.subr.mxu0 0.0
        %3223 = vmatpush2.msra.mxu0 0.0
        %3224 = vmatprep.subr.mxu0 0.0
        %3225 = vmatpush2.msra.mxu0 0.0
        %3226 = vmatprep.subr.mxu0 0.0
        %3227 = vmatpush2.msra.mxu0 0.0
        %3228 = vmatprep.subr.mxu0 0.0
        %3229 = vmatpush2.msra.mxu0 0.0
        %3230 = vmatprep.mubr.f32.mxu0 0.0
        %3231 = vmatmul.mubr.f32.gmra.mxu0 %v881
        %v3232 = vpop.f32.mrf.mxu0
        %v3233 = vadd.f32 0.0, %v3232
        %v3234 = vpop.f32.mrf.mxu0
        %v3235 = vadd.f32 0.0, %v3234
        %3236 = vmatprep.mubr.f32.mxu0 0.0
        %3237 = vmatmul.mubr.f32.gmra.mxu0 %v884
        %v3238 = vpop.f32.mrf.mxu0
        %v3239 = vadd.f32 0.0, %v3238
        %v3240 = vpop.f32.mrf.mxu0
        %v3241 = vadd.f32 0.0, %v3240
        %3242 = vdwg.mxu0
        %3243 = vmatprep.subr.mxu0 0.0
        %3244 = vmatpush1.msra.mxu0 0.0
        %3245 = vmatprep.subr.mxu0 0.0
        %3246 = vmatpush1.msra.mxu0 0.0
        %3247 = vmatprep.subr.mxu0 0.0
        %3248 = vmatpush1.msra.mxu0 0.0
        %3249 = vmatprep.subr.mxu0 0.0
        %3250 = vmatpush1.msra.mxu0 0.0
        %3251 = vmatprep.subr.mxu0 0.0
        %3252 = vmatpush1.msra.mxu0 0.0
        %3253 = vmatprep.subr.mxu0 0.0
        %3254 = vmatpush1.msra.mxu0 0.0
        %3255 = vmatprep.subr.mxu0 0.0
        %3256 = vmatpush1.msra.mxu0 0.0
        %3257 = vmatprep.subr.mxu0 0.0
        %3258 = vmatpush1.msra.mxu0 0.0
        %3259 = vmatprep.subr.mxu0 0.0
        %3260 = vmatpush1.msra.mxu0 0.0
        %3261 = vmatprep.subr.mxu0 0.0
        %3262 = vmatpush1.msra.mxu0 0.0
        %3263 = vmatprep.subr.mxu0 0.0
        %3264 = vmatpush1.msra.mxu0 0.0
        %3265 = vmatprep.subr.mxu0 0.0
        %3266 = vmatpush1.msra.mxu0 0.0
        %3267 = vmatprep.subr.mxu0 %v3011
        %3268 = vmatpush1.msra.mxu0 %v3010
        %3269 = vmatprep.subr.mxu0 %v3003
        %3270 = vmatpush1.msra.mxu0 %v3002
        %3271 = vmatprep.subr.mxu0 %v2995
        %3272 = vmatpush1.msra.mxu0 %v2994
        %3273 = vmatprep.subr.mxu0 %v2987
        %3274 = vmatpush1.msra.mxu0 %v2986
        %3275 = vmatprep.subr.mxu0 0.0
        %3276 = vmatpush2.msra.mxu0 0.0
        %3277 = vmatprep.subr.mxu0 0.0
        %3278 = vmatpush2.msra.mxu0 0.0
        %3279 = vmatprep.subr.mxu0 0.0
        %3280 = vmatpush2.msra.mxu0 0.0
        %3281 = vmatprep.subr.mxu0 0.0
        %3282 = vmatpush2.msra.mxu0 0.0
        %3283 = vmatprep.subr.mxu0 0.0
        %3284 = vmatpush2.msra.mxu0 0.0
        %3285 = vmatprep.subr.mxu0 0.0
        %3286 = vmatpush2.msra.mxu0 0.0
        %3287 = vmatprep.subr.mxu0 0.0
        %3288 = vmatpush2.msra.mxu0 0.0
        %3289 = vmatprep.subr.mxu0 0.0
        %3290 = vmatpush2.msra.mxu0 0.0
        %3291 = vmatprep.subr.mxu0 0.0
        %3292 = vmatpush2.msra.mxu0 0.0
        %3293 = vmatprep.subr.mxu0 0.0
        %3294 = vmatpush2.msra.mxu0 0.0
        %3295 = vmatprep.subr.mxu0 0.0
        %3296 = vmatpush2.msra.mxu0 0.0
        %3297 = vmatprep.subr.mxu0 0.0
        %3298 = vmatpush2.msra.mxu0 0.0
        %3299 = vmatprep.subr.mxu0 0.0
        %3300 = vmatpush2.msra.mxu0 0.0
        %3301 = vmatprep.subr.mxu0 0.0
        %3302 = vmatpush2.msra.mxu0 0.0
        %3303 = vmatprep.subr.mxu0 0.0
        %3304 = vmatpush2.msra.mxu0 0.0
        %3305 = vmatprep.subr.mxu0 0.0
        %3306 = vmatpush2.msra.mxu0 0.0
        %3307 = vmatprep.mubr.f32.mxu0 0.0
        %3308 = vmatmul.mubr.f32.gmra.mxu0 %v881
        %v3309 = vpop.f32.mrf.mxu0
        %v3310 = vadd.f32 0.0, %v3309
        %v3311 = vpop.f32.mrf.mxu0
        %v3312 = vadd.f32 0.0, %v3311
        %3313 = vmatprep.mubr.f32.mxu0 0.0
        %3314 = vmatmul.mubr.f32.gmra.mxu0 %v884
        %v3315 = vpop.f32.mrf.mxu0
        %v3316 = vadd.f32 0.0, %v3315
        %v3317 = vpop.f32.mrf.mxu0
        %v3318 = vadd.f32 0.0, %v3317
        %3319 = vdwg.mxu0
        %v3320 = vmax.f32 %v2963, %v3079
        %v3321 = vmax.f32 %v2964, %v3081
        %v3322 = vmax.f32 %v2965, %v3156
        %v3323 = vmax.f32 %v2966, %v3158
        %v3324 = vmax.f32 %v2967, %v3233
        %v3325 = vmax.f32 %v2968, %v3235
        %v3326 = vmax.f32 %v2969, %v3310
        %v3327 = vmax.f32 %v2970, %v3312
        %v3328 = vmax.f32 %v2971, %v3085
        %v3329 = vmax.f32 %v2972, %v3087
        %v3330 = vmax.f32 %v2973, %v3162
        %v3331 = vmax.f32 %v2974, %v3164
        %v3332 = vmax.f32 %v2975, %v3239
        %v3333 = vmax.f32 %v2976, %v3241
        %v3334 = vmax.f32 %v2977, %v3316
        %v3335 = vmax.f32 %v2978, %v3318
        %s3336 = scalar_lea.vmem %s816, 1792 [#allocation3]
        %v3337 = vld [vmem:[%s3336] sm:$0xff]
        %v3338 = vld [vmem:[%s3336 + $0x8] sm:$0xff]
        %v3339 = vld [vmem:[%s3336 + $0x10] sm:$0xff]
        %v3340 = vld [vmem:[%s3336 + $0x18] sm:$0xff]
        %v3341 = vld [vmem:[%s3336 + $0x20] sm:$0xff]
        %v3342 = vld [vmem:[%s3336 + $0x28] sm:$0xff]
        %v3343 = vld [vmem:[%s3336 + $0x30] sm:$0xff]
        %v3344 = vld [vmem:[%s3336 + $0x38] sm:$0xff]
        %v3345 = vld [vmem:[%s3336 + $0x40] sm:$0xff]
        %v3346 = vld [vmem:[%s3336 + $0x48] sm:$0xff]
        %v3347 = vld [vmem:[%s3336 + $0x50] sm:$0xff]
        %v3348 = vld [vmem:[%s3336 + $0x58] sm:$0xff]
        %v3349 = vld [vmem:[%s3336 + $0x60] sm:$0xff]
        %v3350 = vld [vmem:[%s3336 + $0x68] sm:$0xff]
        %v3351 = vld [vmem:[%s3336 + $0x70] sm:$0xff]
        %v3352 = vld [vmem:[%s3336 + $0x78] sm:$0xff]
        %v3353 = vld [vmem:[%s3336 + $0x80] sm:$0xff]
        %v3354 = vld [vmem:[%s3336 + $0x88] sm:$0xff]
        %v3355 = vld [vmem:[%s3336 + $0x90] sm:$0xff]
        %v3356 = vld [vmem:[%s3336 + $0x98] sm:$0xff]
        %v3357 = vld [vmem:[%s3336 + $0xa0] sm:$0xff]
        %v3358 = vld [vmem:[%s3336 + $0xa8] sm:$0xff]
        %v3359 = vld [vmem:[%s3336 + $0xb0] sm:$0xff]
        %v3360 = vld [vmem:[%s3336 + $0xb8] sm:$0xff]
        %v3361 = vld [vmem:[%s3336 + $0xc0] sm:$0xff]
        %v3362 = vld [vmem:[%s3336 + $0xc8] sm:$0xff]
        %v3363 = vld [vmem:[%s3336 + $0xd0] sm:$0xff]
        %v3364 = vld [vmem:[%s3336 + $0xd8] sm:$0xff]
        %v3365 = vld [vmem:[%s3336 + $0xe0] sm:$0xff]
        %v3366 = vld [vmem:[%s3336 + $0xe8] sm:$0xff]
        %v3367 = vld [vmem:[%s3336 + $0xf0] sm:$0xff]
        %v3368 = vld [vmem:[%s3336 + $0xf8] sm:$0xff]
        %3369 = vmatprep.subr.mxu0 0.0
        %3370 = vmatpush1.msra.mxu0 0.0
        %3371 = vmatprep.subr.mxu0 0.0
        %3372 = vmatpush1.msra.mxu0 0.0
        %3373 = vmatprep.subr.mxu0 0.0
        %3374 = vmatpush1.msra.mxu0 0.0
        %3375 = vmatprep.subr.mxu0 0.0
        %3376 = vmatpush1.msra.mxu0 0.0
        %3377 = vmatprep.subr.mxu0 0.0
        %3378 = vmatpush1.msra.mxu0 0.0
        %3379 = vmatprep.subr.mxu0 0.0
        %3380 = vmatpush1.msra.mxu0 0.0
        %3381 = vmatprep.subr.mxu0 0.0
        %3382 = vmatpush1.msra.mxu0 0.0
        %3383 = vmatprep.subr.mxu0 0.0
        %3384 = vmatpush1.msra.mxu0 0.0
        %3385 = vmatprep.subr.mxu0 0.0
        %3386 = vmatpush1.msra.mxu0 0.0
        %3387 = vmatprep.subr.mxu0 0.0
        %3388 = vmatpush1.msra.mxu0 0.0
        %3389 = vmatprep.subr.mxu0 0.0
        %3390 = vmatpush1.msra.mxu0 0.0
        %3391 = vmatprep.subr.mxu0 0.0
        %3392 = vmatpush1.msra.mxu0 0.0
        %3393 = vmatprep.subr.mxu0 %v3362
        %3394 = vmatpush1.msra.mxu0 %v3361
        %3395 = vmatprep.subr.mxu0 %v3354
        %3396 = vmatpush1.msra.mxu0 %v3353
        %3397 = vmatprep.subr.mxu0 %v3346
        %3398 = vmatpush1.msra.mxu0 %v3345
        %3399 = vmatprep.subr.mxu0 %v3338
        %3400 = vmatpush1.msra.mxu0 %v3337
        %3401 = vmatprep.subr.mxu0 0.0
        %3402 = vmatpush2.msra.mxu0 0.0
        %3403 = vmatprep.subr.mxu0 0.0
        %3404 = vmatpush2.msra.mxu0 0.0
        %3405 = vmatprep.subr.mxu0 0.0
        %3406 = vmatpush2.msra.mxu0 0.0
        %3407 = vmatprep.subr.mxu0 0.0
        %3408 = vmatpush2.msra.mxu0 0.0
        %3409 = vmatprep.subr.mxu0 0.0
        %3410 = vmatpush2.msra.mxu0 0.0
        %3411 = vmatprep.subr.mxu0 0.0
        %3412 = vmatpush2.msra.mxu0 0.0
        %3413 = vmatprep.subr.mxu0 0.0
        %3414 = vmatpush2.msra.mxu0 0.0
        %3415 = vmatprep.subr.mxu0 0.0
        %3416 = vmatpush2.msra.mxu0 0.0
        %3417 = vmatprep.subr.mxu0 0.0
        %3418 = vmatpush2.msra.mxu0 0.0
        %3419 = vmatprep.subr.mxu0 0.0
        %3420 = vmatpush2.msra.mxu0 0.0
        %3421 = vmatprep.subr.mxu0 0.0
        %3422 = vmatpush2.msra.mxu0 0.0
        %3423 = vmatprep.subr.mxu0 0.0
        %3424 = vmatpush2.msra.mxu0 0.0
        %3425 = vmatprep.subr.mxu0 0.0
        %3426 = vmatpush2.msra.mxu0 0.0
        %3427 = vmatprep.subr.mxu0 0.0
        %3428 = vmatpush2.msra.mxu0 0.0
        %3429 = vmatprep.subr.mxu0 0.0
        %3430 = vmatpush2.msra.mxu0 0.0
        %3431 = vmatprep.subr.mxu0 0.0
        %3432 = vmatpush2.msra.mxu0 0.0
        %3433 = vmatprep.mubr.f32.mxu0 0.0
        %3434 = vmatmul.mubr.f32.gmra.mxu0 %v881
        %v3435 = vpop.f32.mrf.mxu0
        %v3436 = vadd.f32 0.0, %v3435
        %v3437 = vpop.f32.mrf.mxu0
        %v3438 = vadd.f32 0.0, %v3437
        %3439 = vmatprep.mubr.f32.mxu0 0.0
        %3440 = vmatmul.mubr.f32.gmra.mxu0 %v884
        %v3441 = vpop.f32.mrf.mxu0
        %v3442 = vadd.f32 0.0, %v3441
        %v3443 = vpop.f32.mrf.mxu0
        %v3444 = vadd.f32 0.0, %v3443
        %3445 = vdwg.mxu0
        %3446 = vmatprep.subr.mxu0 0.0
        %3447 = vmatpush1.msra.mxu0 0.0
        %3448 = vmatprep.subr.mxu0 0.0
        %3449 = vmatpush1.msra.mxu0 0.0
        %3450 = vmatprep.subr.mxu0 0.0
        %3451 = vmatpush1.msra.mxu0 0.0
        %3452 = vmatprep.subr.mxu0 0.0
        %3453 = vmatpush1.msra.mxu0 0.0
        %3454 = vmatprep.subr.mxu0 0.0
        %3455 = vmatpush1.msra.mxu0 0.0
        %3456 = vmatprep.subr.mxu0 0.0
        %3457 = vmatpush1.msra.mxu0 0.0
        %3458 = vmatprep.subr.mxu0 0.0
        %3459 = vmatpush1.msra.mxu0 0.0
        %3460 = vmatprep.subr.mxu0 0.0
        %3461 = vmatpush1.msra.mxu0 0.0
        %3462 = vmatprep.subr.mxu0 0.0
        %3463 = vmatpush1.msra.mxu0 0.0
        %3464 = vmatprep.subr.mxu0 0.0
        %3465 = vmatpush1.msra.mxu0 0.0
        %3466 = vmatprep.subr.mxu0 0.0
        %3467 = vmatpush1.msra.mxu0 0.0
        %3468 = vmatprep.subr.mxu0 0.0
        %3469 = vmatpush1.msra.mxu0 0.0
        %3470 = vmatprep.subr.mxu0 %v3364
        %3471 = vmatpush1.msra.mxu0 %v3363
        %3472 = vmatprep.subr.mxu0 %v3356
        %3473 = vmatpush1.msra.mxu0 %v3355
        %3474 = vmatprep.subr.mxu0 %v3348
        %3475 = vmatpush1.msra.mxu0 %v3347
        %3476 = vmatprep.subr.mxu0 %v3340
        %3477 = vmatpush1.msra.mxu0 %v3339
        %3478 = vmatprep.subr.mxu0 0.0
        %3479 = vmatpush2.msra.mxu0 0.0
        %3480 = vmatprep.subr.mxu0 0.0
        %3481 = vmatpush2.msra.mxu0 0.0
        %3482 = vmatprep.subr.mxu0 0.0
        %3483 = vmatpush2.msra.mxu0 0.0
        %3484 = vmatprep.subr.mxu0 0.0
        %3485 = vmatpush2.msra.mxu0 0.0
        %3486 = vmatprep.subr.mxu0 0.0
        %3487 = vmatpush2.msra.mxu0 0.0
        %3488 = vmatprep.subr.mxu0 0.0
        %3489 = vmatpush2.msra.mxu0 0.0
        %3490 = vmatprep.subr.mxu0 0.0
        %3491 = vmatpush2.msra.mxu0 0.0
        %3492 = vmatprep.subr.mxu0 0.0
        %3493 = vmatpush2.msra.mxu0 0.0
        %3494 = vmatprep.subr.mxu0 0.0
        %3495 = vmatpush2.msra.mxu0 0.0
        %3496 = vmatprep.subr.mxu0 0.0
        %3497 = vmatpush2.msra.mxu0 0.0
        %3498 = vmatprep.subr.mxu0 0.0
        %3499 = vmatpush2.msra.mxu0 0.0
        %3500 = vmatprep.subr.mxu0 0.0
        %3501 = vmatpush2.msra.mxu0 0.0
        %3502 = vmatprep.subr.mxu0 0.0
        %3503 = vmatpush2.msra.mxu0 0.0
        %3504 = vmatprep.subr.mxu0 0.0
        %3505 = vmatpush2.msra.mxu0 0.0
        %3506 = vmatprep.subr.mxu0 0.0
        %3507 = vmatpush2.msra.mxu0 0.0
        %3508 = vmatprep.subr.mxu0 0.0
        %3509 = vmatpush2.msra.mxu0 0.0
        %3510 = vmatprep.mubr.f32.mxu0 0.0
        %3511 = vmatmul.mubr.f32.gmra.mxu0 %v881
        %v3512 = vpop.f32.mrf.mxu0
        %v3513 = vadd.f32 0.0, %v3512
        %v3514 = vpop.f32.mrf.mxu0
        %v3515 = vadd.f32 0.0, %v3514
        %3516 = vmatprep.mubr.f32.mxu0 0.0
        %3517 = vmatmul.mubr.f32.gmra.mxu0 %v884
        %v3518 = vpop.f32.mrf.mxu0
        %v3519 = vadd.f32 0.0, %v3518
        %v3520 = vpop.f32.mrf.mxu0
        %v3521 = vadd.f32 0.0, %v3520
        %3522 = vdwg.mxu0
        %3523 = vmatprep.subr.mxu0 0.0
        %3524 = vmatpush1.msra.mxu0 0.0
        %3525 = vmatprep.subr.mxu0 0.0
        %3526 = vmatpush1.msra.mxu0 0.0
        %3527 = vmatprep.subr.mxu0 0.0
        %3528 = vmatpush1.msra.mxu0 0.0
        %3529 = vmatprep.subr.mxu0 0.0
        %3530 = vmatpush1.msra.mxu0 0.0
        %3531 = vmatprep.subr.mxu0 0.0
        %3532 = vmatpush1.msra.mxu0 0.0
        %3533 = vmatprep.subr.mxu0 0.0
        %3534 = vmatpush1.msra.mxu0 0.0
        %3535 = vmatprep.subr.mxu0 0.0
        %3536 = vmatpush1.msra.mxu0 0.0
        %3537 = vmatprep.subr.mxu0 0.0
        %3538 = vmatpush1.msra.mxu0 0.0
        %3539 = vmatprep.subr.mxu0 0.0
        %3540 = vmatpush1.msra.mxu0 0.0
        %3541 = vmatprep.subr.mxu0 0.0
        %3542 = vmatpush1.msra.mxu0 0.0
        %3543 = vmatprep.subr.mxu0 0.0
        %3544 = vmatpush1.msra.mxu0 0.0
        %3545 = vmatprep.subr.mxu0 0.0
        %3546 = vmatpush1.msra.mxu0 0.0
        %3547 = vmatprep.subr.mxu0 %v3366
        %3548 = vmatpush1.msra.mxu0 %v3365
        %3549 = vmatprep.subr.mxu0 %v3358
        %3550 = vmatpush1.msra.mxu0 %v3357
        %3551 = vmatprep.subr.mxu0 %v3350
        %3552 = vmatpush1.msra.mxu0 %v3349
        %3553 = vmatprep.subr.mxu0 %v3342
        %3554 = vmatpush1.msra.mxu0 %v3341
        %3555 = vmatprep.subr.mxu0 0.0
        %3556 = vmatpush2.msra.mxu0 0.0
        %3557 = vmatprep.subr.mxu0 0.0
        %3558 = vmatpush2.msra.mxu0 0.0
        %3559 = vmatprep.subr.mxu0 0.0
        %3560 = vmatpush2.msra.mxu0 0.0
        %3561 = vmatprep.subr.mxu0 0.0
        %3562 = vmatpush2.msra.mxu0 0.0
        %3563 = vmatprep.subr.mxu0 0.0
        %3564 = vmatpush2.msra.mxu0 0.0
        %3565 = vmatprep.subr.mxu0 0.0
        %3566 = vmatpush2.msra.mxu0 0.0
        %3567 = vmatprep.subr.mxu0 0.0
        %3568 = vmatpush2.msra.mxu0 0.0
        %3569 = vmatprep.subr.mxu0 0.0
        %3570 = vmatpush2.msra.mxu0 0.0
        %3571 = vmatprep.subr.mxu0 0.0
        %3572 = vmatpush2.msra.mxu0 0.0
        %3573 = vmatprep.subr.mxu0 0.0
        %3574 = vmatpush2.msra.mxu0 0.0
        %3575 = vmatprep.subr.mxu0 0.0
        %3576 = vmatpush2.msra.mxu0 0.0
        %3577 = vmatprep.subr.mxu0 0.0
        %3578 = vmatpush2.msra.mxu0 0.0
        %3579 = vmatprep.subr.mxu0 0.0
        %3580 = vmatpush2.msra.mxu0 0.0
        %3581 = vmatprep.subr.mxu0 0.0
        %3582 = vmatpush2.msra.mxu0 0.0
        %3583 = vmatprep.subr.mxu0 0.0
        %3584 = vmatpush2.msra.mxu0 0.0
        %3585 = vmatprep.subr.mxu0 0.0
        %3586 = vmatpush2.msra.mxu0 0.0
        %3587 = vmatprep.mubr.f32.mxu0 0.0
        %3588 = vmatmul.mubr.f32.gmra.mxu0 %v881
        %v3589 = vpop.f32.mrf.mxu0
        %v3590 = vadd.f32 0.0, %v3589
        %v3591 = vpop.f32.mrf.mxu0
        %v3592 = vadd.f32 0.0, %v3591
        %3593 = vmatprep.mubr.f32.mxu0 0.0
        %3594 = vmatmul.mubr.f32.gmra.mxu0 %v884
        %v3595 = vpop.f32.mrf.mxu0
        %v3596 = vadd.f32 0.0, %v3595
        %v3597 = vpop.f32.mrf.mxu0
        %v3598 = vadd.f32 0.0, %v3597
        %3599 = vdwg.mxu0
        %3600 = vmatprep.subr.mxu0 0.0
        %3601 = vmatpush1.msra.mxu0 0.0
        %3602 = vmatprep.subr.mxu0 0.0
        %3603 = vmatpush1.msra.mxu0 0.0
        %3604 = vmatprep.subr.mxu0 0.0
        %3605 = vmatpush1.msra.mxu0 0.0
        %3606 = vmatprep.subr.mxu0 0.0
        %3607 = vmatpush1.msra.mxu0 0.0
        %3608 = vmatprep.subr.mxu0 0.0
        %3609 = vmatpush1.msra.mxu0 0.0
        %3610 = vmatprep.subr.mxu0 0.0
        %3611 = vmatpush1.msra.mxu0 0.0
        %3612 = vmatprep.subr.mxu0 0.0
        %3613 = vmatpush1.msra.mxu0 0.0
        %3614 = vmatprep.subr.mxu0 0.0
        %3615 = vmatpush1.msra.mxu0 0.0
        %3616 = vmatprep.subr.mxu0 0.0
        %3617 = vmatpush1.msra.mxu0 0.0
        %3618 = vmatprep.subr.mxu0 0.0
        %3619 = vmatpush1.msra.mxu0 0.0
        %3620 = vmatprep.subr.mxu0 0.0
        %3621 = vmatpush1.msra.mxu0 0.0
        %3622 = vmatprep.subr.mxu0 0.0
        %3623 = vmatpush1.msra.mxu0 0.0
        %3624 = vmatprep.subr.mxu0 %v3368
        %3625 = vmatpush1.msra.mxu0 %v3367
        %3626 = vmatprep.subr.mxu0 %v3360
        %3627 = vmatpush1.msra.mxu0 %v3359
        %3628 = vmatprep.subr.mxu0 %v3352
        %3629 = vmatpush1.msra.mxu0 %v3351
        %3630 = vmatprep.subr.mxu0 %v3344
        %3631 = vmatpush1.msra.mxu0 %v3343
        %3632 = vmatprep.subr.mxu0 0.0
        %3633 = vmatpush2.msra.mxu0 0.0
        %3634 = vmatprep.subr.mxu0 0.0
        %3635 = vmatpush2.msra.mxu0 0.0
        %3636 = vmatprep.subr.mxu0 0.0
        %3637 = vmatpush2.msra.mxu0 0.0
        %3638 = vmatprep.subr.mxu0 0.0
        %3639 = vmatpush2.msra.mxu0 0.0
        %3640 = vmatprep.subr.mxu0 0.0
        %3641 = vmatpush2.msra.mxu0 0.0
        %3642 = vmatprep.subr.mxu0 0.0
        %3643 = vmatpush2.msra.mxu0 0.0
        %3644 = vmatprep.subr.mxu0 0.0
        %3645 = vmatpush2.msra.mxu0 0.0
        %3646 = vmatprep.subr.mxu0 0.0
        %3647 = vmatpush2.msra.mxu0 0.0
        %3648 = vmatprep.subr.mxu0 0.0
        %3649 = vmatpush2.msra.mxu0 0.0
        %3650 = vmatprep.subr.mxu0 0.0
        %3651 = vmatpush2.msra.mxu0 0.0
        %3652 = vmatprep.subr.mxu0 0.0
        %3653 = vmatpush2.msra.mxu0 0.0
        %3654 = vmatprep.subr.mxu0 0.0
        %3655 = vmatpush2.msra.mxu0 0.0
        %3656 = vmatprep.subr.mxu0 0.0
        %3657 = vmatpush2.msra.mxu0 0.0
        %3658 = vmatprep.subr.mxu0 0.0
        %3659 = vmatpush2.msra.mxu0 0.0
        %3660 = vmatprep.subr.mxu0 0.0
        %3661 = vmatpush2.msra.mxu0 0.0
        %3662 = vmatprep.subr.mxu0 0.0
        %3663 = vmatpush2.msra.mxu0 0.0
        %3664 = vmatprep.mubr.f32.mxu0 0.0
        %3665 = vmatmul.mubr.f32.gmra.mxu0 %v881
        %v3666 = vpop.f32.mrf.mxu0
        %v3667 = vadd.f32 0.0, %v3666
        %v3668 = vpop.f32.mrf.mxu0
        %v3669 = vadd.f32 0.0, %v3668
        %3670 = vmatprep.mubr.f32.mxu0 0.0
        %3671 = vmatmul.mubr.f32.gmra.mxu0 %v884
        %v3672 = vpop.f32.mrf.mxu0
        %v3673 = vadd.f32 0.0, %v3672
        %v3674 = vpop.f32.mrf.mxu0
        %v3675 = vadd.f32 0.0, %v3674
        %3676 = vdwg.mxu0
        %v3677 = vmax.f32 %v3320, %v3436
        %v3678 = vmax.f32 %v3321, %v3438
        %v3679 = vmax.f32 %v3322, %v3513
        %v3680 = vmax.f32 %v3323, %v3515
        %v3681 = vmax.f32 %v3324, %v3590
        %v3682 = vmax.f32 %v3325, %v3592
        %v3683 = vmax.f32 %v3326, %v3667
        %v3684 = vmax.f32 %v3327, %v3669
        %v3685 = vmax.f32 %v3328, %v3442
        %v3686 = vmax.f32 %v3329, %v3444
        %v3687 = vmax.f32 %v3330, %v3519
        %v3688 = vmax.f32 %v3331, %v3521
        %v3689 = vmax.f32 %v3332, %v3596
        %v3690 = vmax.f32 %v3333, %v3598
        %v3691 = vmax.f32 %v3334, %v3673
        %v3692 = vmax.f32 %v3335, %v3675
        %s3693 = scalar_lea.vmem %s816, 2048 [#allocation3]
        %v3694 = vld [vmem:[%s3693] sm:$0xff]
        %v3695 = vld [vmem:[%s3693 + $0x8] sm:$0xff]
        %v3696 = vld [vmem:[%s3693 + $0x10] sm:$0xff]
        %v3697 = vld [vmem:[%s3693 + $0x18] sm:$0xff]
        %v3698 = vld [vmem:[%s3693 + $0x20] sm:$0xff]
        %v3699 = vld [vmem:[%s3693 + $0x28] sm:$0xff]
        %v3700 = vld [vmem:[%s3693 + $0x30] sm:$0xff]
        %v3701 = vld [vmem:[%s3693 + $0x38] sm:$0xff]
        %v3702 = vld [vmem:[%s3693 + $0x40] sm:$0xff]
        %v3703 = vld [vmem:[%s3693 + $0x48] sm:$0xff]
        %v3704 = vld [vmem:[%s3693 + $0x50] sm:$0xff]
        %v3705 = vld [vmem:[%s3693 + $0x58] sm:$0xff]
        %v3706 = vld [vmem:[%s3693 + $0x60] sm:$0xff]
        %v3707 = vld [vmem:[%s3693 + $0x68] sm:$0xff]
        %v3708 = vld [vmem:[%s3693 + $0x70] sm:$0xff]
        %v3709 = vld [vmem:[%s3693 + $0x78] sm:$0xff]
        %v3710 = vld [vmem:[%s3693 + $0x80] sm:$0xff]
        %v3711 = vld [vmem:[%s3693 + $0x88] sm:$0xff]
        %v3712 = vld [vmem:[%s3693 + $0x90] sm:$0xff]
        %v3713 = vld [vmem:[%s3693 + $0x98] sm:$0xff]
        %v3714 = vld [vmem:[%s3693 + $0xa0] sm:$0xff]
        %v3715 = vld [vmem:[%s3693 + $0xa8] sm:$0xff]
        %v3716 = vld [vmem:[%s3693 + $0xb0] sm:$0xff]
        %v3717 = vld [vmem:[%s3693 + $0xb8] sm:$0xff]
        %v3718 = vld [vmem:[%s3693 + $0xc0] sm:$0xff]
        %v3719 = vld [vmem:[%s3693 + $0xc8] sm:$0xff]
        %v3720 = vld [vmem:[%s3693 + $0xd0] sm:$0xff]
        %v3721 = vld [vmem:[%s3693 + $0xd8] sm:$0xff]
        %v3722 = vld [vmem:[%s3693 + $0xe0] sm:$0xff]
        %v3723 = vld [vmem:[%s3693 + $0xe8] sm:$0xff]
        %v3724 = vld [vmem:[%s3693 + $0xf0] sm:$0xff]
        %v3725 = vld [vmem:[%s3693 + $0xf8] sm:$0xff]
        %3726 = vmatprep.subr.mxu0 0.0
        %3727 = vmatpush1.msra.mxu0 0.0
        %3728 = vmatprep.subr.mxu0 0.0
        %3729 = vmatpush1.msra.mxu0 0.0
        %3730 = vmatprep.subr.mxu0 0.0
        %3731 = vmatpush1.msra.mxu0 0.0
        %3732 = vmatprep.subr.mxu0 0.0
        %3733 = vmatpush1.msra.mxu0 0.0
        %3734 = vmatprep.subr.mxu0 0.0
        %3735 = vmatpush1.msra.mxu0 0.0
        %3736 = vmatprep.subr.mxu0 0.0
        %3737 = vmatpush1.msra.mxu0 0.0
        %3738 = vmatprep.subr.mxu0 0.0
        %3739 = vmatpush1.msra.mxu0 0.0
        %3740 = vmatprep.subr.mxu0 0.0
        %3741 = vmatpush1.msra.mxu0 0.0
        %3742 = vmatprep.subr.mxu0 0.0
        %3743 = vmatpush1.msra.mxu0 0.0
        %3744 = vmatprep.subr.mxu0 0.0
        %3745 = vmatpush1.msra.mxu0 0.0
        %3746 = vmatprep.subr.mxu0 0.0
        %3747 = vmatpush1.msra.mxu0 0.0
        %3748 = vmatprep.subr.mxu0 0.0
        %3749 = vmatpush1.msra.mxu0 0.0
        %3750 = vmatprep.subr.mxu0 %v3719
        %3751 = vmatpush1.msra.mxu0 %v3718
        %3752 = vmatprep.subr.mxu0 %v3711
        %3753 = vmatpush1.msra.mxu0 %v3710
        %3754 = vmatprep.subr.mxu0 %v3703
        %3755 = vmatpush1.msra.mxu0 %v3702
        %3756 = vmatprep.subr.mxu0 %v3695
        %3757 = vmatpush1.msra.mxu0 %v3694
        %3758 = vmatprep.subr.mxu0 0.0
        %3759 = vmatpush2.msra.mxu0 0.0
        %3760 = vmatprep.subr.mxu0 0.0
        %3761 = vmatpush2.msra.mxu0 0.0
        %3762 = vmatprep.subr.mxu0 0.0
        %3763 = vmatpush2.msra.mxu0 0.0
        %3764 = vmatprep.subr.mxu0 0.0
        %3765 = vmatpush2.msra.mxu0 0.0
        %3766 = vmatprep.subr.mxu0 0.0
        %3767 = vmatpush2.msra.mxu0 0.0
        %3768 = vmatprep.subr.mxu0 0.0
        %3769 = vmatpush2.msra.mxu0 0.0
        %3770 = vmatprep.subr.mxu0 0.0
        %3771 = vmatpush2.msra.mxu0 0.0
        %3772 = vmatprep.subr.mxu0 0.0
        %3773 = vmatpush2.msra.mxu0 0.0
        %3774 = vmatprep.subr.mxu0 0.0
        %3775 = vmatpush2.msra.mxu0 0.0
        %3776 = vmatprep.subr.mxu0 0.0
        %3777 = vmatpush2.msra.mxu0 0.0
        %3778 = vmatprep.subr.mxu0 0.0
        %3779 = vmatpush2.msra.mxu0 0.0
        %3780 = vmatprep.subr.mxu0 0.0
        %3781 = vmatpush2.msra.mxu0 0.0
        %3782 = vmatprep.subr.mxu0 0.0
        %3783 = vmatpush2.msra.mxu0 0.0
        %3784 = vmatprep.subr.mxu0 0.0
        %3785 = vmatpush2.msra.mxu0 0.0
        %3786 = vmatprep.subr.mxu0 0.0
        %3787 = vmatpush2.msra.mxu0 0.0
        %3788 = vmatprep.subr.mxu0 0.0
        %3789 = vmatpush2.msra.mxu0 0.0
        %3790 = vmatprep.mubr.f32.mxu0 0.0
        %3791 = vmatmul.mubr.f32.gmra.mxu0 %v881
        %v3792 = vpop.f32.mrf.mxu0
        %v3793 = vadd.f32 0.0, %v3792
        %v3794 = vpop.f32.mrf.mxu0
        %v3795 = vadd.f32 0.0, %v3794
        %3796 = vmatprep.mubr.f32.mxu0 0.0
        %3797 = vmatmul.mubr.f32.gmra.mxu0 %v884
        %v3798 = vpop.f32.mrf.mxu0
        %v3799 = vadd.f32 0.0, %v3798
        %v3800 = vpop.f32.mrf.mxu0
        %v3801 = vadd.f32 0.0, %v3800
        %3802 = vdwg.mxu0
        %3803 = vmatprep.subr.mxu0 0.0
        %3804 = vmatpush1.msra.mxu0 0.0
        %3805 = vmatprep.subr.mxu0 0.0
        %3806 = vmatpush1.msra.mxu0 0.0
        %3807 = vmatprep.subr.mxu0 0.0
        %3808 = vmatpush1.msra.mxu0 0.0
        %3809 = vmatprep.subr.mxu0 0.0
        %3810 = vmatpush1.msra.mxu0 0.0
        %3811 = vmatprep.subr.mxu0 0.0
        %3812 = vmatpush1.msra.mxu0 0.0
        %3813 = vmatprep.subr.mxu0 0.0
        %3814 = vmatpush1.msra.mxu0 0.0
        %3815 = vmatprep.subr.mxu0 0.0
        %3816 = vmatpush1.msra.mxu0 0.0
        %3817 = vmatprep.subr.mxu0 0.0
        %3818 = vmatpush1.msra.mxu0 0.0
        %3819 = vmatprep.subr.mxu0 0.0
        %3820 = vmatpush1.msra.mxu0 0.0
        %3821 = vmatprep.subr.mxu0 0.0
        %3822 = vmatpush1.msra.mxu0 0.0
        %3823 = vmatprep.subr.mxu0 0.0
        %3824 = vmatpush1.msra.mxu0 0.0
        %3825 = vmatprep.subr.mxu0 0.0
        %3826 = vmatpush1.msra.mxu0 0.0
        %3827 = vmatprep.subr.mxu0 %v3721
        %3828 = vmatpush1.msra.mxu0 %v3720
        %3829 = vmatprep.subr.mxu0 %v3713
        %3830 = vmatpush1.msra.mxu0 %v3712
        %3831 = vmatprep.subr.mxu0 %v3705
        %3832 = vmatpush1.msra.mxu0 %v3704
        %3833 = vmatprep.subr.mxu0 %v3697
        %3834 = vmatpush1.msra.mxu0 %v3696
        %3835 = vmatprep.subr.mxu0 0.0
        %3836 = vmatpush2.msra.mxu0 0.0
        %3837 = vmatprep.subr.mxu0 0.0
        %3838 = vmatpush2.msra.mxu0 0.0
        %3839 = vmatprep.subr.mxu0 0.0
        %3840 = vmatpush2.msra.mxu0 0.0
        %3841 = vmatprep.subr.mxu0 0.0
        %3842 = vmatpush2.msra.mxu0 0.0
        %3843 = vmatprep.subr.mxu0 0.0
        %3844 = vmatpush2.msra.mxu0 0.0
        %3845 = vmatprep.subr.mxu0 0.0
        %3846 = vmatpush2.msra.mxu0 0.0
        %3847 = vmatprep.subr.mxu0 0.0
        %3848 = vmatpush2.msra.mxu0 0.0
        %3849 = vmatprep.subr.mxu0 0.0
        %3850 = vmatpush2.msra.mxu0 0.0
        %3851 = vmatprep.subr.mxu0 0.0
        %3852 = vmatpush2.msra.mxu0 0.0
        %3853 = vmatprep.subr.mxu0 0.0
        %3854 = vmatpush2.msra.mxu0 0.0
        %3855 = vmatprep.subr.mxu0 0.0
        %3856 = vmatpush2.msra.mxu0 0.0
        %3857 = vmatprep.subr.mxu0 0.0
        %3858 = vmatpush2.msra.mxu0 0.0
        %3859 = vmatprep.subr.mxu0 0.0
        %3860 = vmatpush2.msra.mxu0 0.0
        %3861 = vmatprep.subr.mxu0 0.0
        %3862 = vmatpush2.msra.mxu0 0.0
        %3863 = vmatprep.subr.mxu0 0.0
        %3864 = vmatpush2.msra.mxu0 0.0
        %3865 = vmatprep.subr.mxu0 0.0
        %3866 = vmatpush2.msra.mxu0 0.0
        %3867 = vmatprep.mubr.f32.mxu0 0.0
        %3868 = vmatmul.mubr.f32.gmra.mxu0 %v881
        %v3869 = vpop.f32.mrf.mxu0
        %v3870 = vadd.f32 0.0, %v3869
        %v3871 = vpop.f32.mrf.mxu0
        %v3872 = vadd.f32 0.0, %v3871
        %3873 = vmatprep.mubr.f32.mxu0 0.0
        %3874 = vmatmul.mubr.f32.gmra.mxu0 %v884
        %v3875 = vpop.f32.mrf.mxu0
        %v3876 = vadd.f32 0.0, %v3875
        %v3877 = vpop.f32.mrf.mxu0
        %v3878 = vadd.f32 0.0, %v3877
        %3879 = vdwg.mxu0
        %3880 = vmatprep.subr.mxu0 0.0
        %3881 = vmatpush1.msra.mxu0 0.0
        %3882 = vmatprep.subr.mxu0 0.0
        %3883 = vmatpush1.msra.mxu0 0.0
        %3884 = vmatprep.subr.mxu0 0.0
        %3885 = vmatpush1.msra.mxu0 0.0
        %3886 = vmatprep.subr.mxu0 0.0
        %3887 = vmatpush1.msra.mxu0 0.0
        %3888 = vmatprep.subr.mxu0 0.0
        %3889 = vmatpush1.msra.mxu0 0.0
        %3890 = vmatprep.subr.mxu0 0.0
        %3891 = vmatpush1.msra.mxu0 0.0
        %3892 = vmatprep.subr.mxu0 0.0
        %3893 = vmatpush1.msra.mxu0 0.0
        %3894 = vmatprep.subr.mxu0 0.0
        %3895 = vmatpush1.msra.mxu0 0.0
        %3896 = vmatprep.subr.mxu0 0.0
        %3897 = vmatpush1.msra.mxu0 0.0
        %3898 = vmatprep.subr.mxu0 0.0
        %3899 = vmatpush1.msra.mxu0 0.0
        %3900 = vmatprep.subr.mxu0 0.0
        %3901 = vmatpush1.msra.mxu0 0.0
        %3902 = vmatprep.subr.mxu0 0.0
        %3903 = vmatpush1.msra.mxu0 0.0
        %3904 = vmatprep.subr.mxu0 %v3723
        %3905 = vmatpush1.msra.mxu0 %v3722
        %3906 = vmatprep.subr.mxu0 %v3715
        %3907 = vmatpush1.msra.mxu0 %v3714
        %3908 = vmatprep.subr.mxu0 %v3707
        %3909 = vmatpush1.msra.mxu0 %v3706
        %3910 = vmatprep.subr.mxu0 %v3699
        %3911 = vmatpush1.msra.mxu0 %v3698
        %3912 = vmatprep.subr.mxu0 0.0
        %3913 = vmatpush2.msra.mxu0 0.0
        %3914 = vmatprep.subr.mxu0 0.0
        %3915 = vmatpush2.msra.mxu0 0.0
        %3916 = vmatprep.subr.mxu0 0.0
        %3917 = vmatpush2.msra.mxu0 0.0
        %3918 = vmatprep.subr.mxu0 0.0
        %3919 = vmatpush2.msra.mxu0 0.0
        %3920 = vmatprep.subr.mxu0 0.0
        %3921 = vmatpush2.msra.mxu0 0.0
        %3922 = vmatprep.subr.mxu0 0.0
        %3923 = vmatpush2.msra.mxu0 0.0
        %3924 = vmatprep.subr.mxu0 0.0
        %3925 = vmatpush2.msra.mxu0 0.0
        %3926 = vmatprep.subr.mxu0 0.0
        %3927 = vmatpush2.msra.mxu0 0.0
        %3928 = vmatprep.subr.mxu0 0.0
        %3929 = vmatpush2.msra.mxu0 0.0
        %3930 = vmatprep.subr.mxu0 0.0
        %3931 = vmatpush2.msra.mxu0 0.0
        %3932 = vmatprep.subr.mxu0 0.0
        %3933 = vmatpush2.msra.mxu0 0.0
        %3934 = vmatprep.subr.mxu0 0.0
        %3935 = vmatpush2.msra.mxu0 0.0
        %3936 = vmatprep.subr.mxu0 0.0
        %3937 = vmatpush2.msra.mxu0 0.0
        %3938 = vmatprep.subr.mxu0 0.0
        %3939 = vmatpush2.msra.mxu0 0.0
        %3940 = vmatprep.subr.mxu0 0.0
        %3941 = vmatpush2.msra.mxu0 0.0
        %3942 = vmatprep.subr.mxu0 0.0
        %3943 = vmatpush2.msra.mxu0 0.0
        %3944 = vmatprep.mubr.f32.mxu0 0.0
        %3945 = vmatmul.mubr.f32.gmra.mxu0 %v881
        %v3946 = vpop.f32.mrf.mxu0
        %v3947 = vadd.f32 0.0, %v3946
        %v3948 = vpop.f32.mrf.mxu0
        %v3949 = vadd.f32 0.0, %v3948
        %3950 = vmatprep.mubr.f32.mxu0 0.0
        %3951 = vmatmul.mubr.f32.gmra.mxu0 %v884
        %v3952 = vpop.f32.mrf.mxu0
        %v3953 = vadd.f32 0.0, %v3952
        %v3954 = vpop.f32.mrf.mxu0
        %v3955 = vadd.f32 0.0, %v3954
        %3956 = vdwg.mxu0
        %3957 = vmatprep.subr.mxu0 0.0
        %3958 = vmatpush1.msra.mxu0 0.0
        %3959 = vmatprep.subr.mxu0 0.0
        %3960 = vmatpush1.msra.mxu0 0.0
        %3961 = vmatprep.subr.mxu0 0.0
        %3962 = vmatpush1.msra.mxu0 0.0
        %3963 = vmatprep.subr.mxu0 0.0
        %3964 = vmatpush1.msra.mxu0 0.0
        %3965 = vmatprep.subr.mxu0 0.0
        %3966 = vmatpush1.msra.mxu0 0.0
        %3967 = vmatprep.subr.mxu0 0.0
        %3968 = vmatpush1.msra.mxu0 0.0
        %3969 = vmatprep.subr.mxu0 0.0
        %3970 = vmatpush1.msra.mxu0 0.0
        %3971 = vmatprep.subr.mxu0 0.0
        %3972 = vmatpush1.msra.mxu0 0.0
        %3973 = vmatprep.subr.mxu0 0.0
        %3974 = vmatpush1.msra.mxu0 0.0
        %3975 = vmatprep.subr.mxu0 0.0
        %3976 = vmatpush1.msra.mxu0 0.0
        %3977 = vmatprep.subr.mxu0 0.0
        %3978 = vmatpush1.msra.mxu0 0.0
        %3979 = vmatprep.subr.mxu0 0.0
        %3980 = vmatpush1.msra.mxu0 0.0
        %3981 = vmatprep.subr.mxu0 %v3725
        %3982 = vmatpush1.msra.mxu0 %v3724
        %3983 = vmatprep.subr.mxu0 %v3717
        %3984 = vmatpush1.msra.mxu0 %v3716
        %3985 = vmatprep.subr.mxu0 %v3709
        %3986 = vmatpush1.msra.mxu0 %v3708
        %3987 = vmatprep.subr.mxu0 %v3701
        %3988 = vmatpush1.msra.mxu0 %v3700
        %3989 = vmatprep.subr.mxu0 0.0
        %3990 = vmatpush2.msra.mxu0 0.0
        %3991 = vmatprep.subr.mxu0 0.0
        %3992 = vmatpush2.msra.mxu0 0.0
        %3993 = vmatprep.subr.mxu0 0.0
        %3994 = vmatpush2.msra.mxu0 0.0
        %3995 = vmatprep.subr.mxu0 0.0
        %3996 = vmatpush2.msra.mxu0 0.0
        %3997 = vmatprep.subr.mxu0 0.0
        %3998 = vmatpush2.msra.mxu0 0.0
        %3999 = vmatprep.subr.mxu0 0.0
        %4000 = vmatpush2.msra.mxu0 0.0
        %4001 = vmatprep.subr.mxu0 0.0
        %4002 = vmatpush2.msra.mxu0 0.0
        %4003 = vmatprep.subr.mxu0 0.0
        %4004 = vmatpush2.msra.mxu0 0.0
        %4005 = vmatprep.subr.mxu0 0.0
        %4006 = vmatpush2.msra.mxu0 0.0
        %4007 = vmatprep.subr.mxu0 0.0
        %4008 = vmatpush2.msra.mxu0 0.0
        %4009 = vmatprep.subr.mxu0 0.0
        %4010 = vmatpush2.msra.mxu0 0.0
        %4011 = vmatprep.subr.mxu0 0.0
        %4012 = vmatpush2.msra.mxu0 0.0
        %4013 = vmatprep.subr.mxu0 0.0
        %4014 = vmatpush2.msra.mxu0 0.0
        %4015 = vmatprep.subr.mxu0 0.0
        %4016 = vmatpush2.msra.mxu0 0.0
        %4017 = vmatprep.subr.mxu0 0.0
        %4018 = vmatpush2.msra.mxu0 0.0
        %4019 = vmatprep.subr.mxu0 0.0
        %4020 = vmatpush2.msra.mxu0 0.0
        %4021 = vmatprep.mubr.f32.mxu0 0.0
        %4022 = vmatmul.mubr.f32.gmra.mxu0 %v881
        %v4023 = vpop.f32.mrf.mxu0
        %v4024 = vadd.f32 0.0, %v4023
        %v4025 = vpop.f32.mrf.mxu0
        %v4026 = vadd.f32 0.0, %v4025
        %4027 = vmatprep.mubr.f32.mxu0 0.0
        %4028 = vmatmul.mubr.f32.gmra.mxu0 %v884
        %v4029 = vpop.f32.mrf.mxu0
        %v4030 = vadd.f32 0.0, %v4029
        %v4031 = vpop.f32.mrf.mxu0
        %v4032 = vadd.f32 0.0, %v4031
        %4033 = vdwg.mxu0
        %v4034 = vmax.f32 %v3677, %v3793
        %v4035 = vmax.f32 %v3678, %v3795
        %v4036 = vmax.f32 %v3679, %v3870
        %v4037 = vmax.f32 %v3680, %v3872
        %v4038 = vmax.f32 %v3681, %v3947
        %v4039 = vmax.f32 %v3682, %v3949
        %v4040 = vmax.f32 %v3683, %v4024
        %v4041 = vmax.f32 %v3684, %v4026
        %v4042 = vmax.f32 %v3685, %v3799
        %v4043 = vmax.f32 %v3686, %v3801
        %v4044 = vmax.f32 %v3687, %v3876
        %v4045 = vmax.f32 %v3688, %v3878
        %v4046 = vmax.f32 %v3689, %v3953
        %v4047 = vmax.f32 %v3690, %v3955
        %v4048 = vmax.f32 %v3691, %v4030
        %v4049 = vmax.f32 %v3692, %v4032
        %v4050 = vld [vmem:[%s2] sm:$0xff]
        %v4051 = vld [vmem:[%s2 + $0x8] sm:$0xff]
        %4053 = vset.pattern.permute.xlu0 0
        %4054 = vperm.xlu0 %4053, %v4050
        %v4055 = vpop.permute.xlu0 %4054
        %4058 = vset.pattern.permute.xlu0 0
        %4059 = vperm.xlu0 %4058, %v4051
        %v4060 = vpop.permute.xlu0 %4059
        %v4062 = vadd.f32 %v4034, %v4055
        %v4063 = vadd.f32 %v4035, %v4055
        %v4064 = vadd.f32 %v4036, %v4055
        %v4065 = vadd.f32 %v4037, %v4055
        %v4066 = vadd.f32 %v4038, %v4055
        %v4067 = vadd.f32 %v4039, %v4055
        %v4068 = vadd.f32 %v4040, %v4055
        %v4069 = vadd.f32 %v4041, %v4055
        %v4070 = vadd.f32 %v4042, %v4060
        %v4071 = vadd.f32 %v4043, %v4060
        %v4072 = vadd.f32 %v4044, %v4060
        %v4073 = vadd.f32 %v4045, %v4060
        %v4074 = vadd.f32 %v4046, %v4060
        %v4075 = vadd.f32 %v4047, %v4060
        %v4076 = vadd.f32 %v4048, %v4060
        %v4077 = vadd.f32 %v4049, %v4060
        %v4078 = vmax.f32 %v4062, 0.0
        %v4079 = vmax.f32 %v4063, 0.0
        %v4080 = vmax.f32 %v4064, 0.0
        %v4081 = vmax.f32 %v4065, 0.0
        %v4082 = vmax.f32 %v4066, 0.0
        %v4083 = vmax.f32 %v4067, 0.0
        %v4084 = vmax.f32 %v4068, 0.0
        %v4085 = vmax.f32 %v4069, 0.0
        %v4086 = vmax.f32 %v4070, 0.0
        %v4087 = vmax.f32 %v4071, 0.0
        %v4088 = vmax.f32 %v4072, 0.0
        %v4089 = vmax.f32 %v4073, 0.0
        %v4090 = vmax.f32 %v4074, 0.0
        %v4091 = vmax.f32 %v4075, 0.0
        %v4092 = vmax.f32 %v4076, 0.0
        %v4093 = vmax.f32 %v4077, 0.0
        %v4094 = vld [vmem:[%s3] sm:$0xff]
        %v4095 = vld [vmem:[%s3 + $0x8] sm:$0xff]
        %v4096 = vld [vmem:[%s3 + $0x10] sm:$0xff]
        %v4097 = vld [vmem:[%s3 + $0x18] sm:$0xff]
        %v4098 = vld [vmem:[%s3 + $0x20] sm:$0xff]
        %v4099 = vld [vmem:[%s3 + $0x28] sm:$0xff]
        %v4100 = vld [vmem:[%s3 + $0x30] sm:$0xff]
        %v4101 = vld [vmem:[%s3 + $0x38] sm:$0xff]
        %v4102 = vld [vmem:[%s3 + $0x40] sm:$0xff]
        %v4103 = vld [vmem:[%s3 + $0x48] sm:$0xff]
        %v4104 = vld [vmem:[%s3 + $0x50] sm:$0xff]
        %v4105 = vld [vmem:[%s3 + $0x58] sm:$0xff]
        %v4106 = vld [vmem:[%s3 + $0x60] sm:$0xff]
        %v4107 = vld [vmem:[%s3 + $0x68] sm:$0xff]
        %v4108 = vld [vmem:[%s3 + $0x70] sm:$0xff]
        %v4109 = vld [vmem:[%s3 + $0x78] sm:$0xff]
        %v4110 = vmul.f32 %v4078, %v4094
        %v4111 = vmul.f32 %v4079, %v4095
        %v4112 = vmul.f32 %v4080, %v4096
        %v4113 = vmul.f32 %v4081, %v4097
        %v4114 = vmul.f32 %v4082, %v4098
        %v4115 = vmul.f32 %v4083, %v4099
        %v4116 = vmul.f32 %v4084, %v4100
        %v4117 = vmul.f32 %v4085, %v4101
        %v4118 = vmul.f32 %v4086, %v4102
        %v4119 = vmul.f32 %v4087, %v4103
        %v4120 = vmul.f32 %v4088, %v4104
        %v4121 = vmul.f32 %v4089, %v4105
        %v4122 = vmul.f32 %v4090, %v4106
        %v4123 = vmul.f32 %v4091, %v4107
        %v4124 = vmul.f32 %v4092, %v4108
        %v4125 = vmul.f32 %v4093, %v4109
        %v4126 = vld [vmem:[%s5] sm:$0xff]
        %v4127 = vld [vmem:[%s5 + $0x8] sm:$0xff]
        %v4128 = vld [vmem:[%s5 + $0x10] sm:$0xff]
        %v4129 = vld [vmem:[%s5 + $0x18] sm:$0xff]
        %v4130 = vld [vmem:[%s5 + $0x20] sm:$0xff]
        %v4131 = vld [vmem:[%s5 + $0x28] sm:$0xff]
        %v4132 = vld [vmem:[%s5 + $0x30] sm:$0xff]
        %v4133 = vld [vmem:[%s5 + $0x38] sm:$0xff]
        %v4134 = vld [vmem:[%s5 + $0x40] sm:$0xff]
        %v4135 = vld [vmem:[%s5 + $0x48] sm:$0xff]
        %v4136 = vld [vmem:[%s5 + $0x50] sm:$0xff]
        %v4137 = vld [vmem:[%s5 + $0x58] sm:$0xff]
        %v4138 = vld [vmem:[%s5 + $0x60] sm:$0xff]
        %v4139 = vld [vmem:[%s5 + $0x68] sm:$0xff]
        %v4140 = vld [vmem:[%s5 + $0x70] sm:$0xff]
        %v4141 = vld [vmem:[%s5 + $0x78] sm:$0xff]
        %v4142 = vld [vmem:[%s5 + $0x80] sm:$0xff]
        %v4143 = vld [vmem:[%s5 + $0x88] sm:$0xff]
        %v4144 = vld [vmem:[%s5 + $0x90] sm:$0xff]
        %v4145 = vld [vmem:[%s5 + $0x98] sm:$0xff]
        %v4146 = vld [vmem:[%s5 + $0xa0] sm:$0xff]
        %v4147 = vld [vmem:[%s5 + $0xa8] sm:$0xff]
        %v4148 = vld [vmem:[%s5 + $0xb0] sm:$0xff]
        %v4149 = vld [vmem:[%s5 + $0xb8] sm:$0xff]
        %v4150 = vld [vmem:[%s5 + $0xc0] sm:$0xff]
        %v4151 = vld [vmem:[%s5 + $0xc8] sm:$0xff]
        %v4152 = vld [vmem:[%s5 + $0xd0] sm:$0xff]
        %v4153 = vld [vmem:[%s5 + $0xd8] sm:$0xff]
        %v4154 = vld [vmem:[%s5 + $0xe0] sm:$0xff]
        %v4155 = vld [vmem:[%s5 + $0xe8] sm:$0xff]
        %v4156 = vld [vmem:[%s5 + $0xf0] sm:$0xff]
        %v4157 = vld [vmem:[%s5 + $0xf8] sm:$0xff]
        %v4158 = vld [vmem:[%s5 + $0x100] sm:$0xff]
        %v4159 = vld [vmem:[%s5 + $0x108] sm:$0xff]
        %v4160 = vld [vmem:[%s5 + $0x110] sm:$0xff]
        %v4161 = vld [vmem:[%s5 + $0x118] sm:$0xff]
        %v4162 = vld [vmem:[%s5 + $0x120] sm:$0xff]
        %v4163 = vld [vmem:[%s5 + $0x128] sm:$0xff]
        %v4164 = vld [vmem:[%s5 + $0x130] sm:$0xff]
        %v4165 = vld [vmem:[%s5 + $0x138] sm:$0xff]
        %v4166 = vld [vmem:[%s5 + $0x140] sm:$0xff]
        %v4167 = vld [vmem:[%s5 + $0x148] sm:$0xff]
        %v4168 = vld [vmem:[%s5 + $0x150] sm:$0xff]
        %v4169 = vld [vmem:[%s5 + $0x158] sm:$0xff]
        %v4170 = vld [vmem:[%s5 + $0x160] sm:$0xff]
        %v4171 = vld [vmem:[%s5 + $0x168] sm:$0xff]
        %v4172 = vld [vmem:[%s5 + $0x170] sm:$0xff]
        %v4173 = vld [vmem:[%s5 + $0x178] sm:$0xff]
        %v4174 = vld [vmem:[%s5 + $0x180] sm:$0xff]
        %v4175 = vld [vmem:[%s5 + $0x188] sm:$0xff]
        %v4176 = vld [vmem:[%s5 + $0x190] sm:$0xff]
        %v4177 = vld [vmem:[%s5 + $0x198] sm:$0xff]
        %v4178 = vld [vmem:[%s5 + $0x1a0] sm:$0xff]
        %v4179 = vld [vmem:[%s5 + $0x1a8] sm:$0xff]
        %v4180 = vld [vmem:[%s5 + $0x1b0] sm:$0xff]
        %v4181 = vld [vmem:[%s5 + $0x1b8] sm:$0xff]
        %v4182 = vld [vmem:[%s5 + $0x1c0] sm:$0xff]
        %v4183 = vld [vmem:[%s5 + $0x1c8] sm:$0xff]
        %v4184 = vld [vmem:[%s5 + $0x1d0] sm:$0xff]
        %v4185 = vld [vmem:[%s5 + $0x1d8] sm:$0xff]
        %v4186 = vld [vmem:[%s5 + $0x1e0] sm:$0xff]
        %v4187 = vld [vmem:[%s5 + $0x1e8] sm:$0xff]
        %v4188 = vld [vmem:[%s5 + $0x1f0] sm:$0xff]
        %v4189 = vld [vmem:[%s5 + $0x1f8] sm:$0xff]
        %v4190 = vld [vmem:[%s5 + $0x200] sm:$0xff]
        %v4191 = vld [vmem:[%s5 + $0x208] sm:$0xff]
        %v4192 = vld [vmem:[%s5 + $0x210] sm:$0xff]
        %v4193 = vld [vmem:[%s5 + $0x218] sm:$0xff]
        %v4194 = vld [vmem:[%s5 + $0x220] sm:$0xff]
        %v4195 = vld [vmem:[%s5 + $0x228] sm:$0xff]
        %v4196 = vld [vmem:[%s5 + $0x230] sm:$0xff]
        %v4197 = vld [vmem:[%s5 + $0x238] sm:$0xff]
        %v4198 = vld [vmem:[%s5 + $0x240] sm:$0xff]
        %v4199 = vld [vmem:[%s5 + $0x248] sm:$0xff]
        %v4200 = vld [vmem:[%s5 + $0x250] sm:$0xff]
        %v4201 = vld [vmem:[%s5 + $0x258] sm:$0xff]
        %v4202 = vld [vmem:[%s5 + $0x260] sm:$0xff]
        %v4203 = vld [vmem:[%s5 + $0x268] sm:$0xff]
        %v4204 = vld [vmem:[%s5 + $0x270] sm:$0xff]
        %v4205 = vld [vmem:[%s5 + $0x278] sm:$0xff]
        %v4206 = vld [vmem:[%s5 + $0x280] sm:$0xff]
        %v4207 = vld [vmem:[%s5 + $0x288] sm:$0xff]
        %v4208 = vld [vmem:[%s5 + $0x290] sm:$0xff]
        %v4209 = vld [vmem:[%s5 + $0x298] sm:$0xff]
        %v4210 = vld [vmem:[%s5 + $0x2a0] sm:$0xff]
        %v4211 = vld [vmem:[%s5 + $0x2a8] sm:$0xff]
        %v4212 = vld [vmem:[%s5 + $0x2b0] sm:$0xff]
        %v4213 = vld [vmem:[%s5 + $0x2b8] sm:$0xff]
        %v4214 = vld [vmem:[%s5 + $0x2c0] sm:$0xff]
        %v4215 = vld [vmem:[%s5 + $0x2c8] sm:$0xff]
        %v4216 = vld [vmem:[%s5 + $0x2d0] sm:$0xff]
        %v4217 = vld [vmem:[%s5 + $0x2d8] sm:$0xff]
        %v4218 = vld [vmem:[%s5 + $0x2e0] sm:$0xff]
        %v4219 = vld [vmem:[%s5 + $0x2e8] sm:$0xff]
        %v4220 = vld [vmem:[%s5 + $0x2f0] sm:$0xff]
        %v4221 = vld [vmem:[%s5 + $0x2f8] sm:$0xff]
        %v4222 = vld [vmem:[%s5 + $0x300] sm:$0xff]
        %v4223 = vld [vmem:[%s5 + $0x308] sm:$0xff]
        %v4224 = vld [vmem:[%s5 + $0x310] sm:$0xff]
        %v4225 = vld [vmem:[%s5 + $0x318] sm:$0xff]
        %v4226 = vld [vmem:[%s5 + $0x320] sm:$0xff]
        %v4227 = vld [vmem:[%s5 + $0x328] sm:$0xff]
        %v4228 = vld [vmem:[%s5 + $0x330] sm:$0xff]
        %v4229 = vld [vmem:[%s5 + $0x338] sm:$0xff]
        %v4230 = vld [vmem:[%s5 + $0x340] sm:$0xff]
        %v4231 = vld [vmem:[%s5 + $0x348] sm:$0xff]
        %v4232 = vld [vmem:[%s5 + $0x350] sm:$0xff]
        %v4233 = vld [vmem:[%s5 + $0x358] sm:$0xff]
        %v4234 = vld [vmem:[%s5 + $0x360] sm:$0xff]
        %v4235 = vld [vmem:[%s5 + $0x368] sm:$0xff]
        %v4236 = vld [vmem:[%s5 + $0x370] sm:$0xff]
        %v4237 = vld [vmem:[%s5 + $0x378] sm:$0xff]
        %v4238 = vld [vmem:[%s5 + $0x380] sm:$0xff]
        %v4239 = vld [vmem:[%s5 + $0x388] sm:$0xff]
        %v4240 = vld [vmem:[%s5 + $0x390] sm:$0xff]
        %v4241 = vld [vmem:[%s5 + $0x398] sm:$0xff]
        %v4242 = vld [vmem:[%s5 + $0x3a0] sm:$0xff]
        %v4243 = vld [vmem:[%s5 + $0x3a8] sm:$0xff]
        %v4244 = vld [vmem:[%s5 + $0x3b0] sm:$0xff]
        %v4245 = vld [vmem:[%s5 + $0x3b8] sm:$0xff]
        %v4246 = vld [vmem:[%s5 + $0x3c0] sm:$0xff]
        %v4247 = vld [vmem:[%s5 + $0x3c8] sm:$0xff]
        %v4248 = vld [vmem:[%s5 + $0x3d0] sm:$0xff]
        %v4249 = vld [vmem:[%s5 + $0x3d8] sm:$0xff]
        %v4250 = vld [vmem:[%s5 + $0x3e0] sm:$0xff]
        %v4251 = vld [vmem:[%s5 + $0x3e8] sm:$0xff]
        %v4252 = vld [vmem:[%s5 + $0x3f0] sm:$0xff]
        %v4253 = vld [vmem:[%s5 + $0x3f8] sm:$0xff]
        %4254 = vmatprep.subr.mxu0 0.0
        %4255 = vmatpush1.msra.mxu0 %v4141
        %4256 = vmatprep.subr.mxu0 0.0
        %4257 = vmatpush1.msra.mxu0 %v4140
        %4258 = vmatprep.subr.mxu0 0.0
        %4259 = vmatpush1.msra.mxu0 %v4139
        %4260 = vmatprep.subr.mxu0 0.0
        %4261 = vmatpush1.msra.mxu0 %v4138
        %4262 = vmatprep.subr.mxu0 0.0
        %4263 = vmatpush1.msra.mxu0 %v4137
        %4264 = vmatprep.subr.mxu0 0.0
        %4265 = vmatpush1.msra.mxu0 %v4136
        %4266 = vmatprep.subr.mxu0 0.0
        %4267 = vmatpush1.msra.mxu0 %v4135
        %4268 = vmatprep.subr.mxu0 0.0
        %4269 = vmatpush1.msra.mxu0 %v4134
        %4270 = vmatprep.subr.mxu0 0.0
        %4271 = vmatpush1.msra.mxu0 %v4133
        %4272 = vmatprep.subr.mxu0 0.0
        %4273 = vmatpush1.msra.mxu0 %v4132
        %4274 = vmatprep.subr.mxu0 0.0
        %4275 = vmatpush1.msra.mxu0 %v4131
        %4276 = vmatprep.subr.mxu0 0.0
        %4277 = vmatpush1.msra.mxu0 %v4130
        %4278 = vmatprep.subr.mxu0 0.0
        %4279 = vmatpush1.msra.mxu0 %v4129
        %4280 = vmatprep.subr.mxu0 0.0
        %4281 = vmatpush1.msra.mxu0 %v4128
        %4282 = vmatprep.subr.mxu0 0.0
        %4283 = vmatpush1.msra.mxu0 %v4127
        %4284 = vmatprep.subr.mxu0 0.0
        %4285 = vmatpush1.msra.mxu0 %v4126
        %4286 = vmatprep.subr.mxu0 0.0
        %4287 = vmatpush2.msra.mxu0 %v4157
        %4288 = vmatprep.subr.mxu0 0.0
        %4289 = vmatpush2.msra.mxu0 %v4156
        %4290 = vmatprep.subr.mxu0 0.0
        %4291 = vmatpush2.msra.mxu0 %v4155
        %4292 = vmatprep.subr.mxu0 0.0
        %4293 = vmatpush2.msra.mxu0 %v4154
        %4294 = vmatprep.subr.mxu0 0.0
        %4295 = vmatpush2.msra.mxu0 %v4153
        %4296 = vmatprep.subr.mxu0 0.0
        %4297 = vmatpush2.msra.mxu0 %v4152
        %4298 = vmatprep.subr.mxu0 0.0
        %4299 = vmatpush2.msra.mxu0 %v4151
        %4300 = vmatprep.subr.mxu0 0.0
        %4301 = vmatpush2.msra.mxu0 %v4150
        %4302 = vmatprep.subr.mxu0 0.0
        %4303 = vmatpush2.msra.mxu0 %v4149
        %4304 = vmatprep.subr.mxu0 0.0
        %4305 = vmatpush2.msra.mxu0 %v4148
        %4306 = vmatprep.subr.mxu0 0.0
        %4307 = vmatpush2.msra.mxu0 %v4147
        %4308 = vmatprep.subr.mxu0 0.0
        %4309 = vmatpush2.msra.mxu0 %v4146
        %4310 = vmatprep.subr.mxu0 0.0
        %4311 = vmatpush2.msra.mxu0 %v4145
        %4312 = vmatprep.subr.mxu0 0.0
        %4313 = vmatpush2.msra.mxu0 %v4144
        %4314 = vmatprep.subr.mxu0 0.0
        %4315 = vmatpush2.msra.mxu0 %v4143
        %4316 = vmatprep.subr.mxu0 0.0
        %4317 = vmatpush2.msra.mxu0 %v4142
        %4318 = vmatprep.mubr.f32.mxu0 %v4111
        %4319 = vmatmul.mubr.f32.gmra.mxu0 %v4110
        %v4320 = vpop.f32.mrf.mxu0
        %v4321 = vadd.f32 0.0, %v4320
        %v4322 = vpop.f32.mrf.mxu0
        %4323 = vmatprep.mubr.f32.mxu0 %v4119
        %4324 = vmatmul.mubr.f32.gmra.mxu0 %v4118
        %v4325 = vpop.f32.mrf.mxu0
        %v4326 = vadd.f32 0.0, %v4325
        %v4327 = vpop.f32.mrf.mxu0
        %4328 = vdwg.mxu0
        %4329 = vmatprep.subr.mxu0 0.0
        %4330 = vmatpush1.msra.mxu0 %v4173
        %4331 = vmatprep.subr.mxu0 0.0
        %4332 = vmatpush1.msra.mxu0 %v4172
        %4333 = vmatprep.subr.mxu0 0.0
        %4334 = vmatpush1.msra.mxu0 %v4171
        %4335 = vmatprep.subr.mxu0 0.0
        %4336 = vmatpush1.msra.mxu0 %v4170
        %4337 = vmatprep.subr.mxu0 0.0
        %4338 = vmatpush1.msra.mxu0 %v4169
        %4339 = vmatprep.subr.mxu0 0.0
        %4340 = vmatpush1.msra.mxu0 %v4168
        %4341 = vmatprep.subr.mxu0 0.0
        %4342 = vmatpush1.msra.mxu0 %v4167
        %4343 = vmatprep.subr.mxu0 0.0
        %4344 = vmatpush1.msra.mxu0 %v4166
        %4345 = vmatprep.subr.mxu0 0.0
        %4346 = vmatpush1.msra.mxu0 %v4165
        %4347 = vmatprep.subr.mxu0 0.0
        %4348 = vmatpush1.msra.mxu0 %v4164
        %4349 = vmatprep.subr.mxu0 0.0
        %4350 = vmatpush1.msra.mxu0 %v4163
        %4351 = vmatprep.subr.mxu0 0.0
        %4352 = vmatpush1.msra.mxu0 %v4162
        %4353 = vmatprep.subr.mxu0 0.0
        %4354 = vmatpush1.msra.mxu0 %v4161
        %4355 = vmatprep.subr.mxu0 0.0
        %4356 = vmatpush1.msra.mxu0 %v4160
        %4357 = vmatprep.subr.mxu0 0.0
        %4358 = vmatpush1.msra.mxu0 %v4159
        %4359 = vmatprep.subr.mxu0 0.0
        %4360 = vmatpush1.msra.mxu0 %v4158
        %4361 = vmatprep.subr.mxu0 0.0
        %4362 = vmatpush2.msra.mxu0 %v4189
        %4363 = vmatprep.subr.mxu0 0.0
        %4364 = vmatpush2.msra.mxu0 %v4188
        %4365 = vmatprep.subr.mxu0 0.0
        %4366 = vmatpush2.msra.mxu0 %v4187
        %4367 = vmatprep.subr.mxu0 0.0
        %4368 = vmatpush2.msra.mxu0 %v4186
        %4369 = vmatprep.subr.mxu0 0.0
        %4370 = vmatpush2.msra.mxu0 %v4185
        %4371 = vmatprep.subr.mxu0 0.0
        %4372 = vmatpush2.msra.mxu0 %v4184
        %4373 = vmatprep.subr.mxu0 0.0
        %4374 = vmatpush2.msra.mxu0 %v4183
        %4375 = vmatprep.subr.mxu0 0.0
        %4376 = vmatpush2.msra.mxu0 %v4182
        %4377 = vmatprep.subr.mxu0 0.0
        %4378 = vmatpush2.msra.mxu0 %v4181
        %4379 = vmatprep.subr.mxu0 0.0
        %4380 = vmatpush2.msra.mxu0 %v4180
        %4381 = vmatprep.subr.mxu0 0.0
        %4382 = vmatpush2.msra.mxu0 %v4179
        %4383 = vmatprep.subr.mxu0 0.0
        %4384 = vmatpush2.msra.mxu0 %v4178
        %4385 = vmatprep.subr.mxu0 0.0
        %4386 = vmatpush2.msra.mxu0 %v4177
        %4387 = vmatprep.subr.mxu0 0.0
        %4388 = vmatpush2.msra.mxu0 %v4176
        %4389 = vmatprep.subr.mxu0 0.0
        %4390 = vmatpush2.msra.mxu0 %v4175
        %4391 = vmatprep.subr.mxu0 0.0
        %4392 = vmatpush2.msra.mxu0 %v4174
        %4393 = vmatprep.mubr.f32.mxu0 %v4113
        %4394 = vmatmul.mubr.f32.gmra.mxu0 %v4112
        %v4395 = vpop.f32.mrf.mxu0
        %v4396 = vadd.f32 %v4321, %v4395
        %v4397 = vpop.f32.mrf.mxu0
        %4398 = vmatprep.mubr.f32.mxu0 %v4121
        %4399 = vmatmul.mubr.f32.gmra.mxu0 %v4120
        %v4400 = vpop.f32.mrf.mxu0
        %v4401 = vadd.f32 %v4326, %v4400
        %v4402 = vpop.f32.mrf.mxu0
        %4403 = vdwg.mxu0
        %4404 = vmatprep.subr.mxu0 0.0
        %4405 = vmatpush1.msra.mxu0 %v4205
        %4406 = vmatprep.subr.mxu0 0.0
        %4407 = vmatpush1.msra.mxu0 %v4204
        %4408 = vmatprep.subr.mxu0 0.0
        %4409 = vmatpush1.msra.mxu0 %v4203
        %4410 = vmatprep.subr.mxu0 0.0
        %4411 = vmatpush1.msra.mxu0 %v4202
        %4412 = vmatprep.subr.mxu0 0.0
        %4413 = vmatpush1.msra.mxu0 %v4201
        %4414 = vmatprep.subr.mxu0 0.0
        %4415 = vmatpush1.msra.mxu0 %v4200
        %4416 = vmatprep.subr.mxu0 0.0
        %4417 = vmatpush1.msra.mxu0 %v4199
        %4418 = vmatprep.subr.mxu0 0.0
        %4419 = vmatpush1.msra.mxu0 %v4198
        %4420 = vmatprep.subr.mxu0 0.0
        %4421 = vmatpush1.msra.mxu0 %v4197
        %4422 = vmatprep.subr.mxu0 0.0
        %4423 = vmatpush1.msra.mxu0 %v4196
        %4424 = vmatprep.subr.mxu0 0.0
        %4425 = vmatpush1.msra.mxu0 %v4195
        %4426 = vmatprep.subr.mxu0 0.0
        %4427 = vmatpush1.msra.mxu0 %v4194
        %4428 = vmatprep.subr.mxu0 0.0
        %4429 = vmatpush1.msra.mxu0 %v4193
        %4430 = vmatprep.subr.mxu0 0.0
        %4431 = vmatpush1.msra.mxu0 %v4192
        %4432 = vmatprep.subr.mxu0 0.0
        %4433 = vmatpush1.msra.mxu0 %v4191
        %4434 = vmatprep.subr.mxu0 0.0
        %4435 = vmatpush1.msra.mxu0 %v4190
        %4436 = vmatprep.subr.mxu0 0.0
        %4437 = vmatpush2.msra.mxu0 %v4221
        %4438 = vmatprep.subr.mxu0 0.0
        %4439 = vmatpush2.msra.mxu0 %v4220
        %4440 = vmatprep.subr.mxu0 0.0
        %4441 = vmatpush2.msra.mxu0 %v4219
        %4442 = vmatprep.subr.mxu0 0.0
        %4443 = vmatpush2.msra.mxu0 %v4218
        %4444 = vmatprep.subr.mxu0 0.0
        %4445 = vmatpush2.msra.mxu0 %v4217
        %4446 = vmatprep.subr.mxu0 0.0
        %4447 = vmatpush2.msra.mxu0 %v4216
        %4448 = vmatprep.subr.mxu0 0.0
        %4449 = vmatpush2.msra.mxu0 %v4215
        %4450 = vmatprep.subr.mxu0 0.0
        %4451 = vmatpush2.msra.mxu0 %v4214
        %4452 = vmatprep.subr.mxu0 0.0
        %4453 = vmatpush2.msra.mxu0 %v4213
        %4454 = vmatprep.subr.mxu0 0.0
        %4455 = vmatpush2.msra.mxu0 %v4212
        %4456 = vmatprep.subr.mxu0 0.0
        %4457 = vmatpush2.msra.mxu0 %v4211
        %4458 = vmatprep.subr.mxu0 0.0
        %4459 = vmatpush2.msra.mxu0 %v4210
        %4460 = vmatprep.subr.mxu0 0.0
        %4461 = vmatpush2.msra.mxu0 %v4209
        %4462 = vmatprep.subr.mxu0 0.0
        %4463 = vmatpush2.msra.mxu0 %v4208
        %4464 = vmatprep.subr.mxu0 0.0
        %4465 = vmatpush2.msra.mxu0 %v4207
        %4466 = vmatprep.subr.mxu0 0.0
        %4467 = vmatpush2.msra.mxu0 %v4206
        %4468 = vmatprep.mubr.f32.mxu0 %v4115
        %4469 = vmatmul.mubr.f32.gmra.mxu0 %v4114
        %v4470 = vpop.f32.mrf.mxu0
        %v4471 = vadd.f32 %v4396, %v4470
        %v4472 = vpop.f32.mrf.mxu0
        %4473 = vmatprep.mubr.f32.mxu0 %v4123
        %4474 = vmatmul.mubr.f32.gmra.mxu0 %v4122
        %v4475 = vpop.f32.mrf.mxu0
        %v4476 = vadd.f32 %v4401, %v4475
        %v4477 = vpop.f32.mrf.mxu0
        %4478 = vdwg.mxu0
        %4479 = vmatprep.subr.mxu0 0.0
        %4480 = vmatpush1.msra.mxu0 %v4237
        %4481 = vmatprep.subr.mxu0 0.0
        %4482 = vmatpush1.msra.mxu0 %v4236
        %4483 = vmatprep.subr.mxu0 0.0
        %4484 = vmatpush1.msra.mxu0 %v4235
        %4485 = vmatprep.subr.mxu0 0.0
        %4486 = vmatpush1.msra.mxu0 %v4234
        %4487 = vmatprep.subr.mxu0 0.0
        %4488 = vmatpush1.msra.mxu0 %v4233
        %4489 = vmatprep.subr.mxu0 0.0
        %4490 = vmatpush1.msra.mxu0 %v4232
        %4491 = vmatprep.subr.mxu0 0.0
        %4492 = vmatpush1.msra.mxu0 %v4231
        %4493 = vmatprep.subr.mxu0 0.0
        %4494 = vmatpush1.msra.mxu0 %v4230
        %4495 = vmatprep.subr.mxu0 0.0
        %4496 = vmatpush1.msra.mxu0 %v4229
        %4497 = vmatprep.subr.mxu0 0.0
        %4498 = vmatpush1.msra.mxu0 %v4228
        %4499 = vmatprep.subr.mxu0 0.0
        %4500 = vmatpush1.msra.mxu0 %v4227
        %4501 = vmatprep.subr.mxu0 0.0
        %4502 = vmatpush1.msra.mxu0 %v4226
        %4503 = vmatprep.subr.mxu0 0.0
        %4504 = vmatpush1.msra.mxu0 %v4225
        %4505 = vmatprep.subr.mxu0 0.0
        %4506 = vmatpush1.msra.mxu0 %v4224
        %4507 = vmatprep.subr.mxu0 0.0
        %4508 = vmatpush1.msra.mxu0 %v4223
        %4509 = vmatprep.subr.mxu0 0.0
        %4510 = vmatpush1.msra.mxu0 %v4222
        %4511 = vmatprep.subr.mxu0 0.0
        %4512 = vmatpush2.msra.mxu0 %v4253
        %4513 = vmatprep.subr.mxu0 0.0
        %4514 = vmatpush2.msra.mxu0 %v4252
        %4515 = vmatprep.subr.mxu0 0.0
        %4516 = vmatpush2.msra.mxu0 %v4251
        %4517 = vmatprep.subr.mxu0 0.0
        %4518 = vmatpush2.msra.mxu0 %v4250
        %4519 = vmatprep.subr.mxu0 0.0
        %4520 = vmatpush2.msra.mxu0 %v4249
        %4521 = vmatprep.subr.mxu0 0.0
        %4522 = vmatpush2.msra.mxu0 %v4248
        %4523 = vmatprep.subr.mxu0 0.0
        %4524 = vmatpush2.msra.mxu0 %v4247
        %4525 = vmatprep.subr.mxu0 0.0
        %4526 = vmatpush2.msra.mxu0 %v4246
        %4527 = vmatprep.subr.mxu0 0.0
        %4528 = vmatpush2.msra.mxu0 %v4245
        %4529 = vmatprep.subr.mxu0 0.0
        %4530 = vmatpush2.msra.mxu0 %v4244
        %4531 = vmatprep.subr.mxu0 0.0
        %4532 = vmatpush2.msra.mxu0 %v4243
        %4533 = vmatprep.subr.mxu0 0.0
        %4534 = vmatpush2.msra.mxu0 %v4242
        %4535 = vmatprep.subr.mxu0 0.0
        %4536 = vmatpush2.msra.mxu0 %v4241
        %4537 = vmatprep.subr.mxu0 0.0
        %4538 = vmatpush2.msra.mxu0 %v4240
        %4539 = vmatprep.subr.mxu0 0.0
        %4540 = vmatpush2.msra.mxu0 %v4239
        %4541 = vmatprep.subr.mxu0 0.0
        %4542 = vmatpush2.msra.mxu0 %v4238
        %4543 = vmatprep.mubr.f32.mxu0 %v4117
        %4544 = vmatmul.mubr.f32.gmra.mxu0 %v4116
        %v4545 = vpop.f32.mrf.mxu0
        %v4546 = vadd.f32 %v4471, %v4545
        %v4547 = vpop.f32.mrf.mxu0
        %4548 = vmatprep.mubr.f32.mxu0 %v4125
        %4549 = vmatmul.mubr.f32.gmra.mxu0 %v4124
        %v4550 = vpop.f32.mrf.mxu0
        %v4551 = vadd.f32 %v4476, %v4550
        %v4552 = vpop.f32.mrf.mxu0
        %4553 = vdwg.mxu0
        %vm4554 = vcmask 31744
        %v4555 = vsel %vm4554, %v4546, 0.0
        %v4556 = vsel %vm4554, %v4551, 0.0
        %v4557 = vadd.f32 %v4555, %v4556
        %v4558 = vrot.slane %v4557, 4
        %v4559 = vadd.f32 %v4557, %v4558
        %v4560 = vrot.slane %v4559, 2
        %v4561 = vadd.f32 %v4559, %v4560
        %v4562 = vrot.slane %v4561, 1
        %v4563 = vadd.f32 %v4561, %v4562
        %v4564 = vld [vmem:[#allocation2] sm:$0x1]
        %4566 = vset.pattern.permute.xlu0 0
        %4567 = vperm.xlu0 %4566, %v4564
        %v4568 = vpop.permute.xlu0 %4567
        %v4570 = vlaneseq
        %v4571 = vshrl.u32 %v4570, 7
        %v4572 = vsub.s32 0, %v4571
        %v4573 = vrot.slane %v4568, %v4572
        %v4574 = vadd.f32 %v4563, %v4573
        %v4575 = vxor.u32 %v4574, 2147483648
        %v4576 = vmul.f32 %v4575, 1.442695
        %v4577 = vpow.pop %v4576
        %v4578 = vadd.f32 %v4577, 1.0
        %v4579 = vrcp.pop %v4578
        %v4580 = vmul.f32 1.0, %v4579
        %vm4581 = vcmask 24576
        %4582 = vst.msk [vmem:[%s844] sm:$0x1] %vm4581, %v4580
        %p4583 = scmp.lt.s32.totalorder %s19, 1
        %s4584 = scalar_select %p4583, %s19, 1
        %s4585 = scalar_lea.vmem %s6, %s4584
        // Predicated region
        $region68: #{mynet_forward.1} parent=62 // pred_check
          %p4586 = pneg %p168
        $region69: #{mynet_forward.1} parent=62 // pred_check_branch
          %4588 = sbr.rel (%p4586) target = $region71
        $region70: #{mynet_forward.1} parent=62 // pred_region
          _
        $region71: #{mynet_forward.1} parent=62 // pred_fallthru
          _
      $region63: #{mynet_forward.1} parent=5 // pred_fallthru
        _
      %p4589 = scmp.le.s32.totalorder 2, %s14
      // Predicated region
      $region72: #{mynet_forward.1} parent=5 // pred_check
        %p4590 = pneg %p4589
      $region73: #{mynet_forward.1} parent=5 // pred_check_branch
        %4592 = sbr.rel (%p4590) target = $region75
      $region74: #{mynet_forward.1} parent=5 // pred_region
        %s4593 = ssub.s32 %s14, 2
        // Predicated region
        $region76: #{mynet_forward.1} parent=74 // pred_check
          %p4594 = pneg %p174
        $region77: #{mynet_forward.1} parent=74 // pred_check_branch
          %4596 = sbr.rel (%p4594) target = $region79
        $region78: #{mynet_forward.1} parent=74 // pred_region
          %p4597 = scmp.lt.s32.totalorder %s20, 1
          %s4598 = scalar_select %p4597, %s20, 1
          %s4599 = scalar_lea.vmem %s6, %s4598
        $region79: #{mynet_forward.1} parent=74 // pred_fallthru
          _
      $region75: #{mynet_forward.1} parent=5 // pred_fallthru
        _
    $region6: #{mynet_forward.1} parent=1 // loop_footer
      %s18 = sadd.s32 1, %s14
    $region7: #{mynet_forward.1} parent=1 // loop_footer_branch
      %13 = sbr.rel target = $region3
    $region8: #{mynet_forward.1} parent=1 // loop_exit
      _

</llo_original>
